<compile_context>
chip_gen: v5e
topology: v5e:2x2
jax: 0.10.0
libtpu: 0.0.40
codegen_flags: <defaults>
</compile_context>

<pallas_src>
import functools
import math

import jax
import jax.numpy as jnp
from jax import lax
from jax.experimental import pallas as pl
from jax.experimental.pallas import tpu as pltpu

NEG_INF = -1e30                      # finite "masked" value (avoids -inf NaNs)
_VMEM_LIMIT = 32 * 1024 * 1024       # safe on v5e/v6e (128 MiB) and v7x (64 MiB)


def _round_up(x, m):
    return ((x + m - 1) // m) * m


def _rows_cfg(m):
    """Row-tile size: 128-row blocks for large M, whole array for small M."""
    bm = 128 if m >= 128 else m
    return bm, _round_up(m, bm)


def _pad_rows(x, m_pad):
    m = x.shape[0]
    return x if m_pad == m else jnp.pad(x, ((0, m_pad - m), (0, 0)))


# --------------------------- linear: y = x @ w.T + b -------------------------

def _linear_kernel(x_ref, w_ref, b_ref, o_ref, acc_ref, *, n_k, activation):
    @pl.when(pl.program_id(2) == 0)
    def _():
        acc_ref[...] = jnp.zeros_like(acc_ref)

    x = x_ref[...].astype(jnp.bfloat16)
    w = w_ref[...].astype(jnp.bfloat16)              # [N, K] (PyTorch layout)
    acc_ref[...] += lax.dot_general(x, w, (((1,), (1,)), ((), ())),
                                    preferred_element_type=jnp.float32)

    @pl.when(pl.program_id(2) == n_k - 1)
    def _():
        r = acc_ref[...] + b_ref[...].astype(jnp.float32)
        if activation == "relu":
            r = jnp.maximum(r, 0.0)
        o_ref[...] = r.astype(o_ref.dtype)


def pallas_linear(x, w, b, activation=None):
    """y = x @ w.T + b, w in nn.Linear [out, in] layout (no wrapper transpose)."""
    M, K = x.shape
    N = w.shape[0]
    bm, Mp = _rows_cfg(M)
    bn = 128 if (N > 128 and N % 128 == 0) else N
    bk = 512 if (K > 512 and K % 512 == 0) else K
    gm, gn, gk = Mp // bm, N // bn, K // bk
    xp = _pad_rows(x, Mp)
    out = pl.pallas_call(
        functools.partial(_linear_kernel, n_k=gk, activation=activation),
        out_shape=jax.ShapeDtypeStruct((Mp, N), jnp.float32),
        grid=(gm, gn, gk),
        in_specs=[pl.BlockSpec((bm, bk), lambda i, j, k: (i, k)),
                  pl.BlockSpec((bn, bk), lambda i, j, k: (j, k)),
                  pl.BlockSpec((1, bn), lambda i, j, k: (0, j))],
        out_specs=pl.BlockSpec((bm, bn), lambda i, j, k: (i, j)),
        scratch_shapes=[pltpu.VMEM((bm, bn), jnp.float32)],
        compiler_params=pltpu.CompilerParams(
            dimension_semantics=("parallel", "parallel", "arbitrary"),
            vmem_limit_bytes=_VMEM_LIMIT),
    )(xp, w, b.reshape(1, N))
    return out if Mp == M else out[:M]


# ----------------------- fused FFN: relu(xW1^T+b1)W2^T+b2 --------------------

def _ffn_kernel(x_ref, w1_ref, b1_ref, w2_ref, b2_ref, o_ref, acc_ref, *, n_f):
    j = pl.program_id(1)

    @pl.when(j == 0)
    def _():
        acc_ref[...] = jnp.zeros_like(acc_ref)

    x = x_ref[...].astype(jnp.bfloat16)
    w1 = w1_ref[...].astype(jnp.bfloat16)
    h = lax.dot_general(x, w1, (((1,), (1,)), ((), ())),
                        preferred_element_type=jnp.float32)
    h = jnp.maximum(h + b1_ref[...].astype(jnp.float32), 0.0)
    w2 = w2_ref[...].astype(jnp.bfloat16)
    acc_ref[...] += lax.dot_general(h.astype(jnp.bfloat16), w2,
                                    (((1,), (1,)), ((), ())),
                                    preferred_element_type=jnp.float32)

    @pl.when(j == n_f - 1)
    def _():
        o_ref[...] = (acc_ref[...] + b2_ref[...].astype(jnp.float32)
                      ).astype(o_ref.dtype)


def pallas_ffn(x, w1, b1, w2, b2):
    M, d_in = x.shape
    F = w1.shape[0]
    d_out = w2.shape[0]
    bm, Mp = _rows_cfg(M)
    bf = 512 if (F > 512 and F % 512 == 0) else F
    gf = F // bf
    xp = _pad_rows(x, Mp)
    out = pl.pallas_call(
        functools.partial(_ffn_kernel, n_f=gf),
        out_shape=jax.ShapeDtypeStruct((Mp, d_out), jnp.float32),
        grid=(Mp // bm, gf),
        in_specs=[pl.BlockSpec((bm, d_in), lambda i, j: (i, 0)),
                  pl.BlockSpec((bf, d_in), lambda i, j: (j, 0)),
                  pl.BlockSpec((1, bf), lambda i, j: (0, j)),
                  pl.BlockSpec((d_out, bf), lambda i, j: (0, j)),
                  pl.BlockSpec((1, d_out), lambda i, j: (0, 0))],
        out_specs=pl.BlockSpec((bm, d_out), lambda i, j: (i, 0)),
        scratch_shapes=[pltpu.VMEM((bm, d_out), jnp.float32)],
        compiler_params=pltpu.CompilerParams(
            dimension_semantics=("parallel", "arbitrary"),
            vmem_limit_bytes=_VMEM_LIMIT),
    )(xp, w1, b1.reshape(1, F), w2, b2.reshape(1, d_out))
    return out if Mp == M else out[:M]


# ------------------------ LayerNorm / residual + LayerNorm -------------------

def _ln_math(x, g, b, eps):
    mean = jnp.mean(x, axis=-1, keepdims=True)
    c = x - mean
    var = jnp.mean(c * c, axis=-1, keepdims=True)
    return c * lax.rsqrt(var + eps) * g + b


def _ln_kernel(x_ref, g_ref, b_ref, o_ref, *, eps):
    o_ref[...] = _ln_math(x_ref[...].astype(jnp.float32),
                          g_ref[...], b_ref[...], eps).astype(o_ref.dtype)


def _add_ln_kernel(x_ref, y_ref, g_ref, b_ref, o_ref, *, eps):
    s = x_ref[...].astype(jnp.float32) + y_ref[...].astype(jnp.float32)
    o_ref[...] = _ln_math(s, g_ref[...], b_ref[...], eps).astype(o_ref.dtype)


def _ln_call(kernel, arrays, M, D):
    bm, Mp = _rows_cfg(M)
    arrays = [_pad_rows(a, Mp) for a in arrays]
    out = pl.pallas_call(
        kernel,
        out_shape=jax.ShapeDtypeStruct((Mp, D), jnp.float32),
        grid=(Mp // bm,),
        in_specs=[pl.BlockSpec((bm, D), lambda i: (i, 0))] * len(arrays)
                 + [pl.BlockSpec((1, D), lambda i: (0, 0)),
                    pl.BlockSpec((1, D), lambda i: (0, 0))],
        out_specs=pl.BlockSpec((bm, D), lambda i: (i, 0)),
        compiler_params=pltpu.CompilerParams(
            dimension_semantics=("parallel",),
            vmem_limit_bytes=_VMEM_LIMIT),
    )
    return out, Mp


def pallas_layernorm(x, g, b, eps=1e-5):
    M, D = x.shape
    call, Mp = _ln_call(functools.partial(_ln_kernel, eps=eps), [x], M, D)
    out = call(_pad_rows(x, Mp), g.reshape(1, D), b.reshape(1, D))
    return out if Mp == M else out[:M]


def pallas_add_layernorm(x, y, g, b, eps=1e-5):
    """LayerNorm(x + y): residual add fused into the LN kernel."""
    M, D = x.shape
    call, Mp = _ln_call(functools.partial(_add_ln_kernel, eps=eps), [x, y], M, D)
    out = call(_pad_rows(x, Mp), _pad_rows(y, Mp), g.reshape(1, D), b.reshape(1, D))
    return out if Mp == M else out[:M]


# ------------------------------ attention core -------------------------------

def _mha_kernel(q_ref, kv_ref, am_ref, kpm_ref, o_ref, *, nhead, scale, k_off, v_off):
    d = o_ref.shape[-1]
    dh = d // nhead
    # additive bias: 2-D attn mask (clamped, so -inf never produces NaN) +
    # this batch element's key-padding row, broadcast in-kernel (VPU filler).
    bias = jnp.maximum(am_ref[...].astype(jnp.float32), NEG_INF) + kpm_ref[0]
    for h in range(nhead):                         # heads split inside the kernel
        q0 = h * dh
        qh = q_ref[0, :, q0:q0 + dh].astype(jnp.bfloat16)            # [Tq, dh]
        kh = kv_ref[0, :, k_off + q0:k_off + q0 + dh].astype(jnp.bfloat16)
        vh = kv_ref[0, :, v_off + q0:v_off + q0 + dh].astype(jnp.bfloat16)
        s = lax.dot_general(qh, kh, (((1,), (1,)), ((), ())),
                            preferred_element_type=jnp.float32) * scale + bias
        mx = jnp.max(s, axis=-1, keepdims=True)
        e = jnp.exp(s - mx)
        p = e * pl.reciprocal(jnp.sum(e, axis=-1, keepdims=True), approx=True)
        oh = lax.dot_general(p.astype(jnp.bfloat16), vh, (((1,), (0,)), ((), ())),
                             preferred_element_type=jnp.float32)
        o_ref[0, :, q0:q0 + dh] = oh


def multihead_attention(query, kv_src, p, attn_mask, key_padding_mask, nhead, *,
                        is_self):
    """query: [B, Tq, d]; kv_src: [B, Tk, d] -> [B, Tq, d]  (batch-first)."""
    B, Tq, d = query.shape
    Tk = kv_src.shape[1]
    dh = d // nhead

    if is_self:
        # fused QKV projection: one matmul, x read once, lane-dense N = 3*d.
        qkv = pallas_linear(query.reshape(B * Tq, d),
                            p["in_proj_weight"], p["in_proj_bias"])
        qkv = qkv.reshape(B, Tq, 3 * d)
        q_arr, kv_arr, k_off, v_off = qkv, qkv, d, 2 * d
    else:
        q = pallas_linear(query.reshape(B * Tq, d),
                          p["in_proj_weight"][:d],
                          p["in_proj_bias"][:d]).reshape(B, Tq, d)
        kv = pallas_linear(kv_src.reshape(B * Tk, d),
                           p["in_proj_weight"][d:],
                           p["in_proj_bias"][d:]).reshape(B, Tk, 2 * d)
        q_arr, kv_arr, k_off, v_off = q, kv, 0, d

    if attn_mask is None:
        attn_mask = jnp.zeros((Tq, Tk), jnp.float32)
    if key_padding_mask is None:
        kpm_add = jnp.zeros((B, 1, Tk), jnp.float32)
    else:
        kpm_add = jnp.where(key_padding_mask, NEG_INF, 0.0
                            ).astype(jnp.float32).reshape(B, 1, Tk)

    o = pl.pallas_call(
        functools.partial(_mha_kernel, nhead=nhead, scale=1.0 / math.sqrt(dh),
                          k_off=k_off, v_off=v_off),
        out_shape=jax.ShapeDtypeStruct((B, Tq, d), jnp.float32),
        grid=(B,),
        in_specs=[pl.BlockSpec((1, Tq, q_arr.shape[-1]), lambda b: (b, 0, 0)),
                  pl.BlockSpec((1, Tk, kv_arr.shape[-1]), lambda b: (b, 0, 0)),
                  pl.BlockSpec((Tq, Tk), lambda b: (0, 0)),
                  pl.BlockSpec((1, 1, Tk), lambda b: (b, 0, 0))],
        out_specs=pl.BlockSpec((1, Tq, d), lambda b: (b, 0, 0)),
        compiler_params=pltpu.CompilerParams(
            dimension_semantics=("parallel",),
            vmem_limit_bytes=_VMEM_LIMIT),
    )(q_arr, kv_arr, attn_mask.astype(jnp.float32), kpm_add)

    o = pallas_linear(o.reshape(B * Tq, d), p["out_proj_weight"], p["out_proj_bias"])
    return o.reshape(B, Tq, d)


# --------------------------- transformer layers (eval) -----------------------
# dropout layers are no-ops in eval mode, so they are omitted everywhere.

def encoder_layer(x, p, src_mask, src_kpm, nhead):
    B, S, d = x.shape
    sa = multihead_attention(x, x, p["self_attn"], src_mask, src_kpm, nhead,
                             is_self=True)
    x = pallas_add_layernorm(x.reshape(B * S, d), sa.reshape(B * S, d),
                             p["norm1_w"], p["norm1_b"]).reshape(B, S, d)
    ff = pallas_ffn(x.reshape(B * S, d), p["linear1_w"], p["linear1_b"],
                    p["linear2_w"], p["linear2_b"])
    x = pallas_add_layernorm(x.reshape(B * S, d), ff,
                             p["norm2_w"], p["norm2_b"]).reshape(B, S, d)
    return x


def decoder_layer(x, memory, p, tgt_mask, tgt_kpm, mem_kpm, nhead):
    B, T, d = x.shape
    sa = multihead_attention(x, x, p["self_attn"], tgt_mask, tgt_kpm, nhead,
                             is_self=True)
    x = pallas_add_layernorm(x.reshape(B * T, d), sa.reshape(B * T, d),
                             p["norm1_w"], p["norm1_b"]).reshape(B, T, d)
    ca = multihead_attention(x, memory, p["cross_attn"], None, mem_kpm, nhead,
                             is_self=False)
    x = pallas_add_layernorm(x.reshape(B * T, d), ca.reshape(B * T, d),
                             p["norm2_w"], p["norm2_b"]).reshape(B, T, d)
    ff = pallas_ffn(x.reshape(B * T, d), p["linear1_w"], p["linear1_b"],
                    p["linear2_w"], p["linear2_b"])
    x = pallas_add_layernorm(x.reshape(B * T, d), ff,
                             p["norm3_w"], p["norm3_b"]).reshape(B, T, d)
    return x


def seq2seq_transformer_forward(params, src, tgt, src_mask, tgt_mask,
                                src_padding_mask, tgt_padding_mask,
                                memory_key_padding_mask, *, d_model, nhead):
    # token ids arrive seq-first [T, B] (torch layout); internal layout is
    # batch-first [B, T, d] so attention/LN blocks keep full last-two dims.
    emb_scale = math.sqrt(d_model)
    src_emb = jnp.take(params["src_emb"], src.T, axis=0) * emb_scale  # [B,S,d]
    tgt_emb = jnp.take(params["tgt_emb"], tgt.T, axis=0) * emb_scale  # [B,T,d]
    src_emb = src_emb + params["pos_enc"][None, :src_emb.shape[1], :]
    tgt_emb = tgt_emb + params["pos_enc"][None, :tgt_emb.shape[1], :]

    mem = src_emb
    for p in params["encoder_layers"]:
        mem = encoder_layer(mem, p, src_mask, src_padding_mask, nhead)
    B, S, _ = mem.shape
    mem = pallas_layernorm(mem.reshape(B * S, d_model),
                           params["enc_norm_w"],
                           params["enc_norm_b"]).reshape(B, S, d_model)

    out = tgt_emb
    for p in params["decoder_layers"]:
        out = decoder_layer(out, mem, p, tgt_mask, tgt_padding_mask,
                            memory_key_padding_mask, nhead)
    T = out.shape[1]
    out = pallas_layernorm(out.reshape(B * T, d_model),
                           params["dec_norm_w"],
                           params["dec_norm_b"]).reshape(B, T, d_model)

    logits = pallas_linear(out.reshape(B * T, d_model),
                           params["gen_w"], params["gen_b"])
    V = logits.shape[-1]
    return logits.reshape(B, T, V).transpose(1, 0, 2)   # [T, B, V] (torch layout)


# ------------------------------ parameters ----------------------------------

def make_params(key, *, d_model, num_enc, num_dec, dim_ff,
                src_vocab, tgt_vocab, maxlen=128):
    keys = iter(jax.random.split(key, 256))
    wdt = jnp.bfloat16      # matmul weights in bf16 (MXU native); f32 accumulation

    def nrm(shape, dtype=jnp.float32, scale=0.02):
        return (scale * jax.random.normal(next(keys), shape)).astype(dtype)

    def attn_params():
        return dict(in_proj_weight=nrm((3 * d_model, d_model), wdt),
                    in_proj_bias=nrm((3 * d_model,)),
                    out_proj_weight=nrm((d_model, d_model), wdt),
                    out_proj_bias=nrm((d_model,)))

    def ln():
        return jnp.ones((d_model,), jnp.float32), jnp.zeros((d_model,), jnp.float32)

    def enc_layer():
        n1w, n1b = ln(); n2w, n2b = ln()
        return dict(self_attn=attn_params(),
                    linear1_w=nrm((dim_ff, d_model), wdt), linear1_b=nrm((dim_ff,)),
                    linear2_w=nrm((d_model, dim_ff), wdt), linear2_b=nrm((d_model,)),
                    norm1_w=n1w, norm1_b=n1b, norm2_w=n2w, norm2_b=n2b)

    def dec_layer():
        n1w, n1b = ln(); n2w, n2b = ln(); n3w, n3b = ln()
        return dict(self_attn=attn_params(), cross_attn=attn_params(),
                    linear1_w=nrm((dim_ff, d_model), wdt), linear1_b=nrm((dim_ff,)),
                    linear2_w=nrm((d_model, dim_ff), wdt), linear2_b=nrm((d_model,)),
                    norm1_w=n1w, norm1_b=n1b, norm2_w=n2w, norm2_b=n2b,
                    norm3_w=n3w, norm3_b=n3b)

    # Sinusoidal positional encoding table [maxlen, d_model]
    den = jnp.exp(-jnp.arange(0, d_model, 2, dtype=jnp.float32)
                  * math.log(10000.0) / d_model)
    pos = jnp.arange(maxlen, dtype=jnp.float32).reshape(maxlen, 1)
    pe = jnp.zeros((maxlen, d_model), jnp.float32)
    pe = pe.at[:, 0::2].set(jnp.sin(pos * den))
    pe = pe.at[:, 1::2].set(jnp.cos(pos * den))

    enc_nw, enc_nb = ln()
    dec_nw, dec_nb = ln()
    return dict(
        src_emb=nrm((src_vocab, d_model)),
        tgt_emb=nrm((tgt_vocab, d_model)),
        pos_enc=pe,
        encoder_layers=[enc_layer() for _ in range(num_enc)],
        decoder_layers=[dec_layer() for _ in range(num_dec)],
        enc_norm_w=enc_nw, enc_norm_b=enc_nb,
        dec_norm_w=dec_nw, dec_norm_b=dec_nb,
        gen_w=nrm((tgt_vocab, d_model), wdt), gen_b=nrm((tgt_vocab,)),
    )


# TODO(synk): tokenize/vocab/translate/greedyDecode are host-side string
# processing and are not part of the numeric forward pass; not implemented.

if __name__ == "__main__":
    D_MODEL, NHEAD, NUM_ENC, NUM_DEC, DIM_FF = 32, 4, 2, 2, 64
    SRC_VOCAB, TGT_VOCAB = 50, 60
    S, T, B = 8, 7, 2

    key = jax.random.PRNGKey(0)
    pkey, skey, tkey = jax.random.split(key, 3)
    params = make_params(pkey, d_model=D_MODEL, num_enc=NUM_ENC,
                         num_dec=NUM_DEC, dim_ff=DIM_FF,
                         src_vocab=SRC_VOCAB, tgt_vocab=TGT_VOCAB)

    src = jax.random.randint(skey, (S, B), 0, SRC_VOCAB, dtype=jnp.int32)
    tgt = jax.random.randint(tkey, (T, B), 0, TGT_VOCAB, dtype=jnp.int32)

    src_mask = jnp.zeros((S, S), jnp.float32)
    tgt_mask = jnp.where(jnp.triu(jnp.ones((T, T), jnp.bool_), k=1),
                         -jnp.inf, 0.0).astype(jnp.float32)        # causal
    src_padding_mask = jnp.zeros((B, S), jnp.bool_).at[1, S - 1].set(True)
    tgt_padding_mask = jnp.zeros((B, T), jnp.bool_).at[1, T - 1].set(True)
    memory_key_padding_mask = src_padding_mask

    fwd = jax.jit(functools.partial(seq2seq_transformer_forward,
                                    d_model=D_MODEL, nhead=NHEAD))
    logits = fwd(params, src, tgt, src_mask, tgt_mask,
                 src_padding_mask, tgt_padding_mask, memory_key_padding_mask)
    jax.block_until_ready(logits)

    assert logits.shape == (T, B, TGT_VOCAB), logits.shape
    assert bool(jnp.all(jnp.isfinite(logits)))
    print("KERNEL_OK")
</pallas_src>

<mosaic_0001>
module attributes {stable_mosaic.version = 11 : i64} {
  func.func @_linear_kernel(%arg0: i32, %arg1: i32, %arg2: i32, %arg3: memref<14x32xf32, #tpu.memory_space<vmem>>, %arg4: memref<96x32xbf16, #tpu.memory_space<vmem>>, %arg5: memref<1x96xf32, #tpu.memory_space<vmem>>, %arg6: memref<14x96xf32, #tpu.memory_space<vmem>>, %arg7: memref<14x96xf32, #tpu.memory_space<vmem>>) attributes {dimension_semantics = [#tpu.dimension_semantics<parallel>, #tpu.dimension_semantics<parallel>, #tpu.dimension_semantics<arbitrary>], iteration_bounds = array<i64: 1, 1, 1>, scalar_prefetch = 0 : i64, scratch_operands = 1 : i64, tpu.core_type = #tpu.core_type<tc>, window_params = [{transform_indices = @transform_0, window_bounds = array<i64: 14, 32>}, {transform_indices = @transform_1, window_bounds = array<i64: 96, 32>}, {transform_indices = @transform_2, window_bounds = array<i64: 1, 96>}, {transform_indices = @transform_3, window_bounds = array<i64: 14, 96>}]} {
    %c0_i32 = arith.constant 0 : i32
    %0 = arith.cmpi eq, %arg2, %c0_i32 : i32
    %1 = arith.extui %0 : i1 to i32
    %c0_i32_0 = arith.constant 0 : i32
    %2 = arith.cmpi ne, %1, %c0_i32_0 : i32
    scf.if %2 {
      %cst_10 = arith.constant 0.000000e+00 : f32
      %13 = vector.broadcast %cst_10 : f32 to vector<14x96xf32>
      %c0_11 = arith.constant 0 : index
      %c0_12 = arith.constant 0 : index
      %14 = vector.load %arg7[%c0_11, %c0_12] : memref<14x96xf32, #tpu.memory_space<vmem>>, vector<14x96xf32>
      tpu.vector_store %arg7[%c0_11, %c0_12], %13 {strides = array<i32>} : memref<14x96xf32, #tpu.memory_space<vmem>>, vector<14x96xf32>,
    } else {
    }
    %c0 = arith.constant 0 : index
    %c0_1 = arith.constant 0 : index
    %3 = vector.load %arg3[%c0, %c0_1] : memref<14x32xf32, #tpu.memory_space<vmem>>, vector<14x32xf32>
    %4 = arith.truncf %3 : vector<14x32xf32> to vector<14x32xbf16>
    %c0_2 = arith.constant 0 : index
    %c0_3 = arith.constant 0 : index
    %5 = vector.load %arg4[%c0_2, %c0_3] : memref<96x32xbf16, #tpu.memory_space<vmem>>, vector<96x32xbf16>
    %c0_4 = arith.constant 0 : index
    %c0_5 = arith.constant 0 : index
    %6 = vector.load %arg7[%c0_4, %c0_5] : memref<14x96xf32, #tpu.memory_space<vmem>>, vector<14x96xf32>
    %cst = arith.constant dense<0.000000e+00> : vector<14x96xf32>
    %7 = tpu.matmul %4, %5, %cst {dimension_numbers = #tpu.dot_dimension_numbers<[1], [1], [0], [0], [0, 0, 1, 0], [], []>} : vector<14x32xbf16>, vector<96x32xbf16>, vector<14x96xf32> -> vector<14x96xf32>
    %8 = arith.addf %6, %7 : vector<14x96xf32>
    %c0_6 = arith.constant 0 : index
    %c0_7 = arith.constant 0 : index
    %9 = vector.load %arg7[%c0_6, %c0_7] : memref<14x96xf32, #tpu.memory_space<vmem>>, vector<14x96xf32>
    tpu.vector_store %arg7[%c0_6, %c0_7], %8 {strides = array<i32>} : memref<14x96xf32, #tpu.memory_space<vmem>>, vector<14x96xf32>,
    %c0_i32_8 = arith.constant 0 : i32
    %10 = arith.cmpi eq, %arg2, %c0_i32_8 : i32
    %11 = arith.extui %10 : i1 to i32
    %c0_i32_9 = arith.constant 0 : i32
    %12 = arith.cmpi ne, %11, %c0_i32_9 : i32
    scf.if %12 {
      %c0_10 = arith.constant 0 : index
      %c0_11 = arith.constant 0 : index
      %13 = vector.load %arg7[%c0_10, %c0_11] : memref<14x96xf32, #tpu.memory_space<vmem>>, vector<14x96xf32>
      %c0_12 = arith.constant 0 : index
      %c0_13 = arith.constant 0 : index
      %14 = vector.load %arg5[%c0_12, %c0_13] : memref<1x96xf32, #tpu.memory_space<vmem>>, vector<1x96xf32>
      %15 = vector.broadcast %14 : vector<1x96xf32> to vector<14x96xf32>
      %16 = arith.addf %13, %15 : vector<14x96xf32>
      %c0_14 = arith.constant 0 : index
      %c0_15 = arith.constant 0 : index
      %17 = vector.load %arg6[%c0_14, %c0_15] : memref<14x96xf32, #tpu.memory_space<vmem>>, vector<14x96xf32>
      tpu.vector_store %arg6[%c0_14, %c0_15], %16 {strides = array<i32>} : memref<14x96xf32, #tpu.memory_space<vmem>>, vector<14x96xf32>,
    } else {
    }
    return
  }
  func.func @transform_0(%arg0: i32, %arg1: i32, %arg2: i32) -> (i32, i32) {
    %c0_i32 = arith.constant 0 : i32
    return %arg0, %arg2 : i32, i32
  }
  func.func @transform_1(%arg0: i32, %arg1: i32, %arg2: i32) -> (i32, i32) {
    %c0_i32 = arith.constant 0 : i32
    return %arg1, %arg2 : i32, i32
  }
  func.func @transform_2(%arg0: i32, %arg1: i32, %arg2: i32) -> (i32, i32) {
    %c0_i32 = arith.constant 0 : i32
    %c0_i32_0 = arith.constant 0 : i32
    return %c0_i32, %arg1 : i32, i32
  }
  func.func @transform_3(%arg0: i32, %arg1: i32, %arg2: i32) -> (i32, i32) {
    %c0_i32 = arith.constant 0 : i32
    return %arg0, %arg1 : i32, i32
  }
}

module attributes {stable_mosaic.version = 11 : i64} {
  func.func @_linear_kernel(%arg0: i32, %arg1: i32, %arg2: i32, %arg3: memref<14x32xf32, #tpu.memory_space<vmem>>, %arg4: memref<32x32xbf16, #tpu.memory_space<vmem>>, %arg5: memref<1x32xf32, #tpu.memory_space<vmem>>, %arg6: memref<14x32xf32, #tpu.memory_space<vmem>>, %arg7: memref<14x32xf32, #tpu.memory_space<vmem>>) attributes {dimension_semantics = [#tpu.dimension_semantics<parallel>, #tpu.dimension_semantics<parallel>, #tpu.dimension_semantics<arbitrary>], iteration_bounds = array<i64: 1, 1, 1>, scalar_prefetch = 0 : i64, scratch_operands = 1 : i64, tpu.core_type = #tpu.core_type<tc>, window_params = [{transform_indices = @transform_0, window_bounds = array<i64: 14, 32>}, {transform_indices = @transform_1, window_bounds = array<i64: 32, 32>}, {transform_indices = @transform_2, window_bounds = array<i64: 1, 32>}, {transform_indices = @transform_3, window_bounds = array<i64: 14, 32>}]} {
    %c0_i32 = arith.constant 0 : i32
    %0 = arith.cmpi eq, %arg2, %c0_i32 : i32
    %1 = arith.extui %0 : i1 to i32
    %c0_i32_0 = arith.constant 0 : i32
    %2 = arith.cmpi ne, %1, %c0_i32_0 : i32
    scf.if %2 {
      %cst_10 = arith.constant 0.000000e+00 : f32
      %13 = vector.broadcast %cst_10 : f32 to vector<14x32xf32>
      %c0_11 = arith.constant 0 : index
      %c0_12 = arith.constant 0 : index
      %14 = vector.load %arg7[%c0_11, %c0_12] : memref<14x32xf32, #tpu.memory_space<vmem>>, vector<14x32xf32>
      tpu.vector_store %arg7[%c0_11, %c0_12], %13 {strides = array<i32>} : memref<14x32xf32, #tpu.memory_space<vmem>>, vector<14x32xf32>,
    } else {
    }
    %c0 = arith.constant 0 : index
    %c0_1 = arith.constant 0 : index
    %3 = vector.load %arg3[%c0, %c0_1] : memref<14x32xf32, #tpu.memory_space<vmem>>, vector<14x32xf32>
    %4 = arith.truncf %3 : vector<14x32xf32> to vector<14x32xbf16>
    %c0_2 = arith.constant 0 : index
    %c0_3 = arith.constant 0 : index
    %5 = vector.load %arg4[%c0_2, %c0_3] : memref<32x32xbf16, #tpu.memory_space<vmem>>, vector<32x32xbf16>
    %c0_4 = arith.constant 0 : index
    %c0_5 = arith.constant 0 : index
    %6 = vector.load %arg7[%c0_4, %c0_5] : memref<14x32xf32, #tpu.memory_space<vmem>>, vector<14x32xf32>
    %cst = arith.constant dense<0.000000e+00> : vector<14x32xf32>
    %7 = tpu.matmul %4, %5, %cst {dimension_numbers = #tpu.dot_dimension_numbers<[1], [1], [0], [0], [0, 0, 1, 0], [], []>} : vector<14x32xbf16>, vector<32x32xbf16>, vector<14x32xf32> -> vector<14x32xf32>
    %8 = arith.addf %6, %7 : vector<14x32xf32>
    %c0_6 = arith.constant 0 : index
    %c0_7 = arith.constant 0 : index
    %9 = vector.load %arg7[%c0_6, %c0_7] : memref<14x32xf32, #tpu.memory_space<vmem>>, vector<14x32xf32>
    tpu.vector_store %arg7[%c0_6, %c0_7], %8 {strides = array<i32>} : memref<14x32xf32, #tpu.memory_space<vmem>>, vector<14x32xf32>,
    %c0_i32_8 = arith.constant 0 : i32
    %10 = arith.cmpi eq, %arg2, %c0_i32_8 : i32
    %11 = arith.extui %10 : i1 to i32
    %c0_i32_9 = arith.constant 0 : i32
    %12 = arith.cmpi ne, %11, %c0_i32_9 : i32
    scf.if %12 {
      %c0_10 = arith.constant 0 : index
      %c0_11 = arith.constant 0 : index
      %13 = vector.load %arg7[%c0_10, %c0_11] : memref<14x32xf32, #tpu.memory_space<vmem>>, vector<14x32xf32>
      %c0_12 = arith.constant 0 : index
      %c0_13 = arith.constant 0 : index
      %14 = vector.load %arg5[%c0_12, %c0_13] : memref<1x32xf32, #tpu.memory_space<vmem>>, vector<1x32xf32>
      %15 = vector.broadcast %14 : vector<1x32xf32> to vector<14x32xf32>
      %16 = arith.addf %13, %15 : vector<14x32xf32>
      %c0_14 = arith.constant 0 : index
      %c0_15 = arith.constant 0 : index
      %17 = vector.load %arg6[%c0_14, %c0_15] : memref<14x32xf32, #tpu.memory_space<vmem>>, vector<14x32xf32>
      tpu.vector_store %arg6[%c0_14, %c0_15], %16 {strides = array<i32>} : memref<14x32xf32, #tpu.memory_space<vmem>>, vector<14x32xf32>,
    } else {
    }
    return
  }
  func.func @transform_0(%arg0: i32, %arg1: i32, %arg2: i32) -> (i32, i32) {
    %c0_i32 = arith.constant 0 : i32
    return %arg0, %arg2 : i32, i32
  }
  func.func @transform_1(%arg0: i32, %arg1: i32, %arg2: i32) -> (i32, i32) {
    %c0_i32 = arith.constant 0 : i32
    return %arg1, %arg2 : i32, i32
  }
  func.func @transform_2(%arg0: i32, %arg1: i32, %arg2: i32) -> (i32, i32) {
    %c0_i32 = arith.constant 0 : i32
    %c0_i32_0 = arith.constant 0 : i32
    return %c0_i32, %arg1 : i32, i32
  }
  func.func @transform_3(%arg0: i32, %arg1: i32, %arg2: i32) -> (i32, i32) {
    %c0_i32 = arith.constant 0 : i32
    return %arg0, %arg1 : i32, i32
  }
}

module attributes {stable_mosaic.version = 11 : i64} {
  func.func @_add_ln_kernel(%arg0: i32, %arg1: memref<14x32xf32, #tpu.memory_space<vmem>>, %arg2: memref<14x32xf32, #tpu.memory_space<vmem>>, %arg3: memref<1x32xf32, #tpu.memory_space<vmem>>, %arg4: memref<1x32xf32, #tpu.memory_space<vmem>>, %arg5: memref<14x32xf32, #tpu.memory_space<vmem>>) attributes {dimension_semantics = [#tpu.dimension_semantics<parallel>], iteration_bounds = array<i64: 1>, scalar_prefetch = 0 : i64, scratch_operands = 0 : i64, tpu.core_type = #tpu.core_type<tc>, window_params = [{transform_indices = @transform_0, window_bounds = array<i64: 14, 32>}, {transform_indices = @transform_1, window_bounds = array<i64: 14, 32>}, {pipeline_mode = #tpu.pipeline_mode<synchronous>, transform_indices = @transform_2, window_bounds = array<i64: 1, 32>}, {pipeline_mode = #tpu.pipeline_mode<synchronous>, transform_indices = @transform_3, window_bounds = array<i64: 1, 32>}, {transform_indices = @transform_4, window_bounds = array<i64: 14, 32>}]} {
    %c0 = arith.constant 0 : index
    %c0_0 = arith.constant 0 : index
    %0 = vector.load %arg1[%c0, %c0_0] : memref<14x32xf32, #tpu.memory_space<vmem>>, vector<14x32xf32>
    %c0_1 = arith.constant 0 : index
    %c0_2 = arith.constant 0 : index
    %1 = vector.load %arg2[%c0_1, %c0_2] : memref<14x32xf32, #tpu.memory_space<vmem>>, vector<14x32xf32>
    %2 = arith.addf %0, %1 : vector<14x32xf32>
    %c0_3 = arith.constant 0 : index
    %c0_4 = arith.constant 0 : index
    %3 = vector.load %arg3[%c0_3, %c0_4] : memref<1x32xf32, #tpu.memory_space<vmem>>, vector<1x32xf32>
    %c0_5 = arith.constant 0 : index
    %c0_6 = arith.constant 0 : index
    %4 = vector.load %arg4[%c0_5, %c0_6] : memref<1x32xf32, #tpu.memory_space<vmem>>, vector<1x32xf32>
    %cst = arith.constant dense<0.000000e+00> : vector<14xf32>
    %5 = vector.multi_reduction <add>, %2, %cst [1] : vector<14x32xf32> to vector<14xf32>
    %6 = vector.shape_cast %5 : vector<14xf32> to vector<14x1xf32>
    %cst_7 = arith.constant 3.200000e+01 : f32
    %7 = vector.broadcast %cst_7 : f32 to vector<14x1xf32>
    %8 = arith.divf %6, %7 : vector<14x1xf32>
    %9 = vector.broadcast %8 : vector<14x1xf32> to vector<14x32xf32>
    %10 = arith.subf %2, %9 : vector<14x32xf32>
    %11 = arith.mulf %10, %10 : vector<14x32xf32>
    %cst_8 = arith.constant dense<0.000000e+00> : vector<14xf32>
    %12 = vector.multi_reduction <add>, %11, %cst_8 [1] : vector<14x32xf32> to vector<14xf32>
    %13 = vector.shape_cast %12 : vector<14xf32> to vector<14x1xf32>
    %cst_9 = arith.constant 3.200000e+01 : f32
    %14 = vector.broadcast %cst_9 : f32 to vector<14x1xf32>
    %15 = arith.divf %13, %14 : vector<14x1xf32>
    %cst_10 = arith.constant 9.99999974E-6 : f32
    %16 = vector.broadcast %cst_10 : f32 to vector<14x1xf32>
    %17 = arith.addf %15, %16 : vector<14x1xf32>
    %18 = math.rsqrt %17 : vector<14x1xf32>
    %19 = vector.broadcast %18 : vector<14x1xf32> to vector<14x32xf32>
    %20 = arith.mulf %10, %19 : vector<14x32xf32>
    %21 = vector.broadcast %3 : vector<1x32xf32> to vector<14x32xf32>
    %22 = arith.mulf %20, %21 : vector<14x32xf32>
    %23 = vector.broadcast %4 : vector<1x32xf32> to vector<14x32xf32>
    %24 = arith.addf %22, %23 : vector<14x32xf32>
    %c0_11 = arith.constant 0 : index
    %c0_12 = arith.constant 0 : index
    %25 = vector.load %arg5[%c0_11, %c0_12] : memref<14x32xf32, #tpu.memory_space<vmem>>, vector<14x32xf32>
    tpu.vector_store %arg5[%c0_11, %c0_12], %24 {strides = array<i32>} : memref<14x32xf32, #tpu.memory_space<vmem>>, vector<14x32xf32>,
    return
  }
  func.func @transform_0(%arg0: i32) -> (i32, i32) {
    %c0_i32 = arith.constant 0 : i32
    %c0_i32_0 = arith.constant 0 : i32
    return %arg0, %c0_i32 : i32, i32
  }
  func.func @transform_1(%arg0: i32) -> (i32, i32) {
    %c0_i32 = arith.constant 0 : i32
    %c0_i32_0 = arith.constant 0 : i32
    return %arg0, %c0_i32 : i32, i32
  }
  func.func @transform_2(%arg0: i32) -> (i32, i32) {
    %c0_i32 = arith.constant 0 : i32
    %c0_i32_0 = arith.constant 0 : i32
    %c0_i32_1 = arith.constant 0 : i32
    return %c0_i32, %c0_i32_0 : i32, i32
  }
  func.func @transform_3(%arg0: i32) -> (i32, i32) {
    %c0_i32 = arith.constant 0 : i32
    %c0_i32_0 = arith.constant 0 : i32
    %c0_i32_1 = arith.constant 0 : i32
    return %c0_i32, %c0_i32_0 : i32, i32
  }
  func.func @transform_4(%arg0: i32) -> (i32, i32) {
    %c0_i32 = arith.constant 0 : i32
    %c0_i32_0 = arith.constant 0 : i32
    return %arg0, %c0_i32 : i32, i32
  }
}

module attributes {stable_mosaic.version = 11 : i64} {
  func.func @_mha_kernel(%arg0: i32, %arg1: memref<1x7x96xf32, #tpu.memory_space<vmem>>, %arg2: memref<1x7x96xf32, #tpu.memory_space<vmem>>, %arg3: memref<7x7xf32, #tpu.memory_space<vmem>>, %arg4: memref<1x1x7xf32, #tpu.memory_space<vmem>>, %arg5: memref<1x7x32xf32, #tpu.memory_space<vmem>>) attributes {dimension_semantics = [#tpu.dimension_semantics<parallel>], iteration_bounds = array<i64: 2>, scalar_prefetch = 0 : i64, scratch_operands = 0 : i64, tpu.core_type = #tpu.core_type<tc>, window_params = [{transform_indices = @transform_0, window_bounds = array<i64: 1, 7, 96>}, {transform_indices = @transform_1, window_bounds = array<i64: 1, 7, 96>}, {pipeline_mode = #tpu.pipeline_mode<synchronous>, transform_indices = @transform_2, window_bounds = array<i64: 7, 7>}, {transform_indices = @transform_3, window_bounds = array<i64: 1, 1, 7>}, {transform_indices = @transform_4, window_bounds = array<i64: 1, 7, 32>}]} {
    %c0 = arith.constant 0 : index
    %c0_0 = arith.constant 0 : index
    %0 = vector.load %arg3[%c0, %c0_0] : memref<7x7xf32, #tpu.memory_space<vmem>>, vector<7x7xf32>
    %cst = arith.constant -1.000000e+30 : f32
    %1 = vector.broadcast %cst : f32 to vector<7x7xf32>
    %2 = arith.maximumf %0, %1 : vector<7x7xf32>
    %c0_1 = arith.constant 0 : index
    %c0_2 = arith.constant 0 : index
    %c0_3 = arith.constant 0 : index
    %3 = vector.load %arg4[%c0_1, %c0_2, %c0_3] : memref<1x1x7xf32, #tpu.memory_space<vmem>>, vector<1x1x7xf32>
    %4 = vector.shape_cast %3 : vector<1x1x7xf32> to vector<1x7xf32>
    %5 = vector.broadcast %4 : vector<1x7xf32> to vector<7x7xf32>
    %6 = arith.addf %2, %5 : vector<7x7xf32>
    %c0_4 = arith.constant 0 : index
    %c0_5 = arith.constant 0 : index
    %c0_6 = arith.constant 0 : index
    %7 = vector.load %arg1[%c0_4, %c0_5, %c0_6] : memref<1x7x96xf32, #tpu.memory_space<vmem>>, vector<1x7x8xf32>
    %8 = vector.shape_cast %7 : vector<1x7x8xf32> to vector<7x8xf32>
    %9 = arith.truncf %8 : vector<7x8xf32> to vector<7x8xbf16>
    %c0_7 = arith.constant 0 : index
    %c0_8 = arith.constant 0 : index
    %c32 = arith.constant 32 : index
    %10 = vector.load %arg2[%c0_7, %c0_8, %c32] : memref<1x7x96xf32, #tpu.memory_space<vmem>>, vector<1x7x8xf32>
    %11 = vector.shape_cast %10 : vector<1x7x8xf32> to vector<7x8xf32>
    %12 = arith.truncf %11 : vector<7x8xf32> to vector<7x8xbf16>
    %c0_9 = arith.constant 0 : index
    %c0_10 = arith.constant 0 : index
    %c64 = arith.constant 64 : index
    %13 = vector.load %arg2[%c0_9, %c0_10, %c64] : memref<1x7x96xf32, #tpu.memory_space<vmem>>, vector<1x7x8xf32>
    %14 = vector.shape_cast %13 : vector<1x7x8xf32> to vector<7x8xf32>
    %15 = arith.truncf %14 : vector<7x8xf32> to vector<7x8xbf16>
    %cst_11 = arith.constant dense<0.000000e+00> : vector<7x7xf32>
    %16 = tpu.matmul %9, %12, %cst_11 {dimension_numbers = #tpu.dot_dimension_numbers<[1], [1], [0], [0], [0, 0, 1, 0], [], []>} : vector<7x8xbf16>, vector<7x8xbf16>, vector<7x7xf32> -> vector<7x7xf32>
    %cst_12 = arith.constant 0.353553385 : f32
    %17 = vector.broadcast %cst_12 : f32 to vector<7x7xf32>
    %18 = arith.mulf %16, %17 : vector<7x7xf32>
    %19 = arith.addf %18, %6 : vector<7x7xf32>
    %cst_13 = arith.constant dense<0xFF800000> : vector<7xf32>
    %20 = vector.multi_reduction <maximumf>, %19, %cst_13 [1] : vector<7x7xf32> to vector<7xf32>
    %21 = vector.shape_cast %20 : vector<7xf32> to vector<7x1xf32>
    %22 = vector.broadcast %21 : vector<7x1xf32> to vector<7x7xf32>
    %23 = arith.subf %19, %22 : vector<7x7xf32>
    %24 = math.exp %23 : vector<7x7xf32>
    %cst_14 = arith.constant dense<0.000000e+00> : vector<7xf32>
    %25 = vector.multi_reduction <add>, %24, %cst_14 [1] : vector<7x7xf32> to vector<7xf32>
    %26 = vector.shape_cast %25 : vector<7xf32> to vector<7x1xf32>
    %27 = tpu.reciprocal %26 {approx = true} : vector<7x1xf32> -> vector<7x1xf32>
    %28 = vector.broadcast %27 : vector<7x1xf32> to vector<7x7xf32>
    %29 = arith.mulf %24, %28 : vector<7x7xf32>
    %30 = arith.truncf %29 : vector<7x7xf32> to vector<7x7xbf16>
    %cst_15 = arith.constant dense<0.000000e+00> : vector<7x8xf32>
    %31 = tpu.matmul %30, %15, %cst_15 {dimension_numbers = #tpu.dot_dimension_numbers<[1], [0], [0], [1], [0, 0, 1, 1], [], []>} : vector<7x7xbf16>, vector<7x8xbf16>, vector<7x8xf32> -> vector<7x8xf32>
    %c0_16 = arith.constant 0 : index
    %c0_17 = arith.constant 0 : index
    %c0_18 = arith.constant 0 : index
    %32 = vector.load %arg5[%c0_16, %c0_17, %c0_18] : memref<1x7x32xf32, #tpu.memory_space<vmem>>, vector<1x7x8xf32>
    %33 = vector.shape_cast %32 : vector<1x7x8xf32> to vector<7x8xf32>
    %34 = vector.shape_cast %31 : vector<7x8xf32> to vector<1x7x8xf32>
    tpu.vector_store %arg5[%c0_16, %c0_17, %c0_18], %34 {strides = array<i32>} : memref<1x7x32xf32, #tpu.memory_space<vmem>>, vector<1x7x8xf32>,
    %c0_19 = arith.constant 0 : index
    %c0_20 = arith.constant 0 : index
    %c8 = arith.constant 8 : index
    %35 = vector.load %arg1[%c0_19, %c0_20, %c8] : memref<1x7x96xf32, #tpu.memory_space<vmem>>, vector<1x7x8xf32>
    %36 = vector.shape_cast %35 : vector<1x7x8xf32> to vector<7x8xf32>
    %37 = arith.truncf %36 : vector<7x8xf32> to vector<7x8xbf16>
    %c0_21 = arith.constant 0 : index
    %c0_22 = arith.constant 0 : index
    %c40 = arith.constant 40 : index
    %38 = vector.load %arg2[%c0_21, %c0_22, %c40] : memref<1x7x96xf32, #tpu.memory_space<vmem>>, vector<1x7x8xf32>
    %39 = vector.shape_cast %38 : vector<1x7x8xf32> to vector<7x8xf32>
    %40 = arith.truncf %39 : vector<7x8xf32> to vector<7x8xbf16>
    %c0_23 = arith.constant 0 : index
    %c0_24 = arith.constant 0 : index
    %c72 = arith.constant 72 : index
    %41 = vector.load %arg2[%c0_23, %c0_24, %c72] : memref<1x7x96xf32, #tpu.memory_space<vmem>>, vector<1x7x8xf32>
    %42 = vector.shape_cast %41 : vector<1x7x8xf32> to vector<7x8xf32>
    %43 = arith.truncf %42 : vector<7x8xf32> to vector<7x8xbf16>
    %cst_25 = arith.constant dense<0.000000e+00> : vector<7x7xf32>
    %44 = tpu.matmul %37, %40, %cst_25 {dimension_numbers = #tpu.dot_dimension_numbers<[1], [1], [0], [0], [0, 0, 1, 0], [], []>} : vector<7x8xbf16>, vector<7x8xbf16>, vector<7x7xf32> -> vector<7x7xf32>
    %cst_26 = arith.constant 0.353553385 : f32
    %45 = vector.broadcast %cst_26 : f32 to vector<7x7xf32>
    %46 = arith.mulf %44, %45 : vector<7x7xf32>
    %47 = arith.addf %46, %6 : vector<7x7xf32>
    %cst_27 = arith.constant dense<0xFF800000> : vector<7xf32>
    %48 = vector.multi_reduction <maximumf>, %47, %cst_27 [1] : vector<7x7xf32> to vector<7xf32>
    %49 = vector.shape_cast %48 : vector<7xf32> to vector<7x1xf32>
    %50 = vector.broadcast %49 : vector<7x1xf32> to vector<7x7xf32>
    %51 = arith.subf %47, %50 : vector<7x7xf32>
    %52 = math.exp %51 : vector<7x7xf32>
    %cst_28 = arith.constant dense<0.000000e+00> : vector<7xf32>
    %53 = vector.multi_reduction <add>, %52, %cst_28 [1] : vector<7x7xf32> to vector<7xf32>
    %54 = vector.shape_cast %53 : vector<7xf32> to vector<7x1xf32>
    %55 = tpu.reciprocal %54 {approx = true} : vector<7x1xf32> -> vector<7x1xf32>
    %56 = vector.broadcast %55 : vector<7x1xf32> to vector<7x7xf32>
    %57 = arith.mulf %52, %56 : vector<7x7xf32>
    %58 = arith.truncf %57 : vector<7x7xf32> to vector<7x7xbf16>
    %cst_29 = arith.constant dense<0.000000e+00> : vector<7x8xf32>
    %59 = tpu.matmul %58, %43, %cst_29 {dimension_numbers = #tpu.dot_dimension_numbers<[1], [0], [0], [1], [0, 0, 1, 1], [], []>} : vector<7x7xbf16>, vector<7x8xbf16>, vector<7x8xf32> -> vector<7x8xf32>
    %c0_30 = arith.constant 0 : index
    %c0_31 = arith.constant 0 : index
    %c8_32 = arith.constant 8 : index
    %60 = vector.load %arg5[%c0_30, %c0_31, %c8_32] : memref<1x7x32xf32, #tpu.memory_space<vmem>>, vector<1x7x8xf32>
    %61 = vector.shape_cast %60 : vector<1x7x8xf32> to vector<7x8xf32>
    %62 = vector.shape_cast %59 : vector<7x8xf32> to vector<1x7x8xf32>
    tpu.vector_store %arg5[%c0_30, %c0_31, %c8_32], %62 {strides = array<i32>} : memref<1x7x32xf32, #tpu.memory_space<vmem>>, vector<1x7x8xf32>,
    %c0_33 = arith.constant 0 : index
    %c0_34 = arith.constant 0 : index
    %c16 = arith.constant 16 : index
    %63 = vector.load %arg1[%c0_33, %c0_34, %c16] : memref<1x7x96xf32, #tpu.memory_space<vmem>>, vector<1x7x8xf32>
    %64 = vector.shape_cast %63 : vector<1x7x8xf32> to vector<7x8xf32>
    %65 = arith.truncf %64 : vector<7x8xf32> to vector<7x8xbf16>
    %c0_35 = arith.constant 0 : index
    %c0_36 = arith.constant 0 : index
    %c48 = arith.constant 48 : index
    %66 = vector.load %arg2[%c0_35, %c0_36, %c48] : memref<1x7x96xf32, #tpu.memory_space<vmem>>, vector<1x7x8xf32>
    %67 = vector.shape_cast %66 : vector<1x7x8xf32> to vector<7x8xf32>
    %68 = arith.truncf %67 : vector<7x8xf32> to vector<7x8xbf16>
    %c0_37 = arith.constant 0 : index
    %c0_38 = arith.constant 0 : index
    %c80 = arith.constant 80 : index
    %69 = vector.load %arg2[%c0_37, %c0_38, %c80] : memref<1x7x96xf32, #tpu.memory_space<vmem>>, vector<1x7x8xf32>
    %70 = vector.shape_cast %69 : vector<1x7x8xf32> to vector<7x8xf32>
    %71 = arith.truncf %70 : vector<7x8xf32> to vector<7x8xbf16>
    %cst_39 = arith.constant dense<0.000000e+00> : vector<7x7xf32>
    %72 = tpu.matmul %65, %68, %cst_39 {dimension_numbers = #tpu.dot_dimension_numbers<[1], [1], [0], [0], [0, 0, 1, 0], [], []>} : vector<7x8xbf16>, vector<7x8xbf16>, vector<7x7xf32> -> vector<7x7xf32>
    %cst_40 = arith.constant 0.353553385 : f32
    %73 = vector.broadcast %cst_40 : f32 to vector<7x7xf32>
    %74 = arith.mulf %72, %73 : vector<7x7xf32>
    %75 = arith.addf %74, %6 : vector<7x7xf32>
    %cst_41 = arith.constant dense<0xFF800000> : vector<7xf32>
    %76 = vector.multi_reduction <maximumf>, %75, %cst_41 [1] : vector<7x7xf32> to vector<7xf32>
    %77 = vector.shape_cast %76 : vector<7xf32> to vector<7x1xf32>
    %78 = vector.broadcast %77 : vector<7x1xf32> to vector<7x7xf32>
    %79 = arith.subf %75, %78 : vector<7x7xf32>
    %80 = math.exp %79 : vector<7x7xf32>
    %cst_42 = arith.constant dense<0.000000e+00> : vector<7xf32>
    %81 = vector.multi_reduction <add>, %80, %cst_42 [1] : vector<7x7xf32> to vector<7xf32>
    %82 = vector.shape_cast %81 : vector<7xf32> to vector<7x1xf32>
    %83 = tpu.reciprocal %82 {approx = true} : vector<7x1xf32> -> vector<7x1xf32>
    %84 = vector.broadcast %83 : vector<7x1xf32> to vector<7x7xf32>
    %85 = arith.mulf %80, %84 : vector<7x7xf32>
    %86 = arith.truncf %85 : vector<7x7xf32> to vector<7x7xbf16>
    %cst_43 = arith.constant dense<0.000000e+00> : vector<7x8xf32>
    %87 = tpu.matmul %86, %71, %cst_43 {dimension_numbers = #tpu.dot_dimension_numbers<[1], [0], [0], [1], [0, 0, 1, 1], [], []>} : vector<7x7xbf16>, vector<7x8xbf16>, vector<7x8xf32> -> vector<7x8xf32>
    %c0_44 = arith.constant 0 : index
    %c0_45 = arith.constant 0 : index
    %c16_46 = arith.constant 16 : index
    %88 = vector.load %arg5[%c0_44, %c0_45, %c16_46] : memref<1x7x32xf32, #tpu.memory_space<vmem>>, vector<1x7x8xf32>
    %89 = vector.shape_cast %88 : vector<1x7x8xf32> to vector<7x8xf32>
    %90 = vector.shape_cast %87 : vector<7x8xf32> to vector<1x7x8xf32>
    tpu.vector_store %arg5[%c0_44, %c0_45, %c16_46], %90 {strides = array<i32>} : memref<1x7x32xf32, #tpu.memory_space<vmem>>, vector<1x7x8xf32>,
    %c0_47 = arith.constant 0 : index
    %c0_48 = arith.constant 0 : index
    %c24 = arith.constant 24 : index
    %91 = vector.load %arg1[%c0_47, %c0_48, %c24] : memref<1x7x96xf32, #tpu.memory_space<vmem>>, vector<1x7x8xf32>
    %92 = vector.shape_cast %91 : vector<1x7x8xf32> to vector<7x8xf32>
    %93 = arith.truncf %92 : vector<7x8xf32> to vector<7x8xbf16>
    %c0_49 = arith.constant 0 : index
    %c0_50 = arith.constant 0 : index
    %c56 = arith.constant 56 : index
    %94 = vector.load %arg2[%c0_49, %c0_50, %c56] : memref<1x7x96xf32, #tpu.memory_space<vmem>>, vector<1x7x8xf32>
    %95 = vector.shape_cast %94 : vector<1x7x8xf32> to vector<7x8xf32>
    %96 = arith.truncf %95 : vector<7x8xf32> to vector<7x8xbf16>
    %c0_51 = arith.constant 0 : index
    %c0_52 = arith.constant 0 : index
    %c88 = arith.constant 88 : index
    %97 = vector.load %arg2[%c0_51, %c0_52, %c88] : memref<1x7x96xf32, #tpu.memory_space<vmem>>, vector<1x7x8xf32>
    %98 = vector.shape_cast %97 : vector<1x7x8xf32> to vector<7x8xf32>
    %99 = arith.truncf %98 : vector<7x8xf32> to vector<7x8xbf16>
    %cst_53 = arith.constant dense<0.000000e+00> : vector<7x7xf32>
    %100 = tpu.matmul %93, %96, %cst_53 {dimension_numbers = #tpu.dot_dimension_numbers<[1], [1], [0], [0], [0, 0, 1, 0], [], []>} : vector<7x8xbf16>, vector<7x8xbf16>, vector<7x7xf32> -> vector<7x7xf32>
    %cst_54 = arith.constant 0.353553385 : f32
    %101 = vector.broadcast %cst_54 : f32 to vector<7x7xf32>
    %102 = arith.mulf %100, %101 : vector<7x7xf32>
    %103 = arith.addf %102, %6 : vector<7x7xf32>
    %cst_55 = arith.constant dense<0xFF800000> : vector<7xf32>
    %104 = vector.multi_reduction <maximumf>, %103, %cst_55 [1] : vector<7x7xf32> to vector<7xf32>
    %105 = vector.shape_cast %104 : vector<7xf32> to vector<7x1xf32>
    %106 = vector.broadcast %105 : vector<7x1xf32> to vector<7x7xf32>
    %107 = arith.subf %103, %106 : vector<7x7xf32>
    %108 = math.exp %107 : vector<7x7xf32>
    %cst_56 = arith.constant dense<0.000000e+00> : vector<7xf32>
    %109 = vector.multi_reduction <add>, %108, %cst_56 [1] : vector<7x7xf32> to vector<7xf32>
    %110 = vector.shape_cast %109 : vector<7xf32> to vector<7x1xf32>
    %111 = tpu.reciprocal %110 {approx = true} : vector<7x1xf32> -> vector<7x1xf32>
    %112 = vector.broadcast %111 : vector<7x1xf32> to vector<7x7xf32>
    %113 = arith.mulf %108, %112 : vector<7x7xf32>
    %114 = arith.truncf %113 : vector<7x7xf32> to vector<7x7xbf16>
    %cst_57 = arith.constant dense<0.000000e+00> : vector<7x8xf32>
    %115 = tpu.matmul %114, %99, %cst_57 {dimension_numbers = #tpu.dot_dimension_numbers<[1], [0], [0], [1], [0, 0, 1, 1], [], []>} : vector<7x7xbf16>, vector<7x8xbf16>, vector<7x8xf32> -> vector<7x8xf32>
    %c0_58 = arith.constant 0 : index
    %c0_59 = arith.constant 0 : index
    %c24_60 = arith.constant 24 : index
    %116 = vector.load %arg5[%c0_58, %c0_59, %c24_60] : memref<1x7x32xf32, #tpu.memory_space<vmem>>, vector<1x7x8xf32>
    %117 = vector.shape_cast %116 : vector<1x7x8xf32> to vector<7x8xf32>
    %118 = vector.shape_cast %115 : vector<7x8xf32> to vector<1x7x8xf32>
    tpu.vector_store %arg5[%c0_58, %c0_59, %c24_60], %118 {strides = array<i32>} : memref<1x7x32xf32, #tpu.memory_space<vmem>>, vector<1x7x8xf32>,
    return
  }
  func.func @transform_0(%arg0: i32) -> (i32, i32, i32) {
    %c0_i32 = arith.constant 0 : i32
    %c0_i32_0 = arith.constant 0 : i32
    %c0_i32_1 = arith.constant 0 : i32
    return %arg0, %c0_i32, %c0_i32_0 : i32, i32, i32
  }
  func.func @transform_1(%arg0: i32) -> (i32, i32, i32) {
    %c0_i32 = arith.constant 0 : i32
    %c0_i32_0 = arith.constant 0 : i32
    %c0_i32_1 = arith.constant 0 : i32
    return %arg0, %c0_i32, %c0_i32_0 : i32, i32, i32
  }
  func.func @transform_2(%arg0: i32) -> (i32, i32) {
    %c0_i32 = arith.constant 0 : i32
    %c0_i32_0 = arith.constant 0 : i32
    %c0_i32_1 = arith.constant 0 : i32
    return %c0_i32, %c0_i32_0 : i32, i32
  }
  func.func @transform_3(%arg0: i32) -> (i32, i32, i32) {
    %c0_i32 = arith.constant 0 : i32
    %c0_i32_0 = arith.constant 0 : i32
    %c0_i32_1 = arith.constant 0 : i32
    return %arg0, %c0_i32, %c0_i32_0 : i32, i32, i32
  }
  func.func @transform_4(%arg0: i32) -> (i32, i32, i32) {
    %c0_i32 = arith.constant 0 : i32
    %c0_i32_0 = arith.constant 0 : i32
    %c0_i32_1 = arith.constant 0 : i32
    return %arg0, %c0_i32, %c0_i32_0 : i32, i32, i32
  }
}

module attributes {stable_mosaic.version = 11 : i64} {
  func.func @_linear_kernel(%arg0: i32, %arg1: i32, %arg2: i32, %arg3: memref<16x32xf32, #tpu.memory_space<vmem>>, %arg4: memref<32x32xbf16, #tpu.memory_space<vmem>>, %arg5: memref<1x32xf32, #tpu.memory_space<vmem>>, %arg6: memref<16x32xf32, #tpu.memory_space<vmem>>, %arg7: memref<16x32xf32, #tpu.memory_space<vmem>>) attributes {dimension_semantics = [#tpu.dimension_semantics<parallel>, #tpu.dimension_semantics<parallel>, #tpu.dimension_semantics<arbitrary>], iteration_bounds = array<i64: 1, 1, 1>, scalar_prefetch = 0 : i64, scratch_operands = 1 : i64, tpu.core_type = #tpu.core_type<tc>, window_params = [{transform_indices = @transform_0, window_bounds = array<i64: 16, 32>}, {transform_indices = @transform_1, window_bounds = array<i64: 32, 32>}, {transform_indices = @transform_2, window_bounds = array<i64: 1, 32>}, {transform_indices = @transform_3, window_bounds = array<i64: 16, 32>}]} {
    %c0_i32 = arith.constant 0 : i32
    %0 = arith.cmpi eq, %arg2, %c0_i32 : i32
    %1 = arith.extui %0 : i1 to i32
    %c0_i32_0 = arith.constant 0 : i32
    %2 = arith.cmpi ne, %1, %c0_i32_0 : i32
    scf.if %2 {
      %cst_10 = arith.constant 0.000000e+00 : f32
      %13 = vector.broadcast %cst_10 : f32 to vector<16x32xf32>
      %c0_11 = arith.constant 0 : index
      %c0_12 = arith.constant 0 : index
      %14 = vector.load %arg7[%c0_11, %c0_12] : memref<16x32xf32, #tpu.memory_space<vmem>>, vector<16x32xf32>
      tpu.vector_store %arg7[%c0_11, %c0_12], %13 {strides = array<i32>} : memref<16x32xf32, #tpu.memory_space<vmem>>, vector<16x32xf32>,
    } else {
    }
    %c0 = arith.constant 0 : index
    %c0_1 = arith.constant 0 : index
    %3 = vector.load %arg3[%c0, %c0_1] : memref<16x32xf32, #tpu.memory_space<vmem>>, vector<16x32xf32>
    %4 = arith.truncf %3 : vector<16x32xf32> to vector<16x32xbf16>
    %c0_2 = arith.constant 0 : index
    %c0_3 = arith.constant 0 : index
    %5 = vector.load %arg4[%c0_2, %c0_3] : memref<32x32xbf16, #tpu.memory_space<vmem>>, vector<32x32xbf16>
    %c0_4 = arith.constant 0 : index
    %c0_5 = arith.constant 0 : index
    %6 = vector.load %arg7[%c0_4, %c0_5] : memref<16x32xf32, #tpu.memory_space<vmem>>, vector<16x32xf32>
    %cst = arith.constant dense<0.000000e+00> : vector<16x32xf32>
    %7 = tpu.matmul %4, %5, %cst {dimension_numbers = #tpu.dot_dimension_numbers<[1], [1], [0], [0], [0, 0, 1, 0], [], []>} : vector<16x32xbf16>, vector<32x32xbf16>, vector<16x32xf32> -> vector<16x32xf32>
    %8 = arith.addf %6, %7 : vector<16x32xf32>
    %c0_6 = arith.constant 0 : index
    %c0_7 = arith.constant 0 : index
    %9 = vector.load %arg7[%c0_6, %c0_7] : memref<16x32xf32, #tpu.memory_space<vmem>>, vector<16x32xf32>
    tpu.vector_store %arg7[%c0_6, %c0_7], %8 {strides = array<i32>} : memref<16x32xf32, #tpu.memory_space<vmem>>, vector<16x32xf32>,
    %c0_i32_8 = arith.constant 0 : i32
    %10 = arith.cmpi eq, %arg2, %c0_i32_8 : i32
    %11 = arith.extui %10 : i1 to i32
    %c0_i32_9 = arith.constant 0 : i32
    %12 = arith.cmpi ne, %11, %c0_i32_9 : i32
    scf.if %12 {
      %c0_10 = arith.constant 0 : index
      %c0_11 = arith.constant 0 : index
      %13 = vector.load %arg7[%c0_10, %c0_11] : memref<16x32xf32, #tpu.memory_space<vmem>>, vector<16x32xf32>
      %c0_12 = arith.constant 0 : index
      %c0_13 = arith.constant 0 : index
      %14 = vector.load %arg5[%c0_12, %c0_13] : memref<1x32xf32, #tpu.memory_space<vmem>>, vector<1x32xf32>
      %15 = vector.broadcast %14 : vector<1x32xf32> to vector<16x32xf32>
      %16 = arith.addf %13, %15 : vector<16x32xf32>
      %c0_14 = arith.constant 0 : index
      %c0_15 = arith.constant 0 : index
      %17 = vector.load %arg6[%c0_14, %c0_15] : memref<16x32xf32, #tpu.memory_space<vmem>>, vector<16x32xf32>
      tpu.vector_store %arg6[%c0_14, %c0_15], %16 {strides = array<i32>} : memref<16x32xf32, #tpu.memory_space<vmem>>, vector<16x32xf32>,
    } else {
    }
    return
  }
  func.func @transform_0(%arg0: i32, %arg1: i32, %arg2: i32) -> (i32, i32) {
    %c0_i32 = arith.constant 0 : i32
    return %arg0, %arg2 : i32, i32
  }
  func.func @transform_1(%arg0: i32, %arg1: i32, %arg2: i32) -> (i32, i32) {
    %c0_i32 = arith.constant 0 : i32
    return %arg1, %arg2 : i32, i32
  }
  func.func @transform_2(%arg0: i32, %arg1: i32, %arg2: i32) -> (i32, i32) {
    %c0_i32 = arith.constant 0 : i32
    %c0_i32_0 = arith.constant 0 : i32
    return %c0_i32, %arg1 : i32, i32
  }
  func.func @transform_3(%arg0: i32, %arg1: i32, %arg2: i32) -> (i32, i32) {
    %c0_i32 = arith.constant 0 : i32
    return %arg0, %arg1 : i32, i32
  }
}

module attributes {stable_mosaic.version = 11 : i64} {
  func.func @_add_ln_kernel(%arg0: i32, %arg1: memref<16x32xf32, #tpu.memory_space<vmem>>, %arg2: memref<16x32xf32, #tpu.memory_space<vmem>>, %arg3: memref<1x32xf32, #tpu.memory_space<vmem>>, %arg4: memref<1x32xf32, #tpu.memory_space<vmem>>, %arg5: memref<16x32xf32, #tpu.memory_space<vmem>>) attributes {dimension_semantics = [#tpu.dimension_semantics<parallel>], iteration_bounds = array<i64: 1>, scalar_prefetch = 0 : i64, scratch_operands = 0 : i64, tpu.core_type = #tpu.core_type<tc>, window_params = [{transform_indices = @transform_0, window_bounds = array<i64: 16, 32>}, {transform_indices = @transform_1, window_bounds = array<i64: 16, 32>}, {pipeline_mode = #tpu.pipeline_mode<synchronous>, transform_indices = @transform_2, window_bounds = array<i64: 1, 32>}, {pipeline_mode = #tpu.pipeline_mode<synchronous>, transform_indices = @transform_3, window_bounds = array<i64: 1, 32>}, {transform_indices = @transform_4, window_bounds = array<i64: 16, 32>}]} {
    %c0 = arith.constant 0 : index
    %c0_0 = arith.constant 0 : index
    %0 = vector.load %arg1[%c0, %c0_0] : memref<16x32xf32, #tpu.memory_space<vmem>>, vector<16x32xf32>
    %c0_1 = arith.constant 0 : index
    %c0_2 = arith.constant 0 : index
    %1 = vector.load %arg2[%c0_1, %c0_2] : memref<16x32xf32, #tpu.memory_space<vmem>>, vector<16x32xf32>
    %2 = arith.addf %0, %1 : vector<16x32xf32>
    %c0_3 = arith.constant 0 : index
    %c0_4 = arith.constant 0 : index
    %3 = vector.load %arg3[%c0_3, %c0_4] : memref<1x32xf32, #tpu.memory_space<vmem>>, vector<1x32xf32>
    %c0_5 = arith.constant 0 : index
    %c0_6 = arith.constant 0 : index
    %4 = vector.load %arg4[%c0_5, %c0_6] : memref<1x32xf32, #tpu.memory_space<vmem>>, vector<1x32xf32>
    %cst = arith.constant dense<0.000000e+00> : vector<16xf32>
    %5 = vector.multi_reduction <add>, %2, %cst [1] : vector<16x32xf32> to vector<16xf32>
    %6 = vector.shape_cast %5 : vector<16xf32> to vector<16x1xf32>
    %cst_7 = arith.constant 3.200000e+01 : f32
    %7 = vector.broadcast %cst_7 : f32 to vector<16x1xf32>
    %8 = arith.divf %6, %7 : vector<16x1xf32>
    %9 = vector.broadcast %8 : vector<16x1xf32> to vector<16x32xf32>
    %10 = arith.subf %2, %9 : vector<16x32xf32>
    %11 = arith.mulf %10, %10 : vector<16x32xf32>
    %cst_8 = arith.constant dense<0.000000e+00> : vector<16xf32>
    %12 = vector.multi_reduction <add>, %11, %cst_8 [1] : vector<16x32xf32> to vector<16xf32>
    %13 = vector.shape_cast %12 : vector<16xf32> to vector<16x1xf32>
    %cst_9 = arith.constant 3.200000e+01 : f32
    %14 = vector.broadcast %cst_9 : f32 to vector<16x1xf32>
    %15 = arith.divf %13, %14 : vector<16x1xf32>
    %cst_10 = arith.constant 9.99999974E-6 : f32
    %16 = vector.broadcast %cst_10 : f32 to vector<16x1xf32>
    %17 = arith.addf %15, %16 : vector<16x1xf32>
    %18 = math.rsqrt %17 : vector<16x1xf32>
    %19 = vector.broadcast %18 : vector<16x1xf32> to vector<16x32xf32>
    %20 = arith.mulf %10, %19 : vector<16x32xf32>
    %21 = vector.broadcast %3 : vector<1x32xf32> to vector<16x32xf32>
    %22 = arith.mulf %20, %21 : vector<16x32xf32>
    %23 = vector.broadcast %4 : vector<1x32xf32> to vector<16x32xf32>
    %24 = arith.addf %22, %23 : vector<16x32xf32>
    %c0_11 = arith.constant 0 : index
    %c0_12 = arith.constant 0 : index
    %25 = vector.load %arg5[%c0_11, %c0_12] : memref<16x32xf32, #tpu.memory_space<vmem>>, vector<16x32xf32>
    tpu.vector_store %arg5[%c0_11, %c0_12], %24 {strides = array<i32>} : memref<16x32xf32, #tpu.memory_space<vmem>>, vector<16x32xf32>,
    return
  }
  func.func @transform_0(%arg0: i32) -> (i32, i32) {
    %c0_i32 = arith.constant 0 : i32
    %c0_i32_0 = arith.constant 0 : i32
    return %arg0, %c0_i32 : i32, i32
  }
  func.func @transform_1(%arg0: i32) -> (i32, i32) {
    %c0_i32 = arith.constant 0 : i32
    %c0_i32_0 = arith.constant 0 : i32
    return %arg0, %c0_i32 : i32, i32
  }
  func.func @transform_2(%arg0: i32) -> (i32, i32) {
    %c0_i32 = arith.constant 0 : i32
    %c0_i32_0 = arith.constant 0 : i32
    %c0_i32_1 = arith.constant 0 : i32
    return %c0_i32, %c0_i32_0 : i32, i32
  }
  func.func @transform_3(%arg0: i32) -> (i32, i32) {
    %c0_i32 = arith.constant 0 : i32
    %c0_i32_0 = arith.constant 0 : i32
    %c0_i32_1 = arith.constant 0 : i32
    return %c0_i32, %c0_i32_0 : i32, i32
  }
  func.func @transform_4(%arg0: i32) -> (i32, i32) {
    %c0_i32 = arith.constant 0 : i32
    %c0_i32_0 = arith.constant 0 : i32
    return %arg0, %c0_i32 : i32, i32
  }
}

module attributes {stable_mosaic.version = 11 : i64} {
  func.func @_mha_kernel(%arg0: i32, %arg1: memref<1x8x96xf32, #tpu.memory_space<vmem>>, %arg2: memref<1x8x96xf32, #tpu.memory_space<vmem>>, %arg3: memref<8x8xf32, #tpu.memory_space<vmem>>, %arg4: memref<1x1x8xf32, #tpu.memory_space<vmem>>, %arg5: memref<1x8x32xf32, #tpu.memory_space<vmem>>) attributes {dimension_semantics = [#tpu.dimension_semantics<parallel>], iteration_bounds = array<i64: 2>, scalar_prefetch = 0 : i64, scratch_operands = 0 : i64, tpu.core_type = #tpu.core_type<tc>, window_params = [{transform_indices = @transform_0, window_bounds = array<i64: 1, 8, 96>}, {transform_indices = @transform_1, window_bounds = array<i64: 1, 8, 96>}, {pipeline_mode = #tpu.pipeline_mode<synchronous>, transform_indices = @transform_2, window_bounds = array<i64: 8, 8>}, {transform_indices = @transform_3, window_bounds = array<i64: 1, 1, 8>}, {transform_indices = @transform_4, window_bounds = array<i64: 1, 8, 32>}]} {
    %c0 = arith.constant 0 : index
    %c0_0 = arith.constant 0 : index
    %0 = vector.load %arg3[%c0, %c0_0] : memref<8x8xf32, #tpu.memory_space<vmem>>, vector<8x8xf32>
    %cst = arith.constant -1.000000e+30 : f32
    %1 = vector.broadcast %cst : f32 to vector<8x8xf32>
    %2 = arith.maximumf %0, %1 : vector<8x8xf32>
    %c0_1 = arith.constant 0 : index
    %c0_2 = arith.constant 0 : index
    %c0_3 = arith.constant 0 : index
    %3 = vector.load %arg4[%c0_1, %c0_2, %c0_3] : memref<1x1x8xf32, #tpu.memory_space<vmem>>, vector<1x1x8xf32>
    %4 = vector.shape_cast %3 : vector<1x1x8xf32> to vector<1x8xf32>
    %5 = vector.broadcast %4 : vector<1x8xf32> to vector<8x8xf32>
    %6 = arith.addf %2, %5 : vector<8x8xf32>
    %c0_4 = arith.constant 0 : index
    %c0_5 = arith.constant 0 : index
    %c0_6 = arith.constant 0 : index
    %7 = vector.load %arg1[%c0_4, %c0_5, %c0_6] : memref<1x8x96xf32, #tpu.memory_space<vmem>>, vector<1x8x8xf32>
    %8 = vector.shape_cast %7 : vector<1x8x8xf32> to vector<8x8xf32>
    %9 = arith.truncf %8 : vector<8x8xf32> to vector<8x8xbf16>
    %c0_7 = arith.constant 0 : index
    %c0_8 = arith.constant 0 : index
    %c32 = arith.constant 32 : index
    %10 = vector.load %arg2[%c0_7, %c0_8, %c32] : memref<1x8x96xf32, #tpu.memory_space<vmem>>, vector<1x8x8xf32>
    %11 = vector.shape_cast %10 : vector<1x8x8xf32> to vector<8x8xf32>
    %12 = arith.truncf %11 : vector<8x8xf32> to vector<8x8xbf16>
    %c0_9 = arith.constant 0 : index
    %c0_10 = arith.constant 0 : index
    %c64 = arith.constant 64 : index
    %13 = vector.load %arg2[%c0_9, %c0_10, %c64] : memref<1x8x96xf32, #tpu.memory_space<vmem>>, vector<1x8x8xf32>
    %14 = vector.shape_cast %13 : vector<1x8x8xf32> to vector<8x8xf32>
    %15 = arith.truncf %14 : vector<8x8xf32> to vector<8x8xbf16>
    %cst_11 = arith.constant dense<0.000000e+00> : vector<8x8xf32>
    %16 = tpu.matmul %9, %12, %cst_11 {dimension_numbers = #tpu.dot_dimension_numbers<[1], [1], [0], [0], [0, 0, 1, 0], [], []>} : vector<8x8xbf16>, vector<8x8xbf16>, vector<8x8xf32> -> vector<8x8xf32>
    %cst_12 = arith.constant 0.353553385 : f32
    %17 = vector.broadcast %cst_12 : f32 to vector<8x8xf32>
    %18 = arith.mulf %16, %17 : vector<8x8xf32>
    %19 = arith.addf %18, %6 : vector<8x8xf32>
    %cst_13 = arith.constant dense<0xFF800000> : vector<8xf32>
    %20 = vector.multi_reduction <maximumf>, %19, %cst_13 [1] : vector<8x8xf32> to vector<8xf32>
    %21 = vector.shape_cast %20 : vector<8xf32> to vector<8x1xf32>
    %22 = vector.broadcast %21 : vector<8x1xf32> to vector<8x8xf32>
    %23 = arith.subf %19, %22 : vector<8x8xf32>
    %24 = math.exp %23 : vector<8x8xf32>
    %cst_14 = arith.constant dense<0.000000e+00> : vector<8xf32>
    %25 = vector.multi_reduction <add>, %24, %cst_14 [1] : vector<8x8xf32> to vector<8xf32>
    %26 = vector.shape_cast %25 : vector<8xf32> to vector<8x1xf32>
    %27 = tpu.reciprocal %26 {approx = true} : vector<8x1xf32> -> vector<8x1xf32>
    %28 = vector.broadcast %27 : vector<8x1xf32> to vector<8x8xf32>
    %29 = arith.mulf %24, %28 : vector<8x8xf32>
    %30 = arith.truncf %29 : vector<8x8xf32> to vector<8x8xbf16>
    %cst_15 = arith.constant dense<0.000000e+00> : vector<8x8xf32>
    %31 = tpu.matmul %30, %15, %cst_15 {dimension_numbers = #tpu.dot_dimension_numbers<[1], [0], [0], [1], [0, 0, 1, 1], [], []>} : vector<8x8xbf16>, vector<8x8xbf16>, vector<8x8xf32> -> vector<8x8xf32>
    %c0_16 = arith.constant 0 : index
    %c0_17 = arith.constant 0 : index
    %c0_18 = arith.constant 0 : index
    %32 = vector.load %arg5[%c0_16, %c0_17, %c0_18] : memref<1x8x32xf32, #tpu.memory_space<vmem>>, vector<1x8x8xf32>
    %33 = vector.shape_cast %32 : vector<1x8x8xf32> to vector<8x8xf32>
    %34 = vector.shape_cast %31 : vector<8x8xf32> to vector<1x8x8xf32>
    tpu.vector_store %arg5[%c0_16, %c0_17, %c0_18], %34 {strides = array<i32>} : memref<1x8x32xf32, #tpu.memory_space<vmem>>, vector<1x8x8xf32>,
    %c0_19 = arith.constant 0 : index
    %c0_20 = arith.constant 0 : index
    %c8 = arith.constant 8 : index
    %35 = vector.load %arg1[%c0_19, %c0_20, %c8] : memref<1x8x96xf32, #tpu.memory_space<vmem>>, vector<1x8x8xf32>
    %36 = vector.shape_cast %35 : vector<1x8x8xf32> to vector<8x8xf32>
    %37 = arith.truncf %36 : vector<8x8xf32> to vector<8x8xbf16>
    %c0_21 = arith.constant 0 : index
    %c0_22 = arith.constant 0 : index
    %c40 = arith.constant 40 : index
    %38 = vector.load %arg2[%c0_21, %c0_22, %c40] : memref<1x8x96xf32, #tpu.memory_space<vmem>>, vector<1x8x8xf32>
    %39 = vector.shape_cast %38 : vector<1x8x8xf32> to vector<8x8xf32>
    %40 = arith.truncf %39 : vector<8x8xf32> to vector<8x8xbf16>
    %c0_23 = arith.constant 0 : index
    %c0_24 = arith.constant 0 : index
    %c72 = arith.constant 72 : index
    %41 = vector.load %arg2[%c0_23, %c0_24, %c72] : memref<1x8x96xf32, #tpu.memory_space<vmem>>, vector<1x8x8xf32>
    %42 = vector.shape_cast %41 : vector<1x8x8xf32> to vector<8x8xf32>
    %43 = arith.truncf %42 : vector<8x8xf32> to vector<8x8xbf16>
    %cst_25 = arith.constant dense<0.000000e+00> : vector<8x8xf32>
    %44 = tpu.matmul %37, %40, %cst_25 {dimension_numbers = #tpu.dot_dimension_numbers<[1], [1], [0], [0], [0, 0, 1, 0], [], []>} : vector<8x8xbf16>, vector<8x8xbf16>, vector<8x8xf32> -> vector<8x8xf32>
    %cst_26 = arith.constant 0.353553385 : f32
    %45 = vector.broadcast %cst_26 : f32 to vector<8x8xf32>
    %46 = arith.mulf %44, %45 : vector<8x8xf32>
    %47 = arith.addf %46, %6 : vector<8x8xf32>
    %cst_27 = arith.constant dense<0xFF800000> : vector<8xf32>
    %48 = vector.multi_reduction <maximumf>, %47, %cst_27 [1] : vector<8x8xf32> to vector<8xf32>
    %49 = vector.shape_cast %48 : vector<8xf32> to vector<8x1xf32>
    %50 = vector.broadcast %49 : vector<8x1xf32> to vector<8x8xf32>
    %51 = arith.subf %47, %50 : vector<8x8xf32>
    %52 = math.exp %51 : vector<8x8xf32>
    %cst_28 = arith.constant dense<0.000000e+00> : vector<8xf32>
    %53 = vector.multi_reduction <add>, %52, %cst_28 [1] : vector<8x8xf32> to vector<8xf32>
    %54 = vector.shape_cast %53 : vector<8xf32> to vector<8x1xf32>
    %55 = tpu.reciprocal %54 {approx = true} : vector<8x1xf32> -> vector<8x1xf32>
    %56 = vector.broadcast %55 : vector<8x1xf32> to vector<8x8xf32>
    %57 = arith.mulf %52, %56 : vector<8x8xf32>
    %58 = arith.truncf %57 : vector<8x8xf32> to vector<8x8xbf16>
    %cst_29 = arith.constant dense<0.000000e+00> : vector<8x8xf32>
    %59 = tpu.matmul %58, %43, %cst_29 {dimension_numbers = #tpu.dot_dimension_numbers<[1], [0], [0], [1], [0, 0, 1, 1], [], []>} : vector<8x8xbf16>, vector<8x8xbf16>, vector<8x8xf32> -> vector<8x8xf32>
    %c0_30 = arith.constant 0 : index
    %c0_31 = arith.constant 0 : index
    %c8_32 = arith.constant 8 : index
    %60 = vector.load %arg5[%c0_30, %c0_31, %c8_32] : memref<1x8x32xf32, #tpu.memory_space<vmem>>, vector<1x8x8xf32>
    %61 = vector.shape_cast %60 : vector<1x8x8xf32> to vector<8x8xf32>
    %62 = vector.shape_cast %59 : vector<8x8xf32> to vector<1x8x8xf32>
    tpu.vector_store %arg5[%c0_30, %c0_31, %c8_32], %62 {strides = array<i32>} : memref<1x8x32xf32, #tpu.memory_space<vmem>>, vector<1x8x8xf32>,
    %c0_33 = arith.constant 0 : index
    %c0_34 = arith.constant 0 : index
    %c16 = arith.constant 16 : index
    %63 = vector.load %arg1[%c0_33, %c0_34, %c16] : memref<1x8x96xf32, #tpu.memory_space<vmem>>, vector<1x8x8xf32>
    %64 = vector.shape_cast %63 : vector<1x8x8xf32> to vector<8x8xf32>
    %65 = arith.truncf %64 : vector<8x8xf32> to vector<8x8xbf16>
    %c0_35 = arith.constant 0 : index
    %c0_36 = arith.constant 0 : index
    %c48 = arith.constant 48 : index
    %66 = vector.load %arg2[%c0_35, %c0_36, %c48] : memref<1x8x96xf32, #tpu.memory_space<vmem>>, vector<1x8x8xf32>
    %67 = vector.shape_cast %66 : vector<1x8x8xf32> to vector<8x8xf32>
    %68 = arith.truncf %67 : vector<8x8xf32> to vector<8x8xbf16>
    %c0_37 = arith.constant 0 : index
    %c0_38 = arith.constant 0 : index
    %c80 = arith.constant 80 : index
    %69 = vector.load %arg2[%c0_37, %c0_38, %c80] : memref<1x8x96xf32, #tpu.memory_space<vmem>>, vector<1x8x8xf32>
    %70 = vector.shape_cast %69 : vector<1x8x8xf32> to vector<8x8xf32>
    %71 = arith.truncf %70 : vector<8x8xf32> to vector<8x8xbf16>
    %cst_39 = arith.constant dense<0.000000e+00> : vector<8x8xf32>
    %72 = tpu.matmul %65, %68, %cst_39 {dimension_numbers = #tpu.dot_dimension_numbers<[1], [1], [0], [0], [0, 0, 1, 0], [], []>} : vector<8x8xbf16>, vector<8x8xbf16>, vector<8x8xf32> -> vector<8x8xf32>
    %cst_40 = arith.constant 0.353553385 : f32
    %73 = vector.broadcast %cst_40 : f32 to vector<8x8xf32>
    %74 = arith.mulf %72, %73 : vector<8x8xf32>
    %75 = arith.addf %74, %6 : vector<8x8xf32>
    %cst_41 = arith.constant dense<0xFF800000> : vector<8xf32>
    %76 = vector.multi_reduction <maximumf>, %75, %cst_41 [1] : vector<8x8xf32> to vector<8xf32>
    %77 = vector.shape_cast %76 : vector<8xf32> to vector<8x1xf32>
    %78 = vector.broadcast %77 : vector<8x1xf32> to vector<8x8xf32>
    %79 = arith.subf %75, %78 : vector<8x8xf32>
    %80 = math.exp %79 : vector<8x8xf32>
    %cst_42 = arith.constant dense<0.000000e+00> : vector<8xf32>
    %81 = vector.multi_reduction <add>, %80, %cst_42 [1] : vector<8x8xf32> to vector<8xf32>
    %82 = vector.shape_cast %81 : vector<8xf32> to vector<8x1xf32>
    %83 = tpu.reciprocal %82 {approx = true} : vector<8x1xf32> -> vector<8x1xf32>
    %84 = vector.broadcast %83 : vector<8x1xf32> to vector<8x8xf32>
    %85 = arith.mulf %80, %84 : vector<8x8xf32>
    %86 = arith.truncf %85 : vector<8x8xf32> to vector<8x8xbf16>
    %cst_43 = arith.constant dense<0.000000e+00> : vector<8x8xf32>
    %87 = tpu.matmul %86, %71, %cst_43 {dimension_numbers = #tpu.dot_dimension_numbers<[1], [0], [0], [1], [0, 0, 1, 1], [], []>} : vector<8x8xbf16>, vector<8x8xbf16>, vector<8x8xf32> -> vector<8x8xf32>
    %c0_44 = arith.constant 0 : index
    %c0_45 = arith.constant 0 : index
    %c16_46 = arith.constant 16 : index
    %88 = vector.load %arg5[%c0_44, %c0_45, %c16_46] : memref<1x8x32xf32, #tpu.memory_space<vmem>>, vector<1x8x8xf32>
    %89 = vector.shape_cast %88 : vector<1x8x8xf32> to vector<8x8xf32>
    %90 = vector.shape_cast %87 : vector<8x8xf32> to vector<1x8x8xf32>
    tpu.vector_store %arg5[%c0_44, %c0_45, %c16_46], %90 {strides = array<i32>} : memref<1x8x32xf32, #tpu.memory_space<vmem>>, vector<1x8x8xf32>,
    %c0_47 = arith.constant 0 : index
    %c0_48 = arith.constant 0 : index
    %c24 = arith.constant 24 : index
    %91 = vector.load %arg1[%c0_47, %c0_48, %c24] : memref<1x8x96xf32, #tpu.memory_space<vmem>>, vector<1x8x8xf32>
    %92 = vector.shape_cast %91 : vector<1x8x8xf32> to vector<8x8xf32>
    %93 = arith.truncf %92 : vector<8x8xf32> to vector<8x8xbf16>
    %c0_49 = arith.constant 0 : index
    %c0_50 = arith.constant 0 : index
    %c56 = arith.constant 56 : index
    %94 = vector.load %arg2[%c0_49, %c0_50, %c56] : memref<1x8x96xf32, #tpu.memory_space<vmem>>, vector<1x8x8xf32>
    %95 = vector.shape_cast %94 : vector<1x8x8xf32> to vector<8x8xf32>
    %96 = arith.truncf %95 : vector<8x8xf32> to vector<8x8xbf16>
    %c0_51 = arith.constant 0 : index
    %c0_52 = arith.constant 0 : index
    %c88 = arith.constant 88 : index
    %97 = vector.load %arg2[%c0_51, %c0_52, %c88] : memref<1x8x96xf32, #tpu.memory_space<vmem>>, vector<1x8x8xf32>
    %98 = vector.shape_cast %97 : vector<1x8x8xf32> to vector<8x8xf32>
    %99 = arith.truncf %98 : vector<8x8xf32> to vector<8x8xbf16>
    %cst_53 = arith.constant dense<0.000000e+00> : vector<8x8xf32>
    %100 = tpu.matmul %93, %96, %cst_53 {dimension_numbers = #tpu.dot_dimension_numbers<[1], [1], [0], [0], [0, 0, 1, 0], [], []>} : vector<8x8xbf16>, vector<8x8xbf16>, vector<8x8xf32> -> vector<8x8xf32>
    %cst_54 = arith.constant 0.353553385 : f32
    %101 = vector.broadcast %cst_54 : f32 to vector<8x8xf32>
    %102 = arith.mulf %100, %101 : vector<8x8xf32>
    %103 = arith.addf %102, %6 : vector<8x8xf32>
    %cst_55 = arith.constant dense<0xFF800000> : vector<8xf32>
    %104 = vector.multi_reduction <maximumf>, %103, %cst_55 [1] : vector<8x8xf32> to vector<8xf32>
    %105 = vector.shape_cast %104 : vector<8xf32> to vector<8x1xf32>
    %106 = vector.broadcast %105 : vector<8x1xf32> to vector<8x8xf32>
    %107 = arith.subf %103, %106 : vector<8x8xf32>
    %108 = math.exp %107 : vector<8x8xf32>
    %cst_56 = arith.constant dense<0.000000e+00> : vector<8xf32>
    %109 = vector.multi_reduction <add>, %108, %cst_56 [1] : vector<8x8xf32> to vector<8xf32>
    %110 = vector.shape_cast %109 : vector<8xf32> to vector<8x1xf32>
    %111 = tpu.reciprocal %110 {approx = true} : vector<8x1xf32> -> vector<8x1xf32>
    %112 = vector.broadcast %111 : vector<8x1xf32> to vector<8x8xf32>
    %113 = arith.mulf %108, %112 : vector<8x8xf32>
    %114 = arith.truncf %113 : vector<8x8xf32> to vector<8x8xbf16>
    %cst_57 = arith.constant dense<0.000000e+00> : vector<8x8xf32>
    %115 = tpu.matmul %114, %99, %cst_57 {dimension_numbers = #tpu.dot_dimension_numbers<[1], [0], [0], [1], [0, 0, 1, 1], [], []>} : vector<8x8xbf16>, vector<8x8xbf16>, vector<8x8xf32> -> vector<8x8xf32>
    %c0_58 = arith.constant 0 : index
    %c0_59 = arith.constant 0 : index
    %c24_60 = arith.constant 24 : index
    %116 = vector.load %arg5[%c0_58, %c0_59, %c24_60] : memref<1x8x32xf32, #tpu.memory_space<vmem>>, vector<1x8x8xf32>
    %117 = vector.shape_cast %116 : vector<1x8x8xf32> to vector<8x8xf32>
    %118 = vector.shape_cast %115 : vector<8x8xf32> to vector<1x8x8xf32>
    tpu.vector_store %arg5[%c0_58, %c0_59, %c24_60], %118 {strides = array<i32>} : memref<1x8x32xf32, #tpu.memory_space<vmem>>, vector<1x8x8xf32>,
    return
  }
  func.func @transform_0(%arg0: i32) -> (i32, i32, i32) {
    %c0_i32 = arith.constant 0 : i32
    %c0_i32_0 = arith.constant 0 : i32
    %c0_i32_1 = arith.constant 0 : i32
    return %arg0, %c0_i32, %c0_i32_0 : i32, i32, i32
  }
  func.func @transform_1(%arg0: i32) -> (i32, i32, i32) {
    %c0_i32 = arith.constant 0 : i32
    %c0_i32_0 = arith.constant 0 : i32
    %c0_i32_1 = arith.constant 0 : i32
    return %arg0, %c0_i32, %c0_i32_0 : i32, i32, i32
  }
  func.func @transform_2(%arg0: i32) -> (i32, i32) {
    %c0_i32 = arith.constant 0 : i32
    %c0_i32_0 = arith.constant 0 : i32
    %c0_i32_1 = arith.constant 0 : i32
    return %c0_i32, %c0_i32_0 : i32, i32
  }
  func.func @transform_3(%arg0: i32) -> (i32, i32, i32) {
    %c0_i32 = arith.constant 0 : i32
    %c0_i32_0 = arith.constant 0 : i32
    %c0_i32_1 = arith.constant 0 : i32
    return %arg0, %c0_i32, %c0_i32_0 : i32, i32, i32
  }
  func.func @transform_4(%arg0: i32) -> (i32, i32, i32) {
    %c0_i32 = arith.constant 0 : i32
    %c0_i32_0 = arith.constant 0 : i32
    %c0_i32_1 = arith.constant 0 : i32
    return %arg0, %c0_i32, %c0_i32_0 : i32, i32, i32
  }
}

module attributes {stable_mosaic.version = 11 : i64} {
  func.func @_linear_kernel(%arg0: i32, %arg1: i32, %arg2: i32, %arg3: memref<16x32xf32, #tpu.memory_space<vmem>>, %arg4: memref<96x32xbf16, #tpu.memory_space<vmem>>, %arg5: memref<1x96xf32, #tpu.memory_space<vmem>>, %arg6: memref<16x96xf32, #tpu.memory_space<vmem>>, %arg7: memref<16x96xf32, #tpu.memory_space<vmem>>) attributes {dimension_semantics = [#tpu.dimension_semantics<parallel>, #tpu.dimension_semantics<parallel>, #tpu.dimension_semantics<arbitrary>], iteration_bounds = array<i64: 1, 1, 1>, scalar_prefetch = 0 : i64, scratch_operands = 1 : i64, tpu.core_type = #tpu.core_type<tc>, window_params = [{transform_indices = @transform_0, window_bounds = array<i64: 16, 32>}, {transform_indices = @transform_1, window_bounds = array<i64: 96, 32>}, {transform_indices = @transform_2, window_bounds = array<i64: 1, 96>}, {transform_indices = @transform_3, window_bounds = array<i64: 16, 96>}]} {
    %c0_i32 = arith.constant 0 : i32
    %0 = arith.cmpi eq, %arg2, %c0_i32 : i32
    %1 = arith.extui %0 : i1 to i32
    %c0_i32_0 = arith.constant 0 : i32
    %2 = arith.cmpi ne, %1, %c0_i32_0 : i32
    scf.if %2 {
      %cst_10 = arith.constant 0.000000e+00 : f32
      %13 = vector.broadcast %cst_10 : f32 to vector<16x96xf32>
      %c0_11 = arith.constant 0 : index
      %c0_12 = arith.constant 0 : index
      %14 = vector.load %arg7[%c0_11, %c0_12] : memref<16x96xf32, #tpu.memory_space<vmem>>, vector<16x96xf32>
      tpu.vector_store %arg7[%c0_11, %c0_12], %13 {strides = array<i32>} : memref<16x96xf32, #tpu.memory_space<vmem>>, vector<16x96xf32>,
    } else {
    }
    %c0 = arith.constant 0 : index
    %c0_1 = arith.constant 0 : index
    %3 = vector.load %arg3[%c0, %c0_1] : memref<16x32xf32, #tpu.memory_space<vmem>>, vector<16x32xf32>
    %4 = arith.truncf %3 : vector<16x32xf32> to vector<16x32xbf16>
    %c0_2 = arith.constant 0 : index
    %c0_3 = arith.constant 0 : index
    %5 = vector.load %arg4[%c0_2, %c0_3] : memref<96x32xbf16, #tpu.memory_space<vmem>>, vector<96x32xbf16>
    %c0_4 = arith.constant 0 : index
    %c0_5 = arith.constant 0 : index
    %6 = vector.load %arg7[%c0_4, %c0_5] : memref<16x96xf32, #tpu.memory_space<vmem>>, vector<16x96xf32>
    %cst = arith.constant dense<0.000000e+00> : vector<16x96xf32>
    %7 = tpu.matmul %4, %5, %cst {dimension_numbers = #tpu.dot_dimension_numbers<[1], [1], [0], [0], [0, 0, 1, 0], [], []>} : vector<16x32xbf16>, vector<96x32xbf16>, vector<16x96xf32> -> vector<16x96xf32>
    %8 = arith.addf %6, %7 : vector<16x96xf32>
    %c0_6 = arith.constant 0 : index
    %c0_7 = arith.constant 0 : index
    %9 = vector.load %arg7[%c0_6, %c0_7] : memref<16x96xf32, #tpu.memory_space<vmem>>, vector<16x96xf32>
    tpu.vector_store %arg7[%c0_6, %c0_7], %8 {strides = array<i32>} : memref<16x96xf32, #tpu.memory_space<vmem>>, vector<16x96xf32>,
    %c0_i32_8 = arith.constant 0 : i32
    %10 = arith.cmpi eq, %arg2, %c0_i32_8 : i32
    %11 = arith.extui %10 : i1 to i32
    %c0_i32_9 = arith.constant 0 : i32
    %12 = arith.cmpi ne, %11, %c0_i32_9 : i32
    scf.if %12 {
      %c0_10 = arith.constant 0 : index
      %c0_11 = arith.constant 0 : index
      %13 = vector.load %arg7[%c0_10, %c0_11] : memref<16x96xf32, #tpu.memory_space<vmem>>, vector<16x96xf32>
      %c0_12 = arith.constant 0 : index
      %c0_13 = arith.constant 0 : index
      %14 = vector.load %arg5[%c0_12, %c0_13] : memref<1x96xf32, #tpu.memory_space<vmem>>, vector<1x96xf32>
      %15 = vector.broadcast %14 : vector<1x96xf32> to vector<16x96xf32>
      %16 = arith.addf %13, %15 : vector<16x96xf32>
      %c0_14 = arith.constant 0 : index
      %c0_15 = arith.constant 0 : index
      %17 = vector.load %arg6[%c0_14, %c0_15] : memref<16x96xf32, #tpu.memory_space<vmem>>, vector<16x96xf32>
      tpu.vector_store %arg6[%c0_14, %c0_15], %16 {strides = array<i32>} : memref<16x96xf32, #tpu.memory_space<vmem>>, vector<16x96xf32>,
    } else {
    }
    return
  }
  func.func @transform_0(%arg0: i32, %arg1: i32, %arg2: i32) -> (i32, i32) {
    %c0_i32 = arith.constant 0 : i32
    return %arg0, %arg2 : i32, i32
  }
  func.func @transform_1(%arg0: i32, %arg1: i32, %arg2: i32) -> (i32, i32) {
    %c0_i32 = arith.constant 0 : i32
    return %arg1, %arg2 : i32, i32
  }
  func.func @transform_2(%arg0: i32, %arg1: i32, %arg2: i32) -> (i32, i32) {
    %c0_i32 = arith.constant 0 : i32
    %c0_i32_0 = arith.constant 0 : i32
    return %c0_i32, %arg1 : i32, i32
  }
  func.func @transform_3(%arg0: i32, %arg1: i32, %arg2: i32) -> (i32, i32) {
    %c0_i32 = arith.constant 0 : i32
    return %arg0, %arg1 : i32, i32
  }
}

module attributes {stable_mosaic.version = 11 : i64} {
  func.func @_ffn_kernel(%arg0: i32, %arg1: i32, %arg2: memref<16x32xf32, #tpu.memory_space<vmem>>, %arg3: memref<64x32xbf16, #tpu.memory_space<vmem>>, %arg4: memref<1x64xf32, #tpu.memory_space<vmem>>, %arg5: memref<32x64xbf16, #tpu.memory_space<vmem>>, %arg6: memref<1x32xf32, #tpu.memory_space<vmem>>, %arg7: memref<16x32xf32, #tpu.memory_space<vmem>>, %arg8: memref<16x32xf32, #tpu.memory_space<vmem>>) attributes {dimension_semantics = [#tpu.dimension_semantics<parallel>, #tpu.dimension_semantics<arbitrary>], iteration_bounds = array<i64: 1, 1>, scalar_prefetch = 0 : i64, scratch_operands = 1 : i64, tpu.core_type = #tpu.core_type<tc>, window_params = [{transform_indices = @transform_0, window_bounds = array<i64: 16, 32>}, {transform_indices = @transform_1, window_bounds = array<i64: 64, 32>}, {transform_indices = @transform_2, window_bounds = array<i64: 1, 64>}, {transform_indices = @transform_3, window_bounds = array<i64: 32, 64>}, {pipeline_mode = #tpu.pipeline_mode<synchronous>, transform_indices = @transform_4, window_bounds = array<i64: 1, 32>}, {transform_indices = @transform_5, window_bounds = array<i64: 16, 32>}]} {
    %c0_i32 = arith.constant 0 : i32
    %0 = arith.cmpi eq, %arg1, %c0_i32 : i32
    %1 = arith.extui %0 : i1 to i32
    %c0_i32_0 = arith.constant 0 : i32
    %2 = arith.cmpi ne, %1, %c0_i32_0 : i32
    scf.if %2 {
      %cst_16 = arith.constant 0.000000e+00 : f32
      %21 = vector.broadcast %cst_16 : f32 to vector<16x32xf32>
      %c0_17 = arith.constant 0 : index
      %c0_18 = arith.constant 0 : index
      %22 = vector.load %arg8[%c0_17, %c0_18] : memref<16x32xf32, #tpu.memory_space<vmem>>, vector<16x32xf32>
      tpu.vector_store %arg8[%c0_17, %c0_18], %21 {strides = array<i32>} : memref<16x32xf32, #tpu.memory_space<vmem>>, vector<16x32xf32>,
    } else {
    }
    %c0 = arith.constant 0 : index
    %c0_1 = arith.constant 0 : index
    %3 = vector.load %arg2[%c0, %c0_1] : memref<16x32xf32, #tpu.memory_space<vmem>>, vector<16x32xf32>
    %4 = arith.truncf %3 : vector<16x32xf32> to vector<16x32xbf16>
    %c0_2 = arith.constant 0 : index
    %c0_3 = arith.constant 0 : index
    %5 = vector.load %arg3[%c0_2, %c0_3] : memref<64x32xbf16, #tpu.memory_space<vmem>>, vector<64x32xbf16>
    %cst = arith.constant dense<0.000000e+00> : vector<16x64xf32>
    %6 = tpu.matmul %4, %5, %cst {dimension_numbers = #tpu.dot_dimension_numbers<[1], [1], [0], [0], [0, 0, 1, 0], [], []>} : vector<16x32xbf16>, vector<64x32xbf16>, vector<16x64xf32> -> vector<16x64xf32>
    %c0_4 = arith.constant 0 : index
    %c0_5 = arith.constant 0 : index
    %7 = vector.load %arg4[%c0_4, %c0_5] : memref<1x64xf32, #tpu.memory_space<vmem>>, vector<1x64xf32>
    %8 = vector.broadcast %7 : vector<1x64xf32> to vector<16x64xf32>
    %9 = arith.addf %6, %8 : vector<16x64xf32>
    %cst_6 = arith.constant 0.000000e+00 : f32
    %10 = vector.broadcast %cst_6 : f32 to vector<16x64xf32>
    %11 = arith.maximumf %9, %10 : vector<16x64xf32>
    %c0_7 = arith.constant 0 : index
    %c0_8 = arith.constant 0 : index
    %12 = vector.load %arg5[%c0_7, %c0_8] : memref<32x64xbf16, #tpu.memory_space<vmem>>, vector<32x64xbf16>
    %c0_9 = arith.constant 0 : index
    %c0_10 = arith.constant 0 : index
    %13 = vector.load %arg8[%c0_9, %c0_10] : memref<16x32xf32, #tpu.memory_space<vmem>>, vector<16x32xf32>
    %14 = arith.truncf %11 : vector<16x64xf32> to vector<16x64xbf16>
    %cst_11 = arith.constant dense<0.000000e+00> : vector<16x32xf32>
    %15 = tpu.matmul %14, %12, %cst_11 {dimension_numbers = #tpu.dot_dimension_numbers<[1], [1], [0], [0], [0, 0, 1, 0], [], []>} : vector<16x64xbf16>, vector<32x64xbf16>, vector<16x32xf32> -> vector<16x32xf32>
    %16 = arith.addf %13, %15 : vector<16x32xf32>
    %c0_12 = arith.constant 0 : index
    %c0_13 = arith.constant 0 : index
    %17 = vector.load %arg8[%c0_12, %c0_13] : memref<16x32xf32, #tpu.memory_space<vmem>>, vector<16x32xf32>
    tpu.vector_store %arg8[%c0_12, %c0_13], %16 {strides = array<i32>} : memref<16x32xf32, #tpu.memory_space<vmem>>, vector<16x32xf32>,
    %c0_i32_14 = arith.constant 0 : i32
    %18 = arith.cmpi eq, %arg1, %c0_i32_14 : i32
    %19 = arith.extui %18 : i1 to i32
    %c0_i32_15 = arith.constant 0 : i32
    %20 = arith.cmpi ne, %19, %c0_i32_15 : i32
    scf.if %20 {
      %c0_16 = arith.constant 0 : index
      %c0_17 = arith.constant 0 : index
      %21 = vector.load %arg8[%c0_16, %c0_17] : memref<16x32xf32, #tpu.memory_space<vmem>>, vector<16x32xf32>
      %c0_18 = arith.constant 0 : index
      %c0_19 = arith.constant 0 : index
      %22 = vector.load %arg6[%c0_18, %c0_19] : memref<1x32xf32, #tpu.memory_space<vmem>>, vector<1x32xf32>
      %23 = vector.broadcast %22 : vector<1x32xf32> to vector<16x32xf32>
      %24 = arith.addf %21, %23 : vector<16x32xf32>
      %c0_20 = arith.constant 0 : index
      %c0_21 = arith.constant 0 : index
      %25 = vector.load %arg7[%c0_20, %c0_21] : memref<16x32xf32, #tpu.memory_space<vmem>>, vector<16x32xf32>
      tpu.vector_store %arg7[%c0_20, %c0_21], %24 {strides = array<i32>} : memref<16x32xf32, #tpu.memory_space<vmem>>, vector<16x32xf32>,
    } else {
    }
    return
  }
  func.func @transform_0(%arg0: i32, %arg1: i32) -> (i32, i32) {
    %c0_i32 = arith.constant 0 : i32
    %c0_i32_0 = arith.constant 0 : i32
    return %arg0, %c0_i32 : i32, i32
  }
  func.func @transform_1(%arg0: i32, %arg1: i32) -> (i32, i32) {
    %c0_i32 = arith.constant 0 : i32
    %c0_i32_0 = arith.constant 0 : i32
    return %arg1, %c0_i32 : i32, i32
  }
  func.func @transform_2(%arg0: i32, %arg1: i32) -> (i32, i32) {
    %c0_i32 = arith.constant 0 : i32
    %c0_i32_0 = arith.constant 0 : i32
    return %c0_i32, %arg1 : i32, i32
  }
  func.func @transform_3(%arg0: i32, %arg1: i32) -> (i32, i32) {
    %c0_i32 = arith.constant 0 : i32
    %c0_i32_0 = arith.constant 0 : i32
    return %c0_i32, %arg1 : i32, i32
  }
  func.func @transform_4(%arg0: i32, %arg1: i32) -> (i32, i32) {
    %c0_i32 = arith.constant 0 : i32
    %c0_i32_0 = arith.constant 0 : i32
    %c0_i32_1 = arith.constant 0 : i32
    return %c0_i32, %c0_i32_0 : i32, i32
  }
  func.func @transform_5(%arg0: i32, %arg1: i32) -> (i32, i32) {
    %c0_i32 = arith.constant 0 : i32
    %c0_i32_0 = arith.constant 0 : i32
    return %arg0, %c0_i32 : i32, i32
  }
}

module attributes {stable_mosaic.version = 11 : i64} {
  func.func @_ln_kernel(%arg0: i32, %arg1: memref<16x32xf32, #tpu.memory_space<vmem>>, %arg2: memref<1x32xf32, #tpu.memory_space<vmem>>, %arg3: memref<1x32xf32, #tpu.memory_space<vmem>>, %arg4: memref<16x32xf32, #tpu.memory_space<vmem>>) attributes {dimension_semantics = [#tpu.dimension_semantics<parallel>], iteration_bounds = array<i64: 1>, scalar_prefetch = 0 : i64, scratch_operands = 0 : i64, tpu.core_type = #tpu.core_type<tc>, window_params = [{transform_indices = @transform_0, window_bounds = array<i64: 16, 32>}, {pipeline_mode = #tpu.pipeline_mode<synchronous>, transform_indices = @transform_1, window_bounds = array<i64: 1, 32>}, {pipeline_mode = #tpu.pipeline_mode<synchronous>, transform_indices = @transform_2, window_bounds = array<i64: 1, 32>}, {transform_indices = @transform_3, window_bounds = array<i64: 16, 32>}]} {
    %c0 = arith.constant 0 : index
    %c0_0 = arith.constant 0 : index
    %0 = vector.load %arg1[%c0, %c0_0] : memref<16x32xf32, #tpu.memory_space<vmem>>, vector<16x32xf32>
    %c0_1 = arith.constant 0 : index
    %c0_2 = arith.constant 0 : index
    %1 = vector.load %arg2[%c0_1, %c0_2] : memref<1x32xf32, #tpu.memory_space<vmem>>, vector<1x32xf32>
    %c0_3 = arith.constant 0 : index
    %c0_4 = arith.constant 0 : index
    %2 = vector.load %arg3[%c0_3, %c0_4] : memref<1x32xf32, #tpu.memory_space<vmem>>, vector<1x32xf32>
    %cst = arith.constant dense<0.000000e+00> : vector<16xf32>
    %3 = vector.multi_reduction <add>, %0, %cst [1] : vector<16x32xf32> to vector<16xf32>
    %4 = vector.shape_cast %3 : vector<16xf32> to vector<16x1xf32>
    %cst_5 = arith.constant 3.200000e+01 : f32
    %5 = vector.broadcast %cst_5 : f32 to vector<16x1xf32>
    %6 = arith.divf %4, %5 : vector<16x1xf32>
    %7 = vector.broadcast %6 : vector<16x1xf32> to vector<16x32xf32>
    %8 = arith.subf %0, %7 : vector<16x32xf32>
    %9 = arith.mulf %8, %8 : vector<16x32xf32>
    %cst_6 = arith.constant dense<0.000000e+00> : vector<16xf32>
    %10 = vector.multi_reduction <add>, %9, %cst_6 [1] : vector<16x32xf32> to vector<16xf32>
    %11 = vector.shape_cast %10 : vector<16xf32> to vector<16x1xf32>
    %cst_7 = arith.constant 3.200000e+01 : f32
    %12 = vector.broadcast %cst_7 : f32 to vector<16x1xf32>
    %13 = arith.divf %11, %12 : vector<16x1xf32>
    %cst_8 = arith.constant 9.99999974E-6 : f32
    %14 = vector.broadcast %cst_8 : f32 to vector<16x1xf32>
    %15 = arith.addf %13, %14 : vector<16x1xf32>
    %16 = math.rsqrt %15 : vector<16x1xf32>
    %17 = vector.broadcast %16 : vector<16x1xf32> to vector<16x32xf32>
    %18 = arith.mulf %8, %17 : vector<16x32xf32>
    %19 = vector.broadcast %1 : vector<1x32xf32> to vector<16x32xf32>
    %20 = arith.mulf %18, %19 : vector<16x32xf32>
    %21 = vector.broadcast %2 : vector<1x32xf32> to vector<16x32xf32>
    %22 = arith.addf %20, %21 : vector<16x32xf32>
    %c0_9 = arith.constant 0 : index
    %c0_10 = arith.constant 0 : index
    %23 = vector.load %arg4[%c0_9, %c0_10] : memref<16x32xf32, #tpu.memory_space<vmem>>, vector<16x32xf32>
    tpu.vector_store %arg4[%c0_9, %c0_10], %22 {strides = array<i32>} : memref<16x32xf32, #tpu.memory_space<vmem>>, vector<16x32xf32>,
    return
  }
  func.func @transform_0(%arg0: i32) -> (i32, i32) {
    %c0_i32 = arith.constant 0 : i32
    %c0_i32_0 = arith.constant 0 : i32
    return %arg0, %c0_i32 : i32, i32
  }
  func.func @transform_1(%arg0: i32) -> (i32, i32) {
    %c0_i32 = arith.constant 0 : i32
    %c0_i32_0 = arith.constant 0 : i32
    %c0_i32_1 = arith.constant 0 : i32
    return %c0_i32, %c0_i32_0 : i32, i32
  }
  func.func @transform_2(%arg0: i32) -> (i32, i32) {
    %c0_i32 = arith.constant 0 : i32
    %c0_i32_0 = arith.constant 0 : i32
    %c0_i32_1 = arith.constant 0 : i32
    return %c0_i32, %c0_i32_0 : i32, i32
  }
  func.func @transform_3(%arg0: i32) -> (i32, i32) {
    %c0_i32 = arith.constant 0 : i32
    %c0_i32_0 = arith.constant 0 : i32
    return %arg0, %c0_i32 : i32, i32
  }
}

module attributes {stable_mosaic.version = 11 : i64} {
  func.func @_linear_kernel(%arg0: i32, %arg1: i32, %arg2: i32, %arg3: memref<16x32xf32, #tpu.memory_space<vmem>>, %arg4: memref<64x32xbf16, #tpu.memory_space<vmem>>, %arg5: memref<1x64xf32, #tpu.memory_space<vmem>>, %arg6: memref<16x64xf32, #tpu.memory_space<vmem>>, %arg7: memref<16x64xf32, #tpu.memory_space<vmem>>) attributes {dimension_semantics = [#tpu.dimension_semantics<parallel>, #tpu.dimension_semantics<parallel>, #tpu.dimension_semantics<arbitrary>], iteration_bounds = array<i64: 1, 1, 1>, scalar_prefetch = 0 : i64, scratch_operands = 1 : i64, tpu.core_type = #tpu.core_type<tc>, window_params = [{transform_indices = @transform_0, window_bounds = array<i64: 16, 32>}, {transform_indices = @transform_1, window_bounds = array<i64: 64, 32>}, {transform_indices = @transform_2, window_bounds = array<i64: 1, 64>}, {transform_indices = @transform_3, window_bounds = array<i64: 16, 64>}]} {
    %c0_i32 = arith.constant 0 : i32
    %0 = arith.cmpi eq, %arg2, %c0_i32 : i32
    %1 = arith.extui %0 : i1 to i32
    %c0_i32_0 = arith.constant 0 : i32
    %2 = arith.cmpi ne, %1, %c0_i32_0 : i32
    scf.if %2 {
      %cst_10 = arith.constant 0.000000e+00 : f32
      %13 = vector.broadcast %cst_10 : f32 to vector<16x64xf32>
      %c0_11 = arith.constant 0 : index
      %c0_12 = arith.constant 0 : index
      %14 = vector.load %arg7[%c0_11, %c0_12] : memref<16x64xf32, #tpu.memory_space<vmem>>, vector<16x64xf32>
      tpu.vector_store %arg7[%c0_11, %c0_12], %13 {strides = array<i32>} : memref<16x64xf32, #tpu.memory_space<vmem>>, vector<16x64xf32>,
    } else {
    }
    %c0 = arith.constant 0 : index
    %c0_1 = arith.constant 0 : index
    %3 = vector.load %arg3[%c0, %c0_1] : memref<16x32xf32, #tpu.memory_space<vmem>>, vector<16x32xf32>
    %4 = arith.truncf %3 : vector<16x32xf32> to vector<16x32xbf16>
    %c0_2 = arith.constant 0 : index
    %c0_3 = arith.constant 0 : index
    %5 = vector.load %arg4[%c0_2, %c0_3] : memref<64x32xbf16, #tpu.memory_space<vmem>>, vector<64x32xbf16>
    %c0_4 = arith.constant 0 : index
    %c0_5 = arith.constant 0 : index
    %6 = vector.load %arg7[%c0_4, %c0_5] : memref<16x64xf32, #tpu.memory_space<vmem>>, vector<16x64xf32>
    %cst = arith.constant dense<0.000000e+00> : vector<16x64xf32>
    %7 = tpu.matmul %4, %5, %cst {dimension_numbers = #tpu.dot_dimension_numbers<[1], [1], [0], [0], [0, 0, 1, 0], [], []>} : vector<16x32xbf16>, vector<64x32xbf16>, vector<16x64xf32> -> vector<16x64xf32>
    %8 = arith.addf %6, %7 : vector<16x64xf32>
    %c0_6 = arith.constant 0 : index
    %c0_7 = arith.constant 0 : index
    %9 = vector.load %arg7[%c0_6, %c0_7] : memref<16x64xf32, #tpu.memory_space<vmem>>, vector<16x64xf32>
    tpu.vector_store %arg7[%c0_6, %c0_7], %8 {strides = array<i32>} : memref<16x64xf32, #tpu.memory_space<vmem>>, vector<16x64xf32>,
    %c0_i32_8 = arith.constant 0 : i32
    %10 = arith.cmpi eq, %arg2, %c0_i32_8 : i32
    %11 = arith.extui %10 : i1 to i32
    %c0_i32_9 = arith.constant 0 : i32
    %12 = arith.cmpi ne, %11, %c0_i32_9 : i32
    scf.if %12 {
      %c0_10 = arith.constant 0 : index
      %c0_11 = arith.constant 0 : index
      %13 = vector.load %arg7[%c0_10, %c0_11] : memref<16x64xf32, #tpu.memory_space<vmem>>, vector<16x64xf32>
      %c0_12 = arith.constant 0 : index
      %c0_13 = arith.constant 0 : index
      %14 = vector.load %arg5[%c0_12, %c0_13] : memref<1x64xf32, #tpu.memory_space<vmem>>, vector<1x64xf32>
      %15 = vector.broadcast %14 : vector<1x64xf32> to vector<16x64xf32>
      %16 = arith.addf %13, %15 : vector<16x64xf32>
      %c0_14 = arith.constant 0 : index
      %c0_15 = arith.constant 0 : index
      %17 = vector.load %arg6[%c0_14, %c0_15] : memref<16x64xf32, #tpu.memory_space<vmem>>, vector<16x64xf32>
      tpu.vector_store %arg6[%c0_14, %c0_15], %16 {strides = array<i32>} : memref<16x64xf32, #tpu.memory_space<vmem>>, vector<16x64xf32>,
    } else {
    }
    return
  }
  func.func @transform_0(%arg0: i32, %arg1: i32, %arg2: i32) -> (i32, i32) {
    %c0_i32 = arith.constant 0 : i32
    return %arg0, %arg2 : i32, i32
  }
  func.func @transform_1(%arg0: i32, %arg1: i32, %arg2: i32) -> (i32, i32) {
    %c0_i32 = arith.constant 0 : i32
    return %arg1, %arg2 : i32, i32
  }
  func.func @transform_2(%arg0: i32, %arg1: i32, %arg2: i32) -> (i32, i32) {
    %c0_i32 = arith.constant 0 : i32
    %c0_i32_0 = arith.constant 0 : i32
    return %c0_i32, %arg1 : i32, i32
  }
  func.func @transform_3(%arg0: i32, %arg1: i32, %arg2: i32) -> (i32, i32) {
    %c0_i32 = arith.constant 0 : i32
    return %arg0, %arg1 : i32, i32
  }
}

module attributes {stable_mosaic.version = 11 : i64} {
  func.func @_mha_kernel(%arg0: i32, %arg1: memref<1x7x32xf32, #tpu.memory_space<vmem>>, %arg2: memref<1x8x64xf32, #tpu.memory_space<vmem>>, %arg3: memref<7x8xf32, #tpu.memory_space<vmem>>, %arg4: memref<1x1x8xf32, #tpu.memory_space<vmem>>, %arg5: memref<1x7x32xf32, #tpu.memory_space<vmem>>) attributes {dimension_semantics = [#tpu.dimension_semantics<parallel>], iteration_bounds = array<i64: 2>, scalar_prefetch = 0 : i64, scratch_operands = 0 : i64, tpu.core_type = #tpu.core_type<tc>, window_params = [{transform_indices = @transform_0, window_bounds = array<i64: 1, 7, 32>}, {transform_indices = @transform_1, window_bounds = array<i64: 1, 8, 64>}, {pipeline_mode = #tpu.pipeline_mode<synchronous>, transform_indices = @transform_2, window_bounds = array<i64: 7, 8>}, {transform_indices = @transform_3, window_bounds = array<i64: 1, 1, 8>}, {transform_indices = @transform_4, window_bounds = array<i64: 1, 7, 32>}]} {
    %c0 = arith.constant 0 : index
    %c0_0 = arith.constant 0 : index
    %0 = vector.load %arg3[%c0, %c0_0] : memref<7x8xf32, #tpu.memory_space<vmem>>, vector<7x8xf32>
    %cst = arith.constant -1.000000e+30 : f32
    %1 = vector.broadcast %cst : f32 to vector<7x8xf32>
    %2 = arith.maximumf %0, %1 : vector<7x8xf32>
    %c0_1 = arith.constant 0 : index
    %c0_2 = arith.constant 0 : index
    %c0_3 = arith.constant 0 : index
    %3 = vector.load %arg4[%c0_1, %c0_2, %c0_3] : memref<1x1x8xf32, #tpu.memory_space<vmem>>, vector<1x1x8xf32>
    %4 = vector.shape_cast %3 : vector<1x1x8xf32> to vector<1x8xf32>
    %5 = vector.broadcast %4 : vector<1x8xf32> to vector<7x8xf32>
    %6 = arith.addf %2, %5 : vector<7x8xf32>
    %c0_4 = arith.constant 0 : index
    %c0_5 = arith.constant 0 : index
    %c0_6 = arith.constant 0 : index
    %7 = vector.load %arg1[%c0_4, %c0_5, %c0_6] : memref<1x7x32xf32, #tpu.memory_space<vmem>>, vector<1x7x8xf32>
    %8 = vector.shape_cast %7 : vector<1x7x8xf32> to vector<7x8xf32>
    %9 = arith.truncf %8 : vector<7x8xf32> to vector<7x8xbf16>
    %c0_7 = arith.constant 0 : index
    %c0_8 = arith.constant 0 : index
    %c0_9 = arith.constant 0 : index
    %10 = vector.load %arg2[%c0_7, %c0_8, %c0_9] : memref<1x8x64xf32, #tpu.memory_space<vmem>>, vector<1x8x8xf32>
    %11 = vector.shape_cast %10 : vector<1x8x8xf32> to vector<8x8xf32>
    %12 = arith.truncf %11 : vector<8x8xf32> to vector<8x8xbf16>
    %c0_10 = arith.constant 0 : index
    %c0_11 = arith.constant 0 : index
    %c32 = arith.constant 32 : index
    %13 = vector.load %arg2[%c0_10, %c0_11, %c32] : memref<1x8x64xf32, #tpu.memory_space<vmem>>, vector<1x8x8xf32>
    %14 = vector.shape_cast %13 : vector<1x8x8xf32> to vector<8x8xf32>
    %15 = arith.truncf %14 : vector<8x8xf32> to vector<8x8xbf16>
    %cst_12 = arith.constant dense<0.000000e+00> : vector<7x8xf32>
    %16 = tpu.matmul %9, %12, %cst_12 {dimension_numbers = #tpu.dot_dimension_numbers<[1], [1], [0], [0], [0, 0, 1, 0], [], []>} : vector<7x8xbf16>, vector<8x8xbf16>, vector<7x8xf32> -> vector<7x8xf32>
    %cst_13 = arith.constant 0.353553385 : f32
    %17 = vector.broadcast %cst_13 : f32 to vector<7x8xf32>
    %18 = arith.mulf %16, %17 : vector<7x8xf32>
    %19 = arith.addf %18, %6 : vector<7x8xf32>
    %cst_14 = arith.constant dense<0xFF800000> : vector<7xf32>
    %20 = vector.multi_reduction <maximumf>, %19, %cst_14 [1] : vector<7x8xf32> to vector<7xf32>
    %21 = vector.shape_cast %20 : vector<7xf32> to vector<7x1xf32>
    %22 = vector.broadcast %21 : vector<7x1xf32> to vector<7x8xf32>
    %23 = arith.subf %19, %22 : vector<7x8xf32>
    %24 = math.exp %23 : vector<7x8xf32>
    %cst_15 = arith.constant dense<0.000000e+00> : vector<7xf32>
    %25 = vector.multi_reduction <add>, %24, %cst_15 [1] : vector<7x8xf32> to vector<7xf32>
    %26 = vector.shape_cast %25 : vector<7xf32> to vector<7x1xf32>
    %27 = tpu.reciprocal %26 {approx = true} : vector<7x1xf32> -> vector<7x1xf32>
    %28 = vector.broadcast %27 : vector<7x1xf32> to vector<7x8xf32>
    %29 = arith.mulf %24, %28 : vector<7x8xf32>
    %30 = arith.truncf %29 : vector<7x8xf32> to vector<7x8xbf16>
    %cst_16 = arith.constant dense<0.000000e+00> : vector<7x8xf32>
    %31 = tpu.matmul %30, %15, %cst_16 {dimension_numbers = #tpu.dot_dimension_numbers<[1], [0], [0], [1], [0, 0, 1, 1], [], []>} : vector<7x8xbf16>, vector<8x8xbf16>, vector<7x8xf32> -> vector<7x8xf32>
    %c0_17 = arith.constant 0 : index
    %c0_18 = arith.constant 0 : index
    %c0_19 = arith.constant 0 : index
    %32 = vector.load %arg5[%c0_17, %c0_18, %c0_19] : memref<1x7x32xf32, #tpu.memory_space<vmem>>, vector<1x7x8xf32>
    %33 = vector.shape_cast %32 : vector<1x7x8xf32> to vector<7x8xf32>
    %34 = vector.shape_cast %31 : vector<7x8xf32> to vector<1x7x8xf32>
    tpu.vector_store %arg5[%c0_17, %c0_18, %c0_19], %34 {strides = array<i32>} : memref<1x7x32xf32, #tpu.memory_space<vmem>>, vector<1x7x8xf32>,
    %c0_20 = arith.constant 0 : index
    %c0_21 = arith.constant 0 : index
    %c8 = arith.constant 8 : index
    %35 = vector.load %arg1[%c0_20, %c0_21, %c8] : memref<1x7x32xf32, #tpu.memory_space<vmem>>, vector<1x7x8xf32>
    %36 = vector.shape_cast %35 : vector<1x7x8xf32> to vector<7x8xf32>
    %37 = arith.truncf %36 : vector<7x8xf32> to vector<7x8xbf16>
    %c0_22 = arith.constant 0 : index
    %c0_23 = arith.constant 0 : index
    %c8_24 = arith.constant 8 : index
    %38 = vector.load %arg2[%c0_22, %c0_23, %c8_24] : memref<1x8x64xf32, #tpu.memory_space<vmem>>, vector<1x8x8xf32>
    %39 = vector.shape_cast %38 : vector<1x8x8xf32> to vector<8x8xf32>
    %40 = arith.truncf %39 : vector<8x8xf32> to vector<8x8xbf16>
    %c0_25 = arith.constant 0 : index
    %c0_26 = arith.constant 0 : index
    %c40 = arith.constant 40 : index
    %41 = vector.load %arg2[%c0_25, %c0_26, %c40] : memref<1x8x64xf32, #tpu.memory_space<vmem>>, vector<1x8x8xf32>
    %42 = vector.shape_cast %41 : vector<1x8x8xf32> to vector<8x8xf32>
    %43 = arith.truncf %42 : vector<8x8xf32> to vector<8x8xbf16>
    %cst_27 = arith.constant dense<0.000000e+00> : vector<7x8xf32>
    %44 = tpu.matmul %37, %40, %cst_27 {dimension_numbers = #tpu.dot_dimension_numbers<[1], [1], [0], [0], [0, 0, 1, 0], [], []>} : vector<7x8xbf16>, vector<8x8xbf16>, vector<7x8xf32> -> vector<7x8xf32>
    %cst_28 = arith.constant 0.353553385 : f32
    %45 = vector.broadcast %cst_28 : f32 to vector<7x8xf32>
    %46 = arith.mulf %44, %45 : vector<7x8xf32>
    %47 = arith.addf %46, %6 : vector<7x8xf32>
    %cst_29 = arith.constant dense<0xFF800000> : vector<7xf32>
    %48 = vector.multi_reduction <maximumf>, %47, %cst_29 [1] : vector<7x8xf32> to vector<7xf32>
    %49 = vector.shape_cast %48 : vector<7xf32> to vector<7x1xf32>
    %50 = vector.broadcast %49 : vector<7x1xf32> to vector<7x8xf32>
    %51 = arith.subf %47, %50 : vector<7x8xf32>
    %52 = math.exp %51 : vector<7x8xf32>
    %cst_30 = arith.constant dense<0.000000e+00> : vector<7xf32>
    %53 = vector.multi_reduction <add>, %52, %cst_30 [1] : vector<7x8xf32> to vector<7xf32>
    %54 = vector.shape_cast %53 : vector<7xf32> to vector<7x1xf32>
    %55 = tpu.reciprocal %54 {approx = true} : vector<7x1xf32> -> vector<7x1xf32>
    %56 = vector.broadcast %55 : vector<7x1xf32> to vector<7x8xf32>
    %57 = arith.mulf %52, %56 : vector<7x8xf32>
    %58 = arith.truncf %57 : vector<7x8xf32> to vector<7x8xbf16>
    %cst_31 = arith.constant dense<0.000000e+00> : vector<7x8xf32>
    %59 = tpu.matmul %58, %43, %cst_31 {dimension_numbers = #tpu.dot_dimension_numbers<[1], [0], [0], [1], [0, 0, 1, 1], [], []>} : vector<7x8xbf16>, vector<8x8xbf16>, vector<7x8xf32> -> vector<7x8xf32>
    %c0_32 = arith.constant 0 : index
    %c0_33 = arith.constant 0 : index
    %c8_34 = arith.constant 8 : index
    %60 = vector.load %arg5[%c0_32, %c0_33, %c8_34] : memref<1x7x32xf32, #tpu.memory_space<vmem>>, vector<1x7x8xf32>
    %61 = vector.shape_cast %60 : vector<1x7x8xf32> to vector<7x8xf32>
    %62 = vector.shape_cast %59 : vector<7x8xf32> to vector<1x7x8xf32>
    tpu.vector_store %arg5[%c0_32, %c0_33, %c8_34], %62 {strides = array<i32>} : memref<1x7x32xf32, #tpu.memory_space<vmem>>, vector<1x7x8xf32>,
    %c0_35 = arith.constant 0 : index
    %c0_36 = arith.constant 0 : index
    %c16 = arith.constant 16 : index
    %63 = vector.load %arg1[%c0_35, %c0_36, %c16] : memref<1x7x32xf32, #tpu.memory_space<vmem>>, vector<1x7x8xf32>
    %64 = vector.shape_cast %63 : vector<1x7x8xf32> to vector<7x8xf32>
    %65 = arith.truncf %64 : vector<7x8xf32> to vector<7x8xbf16>
    %c0_37 = arith.constant 0 : index
    %c0_38 = arith.constant 0 : index
    %c16_39 = arith.constant 16 : index
    %66 = vector.load %arg2[%c0_37, %c0_38, %c16_39] : memref<1x8x64xf32, #tpu.memory_space<vmem>>, vector<1x8x8xf32>
    %67 = vector.shape_cast %66 : vector<1x8x8xf32> to vector<8x8xf32>
    %68 = arith.truncf %67 : vector<8x8xf32> to vector<8x8xbf16>
    %c0_40 = arith.constant 0 : index
    %c0_41 = arith.constant 0 : index
    %c48 = arith.constant 48 : index
    %69 = vector.load %arg2[%c0_40, %c0_41, %c48] : memref<1x8x64xf32, #tpu.memory_space<vmem>>, vector<1x8x8xf32>
    %70 = vector.shape_cast %69 : vector<1x8x8xf32> to vector<8x8xf32>
    %71 = arith.truncf %70 : vector<8x8xf32> to vector<8x8xbf16>
    %cst_42 = arith.constant dense<0.000000e+00> : vector<7x8xf32>
    %72 = tpu.matmul %65, %68, %cst_42 {dimension_numbers = #tpu.dot_dimension_numbers<[1], [1], [0], [0], [0, 0, 1, 0], [], []>} : vector<7x8xbf16>, vector<8x8xbf16>, vector<7x8xf32> -> vector<7x8xf32>
    %cst_43 = arith.constant 0.353553385 : f32
    %73 = vector.broadcast %cst_43 : f32 to vector<7x8xf32>
    %74 = arith.mulf %72, %73 : vector<7x8xf32>
    %75 = arith.addf %74, %6 : vector<7x8xf32>
    %cst_44 = arith.constant dense<0xFF800000> : vector<7xf32>
    %76 = vector.multi_reduction <maximumf>, %75, %cst_44 [1] : vector<7x8xf32> to vector<7xf32>
    %77 = vector.shape_cast %76 : vector<7xf32> to vector<7x1xf32>
    %78 = vector.broadcast %77 : vector<7x1xf32> to vector<7x8xf32>
    %79 = arith.subf %75, %78 : vector<7x8xf32>
    %80 = math.exp %79 : vector<7x8xf32>
    %cst_45 = arith.constant dense<0.000000e+00> : vector<7xf32>
    %81 = vector.multi_reduction <add>, %80, %cst_45 [1] : vector<7x8xf32> to vector<7xf32>
    %82 = vector.shape_cast %81 : vector<7xf32> to vector<7x1xf32>
    %83 = tpu.reciprocal %82 {approx = true} : vector<7x1xf32> -> vector<7x1xf32>
    %84 = vector.broadcast %83 : vector<7x1xf32> to vector<7x8xf32>
    %85 = arith.mulf %80, %84 : vector<7x8xf32>
    %86 = arith.truncf %85 : vector<7x8xf32> to vector<7x8xbf16>
    %cst_46 = arith.constant dense<0.000000e+00> : vector<7x8xf32>
    %87 = tpu.matmul %86, %71, %cst_46 {dimension_numbers = #tpu.dot_dimension_numbers<[1], [0], [0], [1], [0, 0, 1, 1], [], []>} : vector<7x8xbf16>, vector<8x8xbf16>, vector<7x8xf32> -> vector<7x8xf32>
    %c0_47 = arith.constant 0 : index
    %c0_48 = arith.constant 0 : index
    %c16_49 = arith.constant 16 : index
    %88 = vector.load %arg5[%c0_47, %c0_48, %c16_49] : memref<1x7x32xf32, #tpu.memory_space<vmem>>, vector<1x7x8xf32>
    %89 = vector.shape_cast %88 : vector<1x7x8xf32> to vector<7x8xf32>
    %90 = vector.shape_cast %87 : vector<7x8xf32> to vector<1x7x8xf32>
    tpu.vector_store %arg5[%c0_47, %c0_48, %c16_49], %90 {strides = array<i32>} : memref<1x7x32xf32, #tpu.memory_space<vmem>>, vector<1x7x8xf32>,
    %c0_50 = arith.constant 0 : index
    %c0_51 = arith.constant 0 : index
    %c24 = arith.constant 24 : index
    %91 = vector.load %arg1[%c0_50, %c0_51, %c24] : memref<1x7x32xf32, #tpu.memory_space<vmem>>, vector<1x7x8xf32>
    %92 = vector.shape_cast %91 : vector<1x7x8xf32> to vector<7x8xf32>
    %93 = arith.truncf %92 : vector<7x8xf32> to vector<7x8xbf16>
    %c0_52 = arith.constant 0 : index
    %c0_53 = arith.constant 0 : index
    %c24_54 = arith.constant 24 : index
    %94 = vector.load %arg2[%c0_52, %c0_53, %c24_54] : memref<1x8x64xf32, #tpu.memory_space<vmem>>, vector<1x8x8xf32>
    %95 = vector.shape_cast %94 : vector<1x8x8xf32> to vector<8x8xf32>
    %96 = arith.truncf %95 : vector<8x8xf32> to vector<8x8xbf16>
    %c0_55 = arith.constant 0 : index
    %c0_56 = arith.constant 0 : index
    %c56 = arith.constant 56 : index
    %97 = vector.load %arg2[%c0_55, %c0_56, %c56] : memref<1x8x64xf32, #tpu.memory_space<vmem>>, vector<1x8x8xf32>
    %98 = vector.shape_cast %97 : vector<1x8x8xf32> to vector<8x8xf32>
    %99 = arith.truncf %98 : vector<8x8xf32> to vector<8x8xbf16>
    %cst_57 = arith.constant dense<0.000000e+00> : vector<7x8xf32>
    %100 = tpu.matmul %93, %96, %cst_57 {dimension_numbers = #tpu.dot_dimension_numbers<[1], [1], [0], [0], [0, 0, 1, 0], [], []>} : vector<7x8xbf16>, vector<8x8xbf16>, vector<7x8xf32> -> vector<7x8xf32>
    %cst_58 = arith.constant 0.353553385 : f32
    %101 = vector.broadcast %cst_58 : f32 to vector<7x8xf32>
    %102 = arith.mulf %100, %101 : vector<7x8xf32>
    %103 = arith.addf %102, %6 : vector<7x8xf32>
    %cst_59 = arith.constant dense<0xFF800000> : vector<7xf32>
    %104 = vector.multi_reduction <maximumf>, %103, %cst_59 [1] : vector<7x8xf32> to vector<7xf32>
    %105 = vector.shape_cast %104 : vector<7xf32> to vector<7x1xf32>
    %106 = vector.broadcast %105 : vector<7x1xf32> to vector<7x8xf32>
    %107 = arith.subf %103, %106 : vector<7x8xf32>
    %108 = math.exp %107 : vector<7x8xf32>
    %cst_60 = arith.constant dense<0.000000e+00> : vector<7xf32>
    %109 = vector.multi_reduction <add>, %108, %cst_60 [1] : vector<7x8xf32> to vector<7xf32>
    %110 = vector.shape_cast %109 : vector<7xf32> to vector<7x1xf32>
    %111 = tpu.reciprocal %110 {approx = true} : vector<7x1xf32> -> vector<7x1xf32>
    %112 = vector.broadcast %111 : vector<7x1xf32> to vector<7x8xf32>
    %113 = arith.mulf %108, %112 : vector<7x8xf32>
    %114 = arith.truncf %113 : vector<7x8xf32> to vector<7x8xbf16>
    %cst_61 = arith.constant dense<0.000000e+00> : vector<7x8xf32>
    %115 = tpu.matmul %114, %99, %cst_61 {dimension_numbers = #tpu.dot_dimension_numbers<[1], [0], [0], [1], [0, 0, 1, 1], [], []>} : vector<7x8xbf16>, vector<8x8xbf16>, vector<7x8xf32> -> vector<7x8xf32>
    %c0_62 = arith.constant 0 : index
    %c0_63 = arith.constant 0 : index
    %c24_64 = arith.constant 24 : index
    %116 = vector.load %arg5[%c0_62, %c0_63, %c24_64] : memref<1x7x32xf32, #tpu.memory_space<vmem>>, vector<1x7x8xf32>
    %117 = vector.shape_cast %116 : vector<1x7x8xf32> to vector<7x8xf32>
    %118 = vector.shape_cast %115 : vector<7x8xf32> to vector<1x7x8xf32>
    tpu.vector_store %arg5[%c0_62, %c0_63, %c24_64], %118 {strides = array<i32>} : memref<1x7x32xf32, #tpu.memory_space<vmem>>, vector<1x7x8xf32>,
    return
  }
  func.func @transform_0(%arg0: i32) -> (i32, i32, i32) {
    %c0_i32 = arith.constant 0 : i32
    %c0_i32_0 = arith.constant 0 : i32
    %c0_i32_1 = arith.constant 0 : i32
    return %arg0, %c0_i32, %c0_i32_0 : i32, i32, i32
  }
  func.func @transform_1(%arg0: i32) -> (i32, i32, i32) {
    %c0_i32 = arith.constant 0 : i32
    %c0_i32_0 = arith.constant 0 : i32
    %c0_i32_1 = arith.constant 0 : i32
    return %arg0, %c0_i32, %c0_i32_0 : i32, i32, i32
  }
  func.func @transform_2(%arg0: i32) -> (i32, i32) {
    %c0_i32 = arith.constant 0 : i32
    %c0_i32_0 = arith.constant 0 : i32
    %c0_i32_1 = arith.constant 0 : i32
    return %c0_i32, %c0_i32_0 : i32, i32
  }
  func.func @transform_3(%arg0: i32) -> (i32, i32, i32) {
    %c0_i32 = arith.constant 0 : i32
    %c0_i32_0 = arith.constant 0 : i32
    %c0_i32_1 = arith.constant 0 : i32
    return %arg0, %c0_i32, %c0_i32_0 : i32, i32, i32
  }
  func.func @transform_4(%arg0: i32) -> (i32, i32, i32) {
    %c0_i32 = arith.constant 0 : i32
    %c0_i32_0 = arith.constant 0 : i32
    %c0_i32_1 = arith.constant 0 : i32
    return %arg0, %c0_i32, %c0_i32_0 : i32, i32, i32
  }
}

module attributes {stable_mosaic.version = 11 : i64} {
  func.func @_ln_kernel(%arg0: i32, %arg1: memref<14x32xf32, #tpu.memory_space<vmem>>, %arg2: memref<1x32xf32, #tpu.memory_space<vmem>>, %arg3: memref<1x32xf32, #tpu.memory_space<vmem>>, %arg4: memref<14x32xf32, #tpu.memory_space<vmem>>) attributes {dimension_semantics = [#tpu.dimension_semantics<parallel>], iteration_bounds = array<i64: 1>, scalar_prefetch = 0 : i64, scratch_operands = 0 : i64, tpu.core_type = #tpu.core_type<tc>, window_params = [{transform_indices = @transform_0, window_bounds = array<i64: 14, 32>}, {pipeline_mode = #tpu.pipeline_mode<synchronous>, transform_indices = @transform_1, window_bounds = array<i64: 1, 32>}, {pipeline_mode = #tpu.pipeline_mode<synchronous>, transform_indices = @transform_2, window_bounds = array<i64: 1, 32>}, {transform_indices = @transform_3, window_bounds = array<i64: 14, 32>}]} {
    %c0 = arith.constant 0 : index
    %c0_0 = arith.constant 0 : index
    %0 = vector.load %arg1[%c0, %c0_0] : memref<14x32xf32, #tpu.memory_space<vmem>>, vector<14x32xf32>
    %c0_1 = arith.constant 0 : index
    %c0_2 = arith.constant 0 : index
    %1 = vector.load %arg2[%c0_1, %c0_2] : memref<1x32xf32, #tpu.memory_space<vmem>>, vector<1x32xf32>
    %c0_3 = arith.constant 0 : index
    %c0_4 = arith.constant 0 : index
    %2 = vector.load %arg3[%c0_3, %c0_4] : memref<1x32xf32, #tpu.memory_space<vmem>>, vector<1x32xf32>
    %cst = arith.constant dense<0.000000e+00> : vector<14xf32>
    %3 = vector.multi_reduction <add>, %0, %cst [1] : vector<14x32xf32> to vector<14xf32>
    %4 = vector.shape_cast %3 : vector<14xf32> to vector<14x1xf32>
    %cst_5 = arith.constant 3.200000e+01 : f32
    %5 = vector.broadcast %cst_5 : f32 to vector<14x1xf32>
    %6 = arith.divf %4, %5 : vector<14x1xf32>
    %7 = vector.broadcast %6 : vector<14x1xf32> to vector<14x32xf32>
    %8 = arith.subf %0, %7 : vector<14x32xf32>
    %9 = arith.mulf %8, %8 : vector<14x32xf32>
    %cst_6 = arith.constant dense<0.000000e+00> : vector<14xf32>
    %10 = vector.multi_reduction <add>, %9, %cst_6 [1] : vector<14x32xf32> to vector<14xf32>
    %11 = vector.shape_cast %10 : vector<14xf32> to vector<14x1xf32>
    %cst_7 = arith.constant 3.200000e+01 : f32
    %12 = vector.broadcast %cst_7 : f32 to vector<14x1xf32>
    %13 = arith.divf %11, %12 : vector<14x1xf32>
    %cst_8 = arith.constant 9.99999974E-6 : f32
    %14 = vector.broadcast %cst_8 : f32 to vector<14x1xf32>
    %15 = arith.addf %13, %14 : vector<14x1xf32>
    %16 = math.rsqrt %15 : vector<14x1xf32>
    %17 = vector.broadcast %16 : vector<14x1xf32> to vector<14x32xf32>
    %18 = arith.mulf %8, %17 : vector<14x32xf32>
    %19 = vector.broadcast %1 : vector<1x32xf32> to vector<14x32xf32>
    %20 = arith.mulf %18, %19 : vector<14x32xf32>
    %21 = vector.broadcast %2 : vector<1x32xf32> to vector<14x32xf32>
    %22 = arith.addf %20, %21 : vector<14x32xf32>
    %c0_9 = arith.constant 0 : index
    %c0_10 = arith.constant 0 : index
    %23 = vector.load %arg4[%c0_9, %c0_10] : memref<14x32xf32, #tpu.memory_space<vmem>>, vector<14x32xf32>
    tpu.vector_store %arg4[%c0_9, %c0_10], %22 {strides = array<i32>} : memref<14x32xf32, #tpu.memory_space<vmem>>, vector<14x32xf32>,
    return
  }
  func.func @transform_0(%arg0: i32) -> (i32, i32) {
    %c0_i32 = arith.constant 0 : i32
    %c0_i32_0 = arith.constant 0 : i32
    return %arg0, %c0_i32 : i32, i32
  }
  func.func @transform_1(%arg0: i32) -> (i32, i32) {
    %c0_i32 = arith.constant 0 : i32
    %c0_i32_0 = arith.constant 0 : i32
    %c0_i32_1 = arith.constant 0 : i32
    return %c0_i32, %c0_i32_0 : i32, i32
  }
  func.func @transform_2(%arg0: i32) -> (i32, i32) {
    %c0_i32 = arith.constant 0 : i32
    %c0_i32_0 = arith.constant 0 : i32
    %c0_i32_1 = arith.constant 0 : i32
    return %c0_i32, %c0_i32_0 : i32, i32
  }
  func.func @transform_3(%arg0: i32) -> (i32, i32) {
    %c0_i32 = arith.constant 0 : i32
    %c0_i32_0 = arith.constant 0 : i32
    return %arg0, %c0_i32 : i32, i32
  }
}

module attributes {stable_mosaic.version = 11 : i64} {
  func.func @_ffn_kernel(%arg0: i32, %arg1: i32, %arg2: memref<14x32xf32, #tpu.memory_space<vmem>>, %arg3: memref<64x32xbf16, #tpu.memory_space<vmem>>, %arg4: memref<1x64xf32, #tpu.memory_space<vmem>>, %arg5: memref<32x64xbf16, #tpu.memory_space<vmem>>, %arg6: memref<1x32xf32, #tpu.memory_space<vmem>>, %arg7: memref<14x32xf32, #tpu.memory_space<vmem>>, %arg8: memref<14x32xf32, #tpu.memory_space<vmem>>) attributes {dimension_semantics = [#tpu.dimension_semantics<parallel>, #tpu.dimension_semantics<arbitrary>], iteration_bounds = array<i64: 1, 1>, scalar_prefetch = 0 : i64, scratch_operands = 1 : i64, tpu.core_type = #tpu.core_type<tc>, window_params = [{transform_indices = @transform_0, window_bounds = array<i64: 14, 32>}, {transform_indices = @transform_1, window_bounds = array<i64: 64, 32>}, {transform_indices = @transform_2, window_bounds = array<i64: 1, 64>}, {transform_indices = @transform_3, window_bounds = array<i64: 32, 64>}, {pipeline_mode = #tpu.pipeline_mode<synchronous>, transform_indices = @transform_4, window_bounds = array<i64: 1, 32>}, {transform_indices = @transform_5, window_bounds = array<i64: 14, 32>}]} {
    %c0_i32 = arith.constant 0 : i32
    %0 = arith.cmpi eq, %arg1, %c0_i32 : i32
    %1 = arith.extui %0 : i1 to i32
    %c0_i32_0 = arith.constant 0 : i32
    %2 = arith.cmpi ne, %1, %c0_i32_0 : i32
    scf.if %2 {
      %cst_16 = arith.constant 0.000000e+00 : f32
      %21 = vector.broadcast %cst_16 : f32 to vector<14x32xf32>
      %c0_17 = arith.constant 0 : index
      %c0_18 = arith.constant 0 : index
      %22 = vector.load %arg8[%c0_17, %c0_18] : memref<14x32xf32, #tpu.memory_space<vmem>>, vector<14x32xf32>
      tpu.vector_store %arg8[%c0_17, %c0_18], %21 {strides = array<i32>} : memref<14x32xf32, #tpu.memory_space<vmem>>, vector<14x32xf32>,
    } else {
    }
    %c0 = arith.constant 0 : index
    %c0_1 = arith.constant 0 : index
    %3 = vector.load %arg2[%c0, %c0_1] : memref<14x32xf32, #tpu.memory_space<vmem>>, vector<14x32xf32>
    %4 = arith.truncf %3 : vector<14x32xf32> to vector<14x32xbf16>
    %c0_2 = arith.constant 0 : index
    %c0_3 = arith.constant 0 : index
    %5 = vector.load %arg3[%c0_2, %c0_3] : memref<64x32xbf16, #tpu.memory_space<vmem>>, vector<64x32xbf16>
    %cst = arith.constant dense<0.000000e+00> : vector<14x64xf32>
    %6 = tpu.matmul %4, %5, %cst {dimension_numbers = #tpu.dot_dimension_numbers<[1], [1], [0], [0], [0, 0, 1, 0], [], []>} : vector<14x32xbf16>, vector<64x32xbf16>, vector<14x64xf32> -> vector<14x64xf32>
    %c0_4 = arith.constant 0 : index
    %c0_5 = arith.constant 0 : index
    %7 = vector.load %arg4[%c0_4, %c0_5] : memref<1x64xf32, #tpu.memory_space<vmem>>, vector<1x64xf32>
    %8 = vector.broadcast %7 : vector<1x64xf32> to vector<14x64xf32>
    %9 = arith.addf %6, %8 : vector<14x64xf32>
    %cst_6 = arith.constant 0.000000e+00 : f32
    %10 = vector.broadcast %cst_6 : f32 to vector<14x64xf32>
    %11 = arith.maximumf %9, %10 : vector<14x64xf32>
    %c0_7 = arith.constant 0 : index
    %c0_8 = arith.constant 0 : index
    %12 = vector.load %arg5[%c0_7, %c0_8] : memref<32x64xbf16, #tpu.memory_space<vmem>>, vector<32x64xbf16>
    %c0_9 = arith.constant 0 : index
    %c0_10 = arith.constant 0 : index
    %13 = vector.load %arg8[%c0_9, %c0_10] : memref<14x32xf32, #tpu.memory_space<vmem>>, vector<14x32xf32>
    %14 = arith.truncf %11 : vector<14x64xf32> to vector<14x64xbf16>
    %cst_11 = arith.constant dense<0.000000e+00> : vector<14x32xf32>
    %15 = tpu.matmul %14, %12, %cst_11 {dimension_numbers = #tpu.dot_dimension_numbers<[1], [1], [0], [0], [0, 0, 1, 0], [], []>} : vector<14x64xbf16>, vector<32x64xbf16>, vector<14x32xf32> -> vector<14x32xf32>
    %16 = arith.addf %13, %15 : vector<14x32xf32>
    %c0_12 = arith.constant 0 : index
    %c0_13 = arith.constant 0 : index
    %17 = vector.load %arg8[%c0_12, %c0_13] : memref<14x32xf32, #tpu.memory_space<vmem>>, vector<14x32xf32>
    tpu.vector_store %arg8[%c0_12, %c0_13], %16 {strides = array<i32>} : memref<14x32xf32, #tpu.memory_space<vmem>>, vector<14x32xf32>,
    %c0_i32_14 = arith.constant 0 : i32
    %18 = arith.cmpi eq, %arg1, %c0_i32_14 : i32
    %19 = arith.extui %18 : i1 to i32
    %c0_i32_15 = arith.constant 0 : i32
    %20 = arith.cmpi ne, %19, %c0_i32_15 : i32
    scf.if %20 {
      %c0_16 = arith.constant 0 : index
      %c0_17 = arith.constant 0 : index
      %21 = vector.load %arg8[%c0_16, %c0_17] : memref<14x32xf32, #tpu.memory_space<vmem>>, vector<14x32xf32>
      %c0_18 = arith.constant 0 : index
      %c0_19 = arith.constant 0 : index
      %22 = vector.load %arg6[%c0_18, %c0_19] : memref<1x32xf32, #tpu.memory_space<vmem>>, vector<1x32xf32>
      %23 = vector.broadcast %22 : vector<1x32xf32> to vector<14x32xf32>
      %24 = arith.addf %21, %23 : vector<14x32xf32>
      %c0_20 = arith.constant 0 : index
      %c0_21 = arith.constant 0 : index
      %25 = vector.load %arg7[%c0_20, %c0_21] : memref<14x32xf32, #tpu.memory_space<vmem>>, vector<14x32xf32>
      tpu.vector_store %arg7[%c0_20, %c0_21], %24 {strides = array<i32>} : memref<14x32xf32, #tpu.memory_space<vmem>>, vector<14x32xf32>,
    } else {
    }
    return
  }
  func.func @transform_0(%arg0: i32, %arg1: i32) -> (i32, i32) {
    %c0_i32 = arith.constant 0 : i32
    %c0_i32_0 = arith.constant 0 : i32
    return %arg0, %c0_i32 : i32, i32
  }
  func.func @transform_1(%arg0: i32, %arg1: i32) -> (i32, i32) {
    %c0_i32 = arith.constant 0 : i32
    %c0_i32_0 = arith.constant 0 : i32
    return %arg1, %c0_i32 : i32, i32
  }
  func.func @transform_2(%arg0: i32, %arg1: i32) -> (i32, i32) {
    %c0_i32 = arith.constant 0 : i32
    %c0_i32_0 = arith.constant 0 : i32
    return %c0_i32, %arg1 : i32, i32
  }
  func.func @transform_3(%arg0: i32, %arg1: i32) -> (i32, i32) {
    %c0_i32 = arith.constant 0 : i32
    %c0_i32_0 = arith.constant 0 : i32
    return %c0_i32, %arg1 : i32, i32
  }
  func.func @transform_4(%arg0: i32, %arg1: i32) -> (i32, i32) {
    %c0_i32 = arith.constant 0 : i32
    %c0_i32_0 = arith.constant 0 : i32
    %c0_i32_1 = arith.constant 0 : i32
    return %c0_i32, %c0_i32_0 : i32, i32
  }
  func.func @transform_5(%arg0: i32, %arg1: i32) -> (i32, i32) {
    %c0_i32 = arith.constant 0 : i32
    %c0_i32_0 = arith.constant 0 : i32
    return %arg0, %c0_i32 : i32, i32
  }
}

module attributes {stable_mosaic.version = 11 : i64} {
  func.func @_linear_kernel(%arg0: i32, %arg1: i32, %arg2: i32, %arg3: memref<14x32xf32, #tpu.memory_space<vmem>>, %arg4: memref<60x32xbf16, #tpu.memory_space<vmem>>, %arg5: memref<1x60xf32, #tpu.memory_space<vmem>>, %arg6: memref<14x60xf32, #tpu.memory_space<vmem>>, %arg7: memref<14x60xf32, #tpu.memory_space<vmem>>) attributes {dimension_semantics = [#tpu.dimension_semantics<parallel>, #tpu.dimension_semantics<parallel>, #tpu.dimension_semantics<arbitrary>], iteration_bounds = array<i64: 1, 1, 1>, scalar_prefetch = 0 : i64, scratch_operands = 1 : i64, tpu.core_type = #tpu.core_type<tc>, window_params = [{transform_indices = @transform_0, window_bounds = array<i64: 14, 32>}, {transform_indices = @transform_1, window_bounds = array<i64: 60, 32>}, {transform_indices = @transform_2, window_bounds = array<i64: 1, 60>}, {transform_indices = @transform_3, window_bounds = array<i64: 14, 60>}]} {
    %c0_i32 = arith.constant 0 : i32
    %0 = arith.cmpi eq, %arg2, %c0_i32 : i32
    %1 = arith.extui %0 : i1 to i32
    %c0_i32_0 = arith.constant 0 : i32
    %2 = arith.cmpi ne, %1, %c0_i32_0 : i32
    scf.if %2 {
      %cst_10 = arith.constant 0.000000e+00 : f32
      %13 = vector.broadcast %cst_10 : f32 to vector<14x60xf32>
      %c0_11 = arith.constant 0 : index
      %c0_12 = arith.constant 0 : index
      %14 = vector.load %arg7[%c0_11, %c0_12] : memref<14x60xf32, #tpu.memory_space<vmem>>, vector<14x60xf32>
      tpu.vector_store %arg7[%c0_11, %c0_12], %13 {strides = array<i32>} : memref<14x60xf32, #tpu.memory_space<vmem>>, vector<14x60xf32>,
    } else {
    }
    %c0 = arith.constant 0 : index
    %c0_1 = arith.constant 0 : index
    %3 = vector.load %arg3[%c0, %c0_1] : memref<14x32xf32, #tpu.memory_space<vmem>>, vector<14x32xf32>
    %4 = arith.truncf %3 : vector<14x32xf32> to vector<14x32xbf16>
    %c0_2 = arith.constant 0 : index
    %c0_3 = arith.constant 0 : index
    %5 = vector.load %arg4[%c0_2, %c0_3] : memref<60x32xbf16, #tpu.memory_space<vmem>>, vector<60x32xbf16>
    %c0_4 = arith.constant 0 : index
    %c0_5 = arith.constant 0 : index
    %6 = vector.load %arg7[%c0_4, %c0_5] : memref<14x60xf32, #tpu.memory_space<vmem>>, vector<14x60xf32>
    %cst = arith.constant dense<0.000000e+00> : vector<14x60xf32>
    %7 = tpu.matmul %4, %5, %cst {dimension_numbers = #tpu.dot_dimension_numbers<[1], [1], [0], [0], [0, 0, 1, 0], [], []>} : vector<14x32xbf16>, vector<60x32xbf16>, vector<14x60xf32> -> vector<14x60xf32>
    %8 = arith.addf %6, %7 : vector<14x60xf32>
    %c0_6 = arith.constant 0 : index
    %c0_7 = arith.constant 0 : index
    %9 = vector.load %arg7[%c0_6, %c0_7] : memref<14x60xf32, #tpu.memory_space<vmem>>, vector<14x60xf32>
    tpu.vector_store %arg7[%c0_6, %c0_7], %8 {strides = array<i32>} : memref<14x60xf32, #tpu.memory_space<vmem>>, vector<14x60xf32>,
    %c0_i32_8 = arith.constant 0 : i32
    %10 = arith.cmpi eq, %arg2, %c0_i32_8 : i32
    %11 = arith.extui %10 : i1 to i32
    %c0_i32_9 = arith.constant 0 : i32
    %12 = arith.cmpi ne, %11, %c0_i32_9 : i32
    scf.if %12 {
      %c0_10 = arith.constant 0 : index
      %c0_11 = arith.constant 0 : index
      %13 = vector.load %arg7[%c0_10, %c0_11] : memref<14x60xf32, #tpu.memory_space<vmem>>, vector<14x60xf32>
      %c0_12 = arith.constant 0 : index
      %c0_13 = arith.constant 0 : index
      %14 = vector.load %arg5[%c0_12, %c0_13] : memref<1x60xf32, #tpu.memory_space<vmem>>, vector<1x60xf32>
      %15 = vector.broadcast %14 : vector<1x60xf32> to vector<14x60xf32>
      %16 = arith.addf %13, %15 : vector<14x60xf32>
      %c0_14 = arith.constant 0 : index
      %c0_15 = arith.constant 0 : index
      %17 = vector.load %arg6[%c0_14, %c0_15] : memref<14x60xf32, #tpu.memory_space<vmem>>, vector<14x60xf32>
      tpu.vector_store %arg6[%c0_14, %c0_15], %16 {strides = array<i32>} : memref<14x60xf32, #tpu.memory_space<vmem>>, vector<14x60xf32>,
    } else {
    }
    return
  }
  func.func @transform_0(%arg0: i32, %arg1: i32, %arg2: i32) -> (i32, i32) {
    %c0_i32 = arith.constant 0 : i32
    return %arg0, %arg2 : i32, i32
  }
  func.func @transform_1(%arg0: i32, %arg1: i32, %arg2: i32) -> (i32, i32) {
    %c0_i32 = arith.constant 0 : i32
    return %arg1, %arg2 : i32, i32
  }
  func.func @transform_2(%arg0: i32, %arg1: i32, %arg2: i32) -> (i32, i32) {
    %c0_i32 = arith.constant 0 : i32
    %c0_i32_0 = arith.constant 0 : i32
    return %c0_i32, %arg1 : i32, i32
  }
  func.func @transform_3(%arg0: i32, %arg1: i32, %arg2: i32) -> (i32, i32) {
    %c0_i32 = arith.constant 0 : i32
    return %arg0, %arg1 : i32, i32
  }
}

</mosaic_0001>

<llo_original>
// kernel: seq2seq_transformer_forward.52
$region0: #{seq2seq_transformer_forward.52}
  #allocation0 [shape = 'u32[]', space=smem, size = 0x4, offset = 0x4, fixed_abs, tag = 'smem constant byte address 0x4 - core index']
  #allocation1 [shape = 'u32[72,128]{1,0:T(1,128)}', space=vmem, size = 0x9000, scoped, tag = 'internal scratch']
  #allocation2 [shape = 'f32[14,32]{1,0:T(8,128)}', space=vmem, size = 0x2000, scoped, tag = 'scratch operand']
  %s0 = inlined_call_operand.vmem [shape: f32[14,32], index: 0, kind: input, shape index: {}]
  %s1 = inlined_call_operand.vmem [shape: bf16[32,32], index: 1, kind: input, shape index: {}]
  %s2 = inlined_call_operand.vmem [shape: f32[1,32], index: 2, kind: input, shape index: {}]
  %s3 = inlined_call_operand.vmem [shape: f32[14,32], index: 3, kind: output, shape index: {}]
  %s4 = sld [smem:[#allocation0]]
  $region30: #{seq2seq_transformer_forward.52} parent=0
    _
  %s6 = ssub.s32 1, %s4
  %s7 = scalar_select 0, %s6, %s4
  // Predicated region
  $region2: #{seq2seq_transformer_forward.52} parent=0 // pred_check
    _
  $region3: #{seq2seq_transformer_forward.52} parent=0 // pred_check_branch
    %9 = sbr.rel (0) target = $region5
  $region4: #{seq2seq_transformer_forward.52} parent=0 // pred_region
    _
  $region5: #{seq2seq_transformer_forward.52} parent=0 // pred_fallthru
    _
  // Predicated region
  $region6: #{seq2seq_transformer_forward.52} parent=0 // pred_check
    _
  $region7: #{seq2seq_transformer_forward.52} parent=0 // pred_check_branch
    %11 = sbr.rel (0) target = $region9
  $region8: #{seq2seq_transformer_forward.52} parent=0 // pred_region
    _
  $region9: #{seq2seq_transformer_forward.52} parent=0 // pred_fallthru
    _
  // Predicated region
  $region10: #{seq2seq_transformer_forward.52} parent=0 // pred_check
    _
  $region11: #{seq2seq_transformer_forward.52} parent=0 // pred_check_branch
    %13 = sbr.rel (0) target = $region13
  $region12: #{seq2seq_transformer_forward.52} parent=0 // pred_region
    _
  $region13: #{seq2seq_transformer_forward.52} parent=0 // pred_fallthru
    _
  %p15 = scmp.eq.s32.totalorder 0, 0
  // Predicated region
  $region14: #{seq2seq_transformer_forward.52} parent=0 // pred_check
    %p16 = pneg %p15
  $region15: #{seq2seq_transformer_forward.52} parent=0 // pred_check_branch
    %18 = sbr.rel (%p16) target = $region17
  $region16: #{seq2seq_transformer_forward.52} parent=0 // pred_region
    %vm19 = vcmask 261120
    %20 = vst.msk [vmem:[#allocation2] sm:$0xff] %vm19, 0.0
    %vm21 = vcmask 259072
    %22 = vst.msk [vmem:[#allocation2 + $0x8] sm:$0x3f] %vm21, 0.0
  $region17: #{seq2seq_transformer_forward.52} parent=0 // pred_fallthru
    _
  %v23 = vld [vmem:[%s0] sm:$0xff]
  %v24 = vld [vmem:[%s0 + $0x8] sm:$0x3f]
  %v25 = vpack.c.bf16 %v24, %v23
  %v26 = vld [vmem:[%s1] sm:$0xf]
  %v27 = vld [vmem:[%s1 + $0x4] sm:$0xf]
  %v28 = vld [vmem:[%s1 + $0x8] sm:$0xf]
  %v29 = vld [vmem:[%s1 + $0xc] sm:$0xf]
  %v30 = vld [vmem:[#allocation2] sm:$0xff]
  %v31 = vld [vmem:[#allocation2 + $0x8] sm:$0x3f]
  %v36 = vunpack.c.l.b16 %v26
  %v37 = vunpack.c.l.b16 %v27
  %v38 = vunpack.c.l.b16 %v28
  %v39 = vunpack.c.l.b16 %v29
  %v40 = vpack.c.b16 %v37, %v36
  %v41 = vpack.c.b16 %v39, %v38
  %vm42 = vcmask 261120
  %v44 = vsel %vm42, %v25, 0
  %v47 = vsel %vm42, %v40, 0
  %v50 = vsel %vm42, %v41, 0
  %52 = vmatpush.bf16.xpose.msra.mxu0 0
  %53 = vmatpush.bf16.xpose.msra.mxu0 0
  %54 = vmatpush.bf16.xpose.msra.mxu0 0
  %55 = vmatpush.bf16.xpose.msra.mxu0 0
  %56 = vmatpush.bf16.xpose.msra.mxu0 0
  %57 = vmatpush.bf16.xpose.msra.mxu0 0
  %58 = vmatpush.bf16.xpose.msra.mxu0 %v50
  %59 = vmatpush.bf16.xpose.msra.mxu0 %v47
  %60 = vmatmul.bf16.gmra.mxu0 %v44
  %v61 = vpop.f32.mrf.mxu0
  %v62 = vadd.f32 0.0, %v61
  %v63 = vpop.f32.mrf.mxu0
  %v64 = vadd.f32 0.0, %v63
  %65 = vdwg.mxu0
  %v66 = vadd.f32 %v30, %v62
  %v67 = vadd.f32 %v31, %v64
  %68 = vst.msk [vmem:[#allocation2] sm:$0xff] %vm42, %v66
  %vm69 = vcmask 259072
  %70 = vst.msk [vmem:[#allocation2 + $0x8] sm:$0x3f] %vm69, %v67
  // Predicated region
  $region18: #{seq2seq_transformer_forward.52} parent=0 // pred_check
    %p71 = pneg %p15
  $region19: #{seq2seq_transformer_forward.52} parent=0 // pred_check_branch
    %73 = sbr.rel (%p71) target = $region21
  $region20: #{seq2seq_transformer_forward.52} parent=0 // pred_region
    %v74 = vld [vmem:[#allocation2] sm:$0xff]
    %v75 = vld [vmem:[#allocation2 + $0x8] sm:$0x3f]
    %v76 = vld [vmem:[%s2] sm:$0x1]
    %v78 = vperm.slane %v76, 0
    %v80 = vadd.f32 %v74, %v78
    %v81 = vadd.f32 %v75, %v78
    %82 = vst.msk [vmem:[%s3] sm:$0xff] %vm42, %v80
    %83 = vst.msk [vmem:[%s3 + $0x8] sm:$0x3f] %vm69, %v81
  $region21: #{seq2seq_transformer_forward.52} parent=0 // pred_fallthru
    _
  // Predicated region
  $region22: #{seq2seq_transformer_forward.52} parent=0 // pred_check
    _
  $region23: #{seq2seq_transformer_forward.52} parent=0 // pred_check_branch
    %85 = sbr.rel (0) target = $region25
  $region24: #{seq2seq_transformer_forward.52} parent=0 // pred_region
    _
  $region25: #{seq2seq_transformer_forward.52} parent=0 // pred_fallthru
    _
  // Predicated region
  $region26: #{seq2seq_transformer_forward.52} parent=0 // pred_check
    _
  $region27: #{seq2seq_transformer_forward.52} parent=0 // pred_check_branch
    %87 = sbr.rel (0) target = $region29
  $region28: #{seq2seq_transformer_forward.52} parent=0 // pred_region
    _
  $region29: #{seq2seq_transformer_forward.52} parent=0 // pred_fallthru
    _

// kernel: seq2seq_transformer_forward.53
$region0: #{seq2seq_transformer_forward.53}
  #allocation0 [shape = 'u32[]', space=smem, size = 0x4, offset = 0x4, fixed_abs, tag = 'smem constant byte address 0x4 - core index']
  #allocation1 [shape = 'u32[72,128]{1,0:T(1,128)}', space=vmem, size = 0x9000, scoped, tag = 'internal scratch']
  %s0 = inlined_call_operand.vmem [shape: f32[14,32], index: 0, kind: input, shape index: {}]
  %s1 = inlined_call_operand.vmem [shape: f32[14,32], index: 1, kind: input, shape index: {}]
  %s2 = inlined_call_operand.vmem [shape: f32[1,32], index: 2, kind: input, shape index: {}]
  %s3 = inlined_call_operand.vmem [shape: f32[1,32], index: 3, kind: input, shape index: {}]
  %s4 = inlined_call_operand.vmem [shape: f32[14,32], index: 4, kind: output, shape index: {}]
  %s5 = sld [smem:[#allocation0]]
  $region26: #{seq2seq_transformer_forward.53} parent=0
    _
  %s7 = ssub.s32 1, %s5
  %s8 = scalar_select 0, %s7, %s5
  // Predicated region
  $region2: #{seq2seq_transformer_forward.53} parent=0 // pred_check
    _
  $region3: #{seq2seq_transformer_forward.53} parent=0 // pred_check_branch
    %10 = sbr.rel (0) target = $region5
  $region4: #{seq2seq_transformer_forward.53} parent=0 // pred_region
    _
  $region5: #{seq2seq_transformer_forward.53} parent=0 // pred_fallthru
    _
  // Predicated region
  $region6: #{seq2seq_transformer_forward.53} parent=0 // pred_check
    _
  $region7: #{seq2seq_transformer_forward.53} parent=0 // pred_check_branch
    %12 = sbr.rel (0) target = $region9
  $region8: #{seq2seq_transformer_forward.53} parent=0 // pred_region
    _
  $region9: #{seq2seq_transformer_forward.53} parent=0 // pred_fallthru
    _
  // Predicated region
  $region10: #{seq2seq_transformer_forward.53} parent=0 // pred_check
    _
  $region11: #{seq2seq_transformer_forward.53} parent=0 // pred_check_branch
    %14 = sbr.rel (0) target = $region13
  $region12: #{seq2seq_transformer_forward.53} parent=0 // pred_region
    _
  $region13: #{seq2seq_transformer_forward.53} parent=0 // pred_fallthru
    _
  // Predicated region
  $region14: #{seq2seq_transformer_forward.53} parent=0 // pred_check
    _
  $region15: #{seq2seq_transformer_forward.53} parent=0 // pred_check_branch
    %16 = sbr.rel (0) target = $region17
  $region16: #{seq2seq_transformer_forward.53} parent=0 // pred_region
    _
  $region17: #{seq2seq_transformer_forward.53} parent=0 // pred_fallthru
    _
  %v17 = vld [vmem:[%s0] sm:$0xff]
  %v18 = vld [vmem:[%s0 + $0x8] sm:$0x3f]
  %v19 = vld [vmem:[%s1] sm:$0xff]
  %v20 = vld [vmem:[%s1 + $0x8] sm:$0x3f]
  %v21 = vadd.f32 %v17, %v19
  %v22 = vadd.f32 %v18, %v20
  %v23 = vld [vmem:[%s2] sm:$0x1]
  %v24 = vld [vmem:[%s3] sm:$0x1]
  %vm25 = vcmask 261120
  %v26 = vsel %vm25, %v21, 0.0
  %27 = vadd.xlane.f32.xlu0 %v26
  %v28 = vpop.xlane.xlu0 %27
  %vm29 = vcmask 259072
  %v30 = vsel %vm29, %v22, 0.0
  %31 = vadd.xlane.f32.xlu0 %v30
  %v32 = vpop.xlane.xlu0 %31
  %v33 = vrcp.pop 32.0
  %v34 = vmul.f32 32.0, %v33
  %v35 = vsub.f32 1.0, %v34
  %v36 = vmul.f32 %v33, %v35
  %v37 = vadd.f32 %v33, %v36
  %vm38 = vweird.f32 %v33
  %v39 = vsel %vm38, %v33, %v37
  %v40 = vmul.f32 %v28, %v39
  %v41 = vmul.f32 %v32, %v39
  %v42 = vsub.f32 %v21, %v40
  %v43 = vsub.f32 %v22, %v41
  %v44 = vmul.f32 %v42, %v42
  %v45 = vmul.f32 %v43, %v43
  %v46 = vsel %vm25, %v44, 0.0
  %47 = vadd.xlane.f32.xlu0 %v46
  %v48 = vpop.xlane.xlu0 %47
  %v49 = vsel %vm29, %v45, 0.0
  %50 = vadd.xlane.f32.xlu0 %v49
  %v51 = vpop.xlane.xlu0 %50
  %v52 = vmul.f32 %v48, %v39
  %v53 = vmul.f32 %v51, %v39
  %v54 = vadd.f32 %v52, 1e-05
  %v55 = vadd.f32 %v53, 1e-05
  %v56 = vrsqrt.pop %v54
  %v57 = vmul.f32 %v56, %v54
  %v58 = vmul.f32 %v57, %v56
  %v59 = vmul.f32 0.5, %v58
  %v60 = vsub.f32 1.5, %v59
  %v61 = vmul.f32 %v56, %v60
  %vm62 = vweird.f32 %v54
  %vm63 = vweird.f32 %v56
  %vm64 = vmor %vm62, %vm63
  %v65 = vsel %vm64, %v56, %v61
  %v66 = vrsqrt.pop %v55
  %v67 = vmul.f32 %v66, %v55
  %v68 = vmul.f32 %v67, %v66
  %v69 = vmul.f32 0.5, %v68
  %v70 = vsub.f32 1.5, %v69
  %v71 = vmul.f32 %v66, %v70
  %vm72 = vweird.f32 %v55
  %vm73 = vweird.f32 %v66
  %vm74 = vmor %vm72, %vm73
  %v75 = vsel %vm74, %v66, %v71
  %v76 = vmul.f32 %v42, %v65
  %v77 = vmul.f32 %v43, %v75
  %v79 = vperm.slane %v23, 0
  %v81 = vmul.f32 %v76, %v79
  %v82 = vmul.f32 %v77, %v79
  %v84 = vperm.slane %v24, 0
  %v86 = vadd.f32 %v81, %v84
  %v87 = vadd.f32 %v82, %v84
  %88 = vst.msk [vmem:[%s4] sm:$0xff] %vm25, %v86
  %89 = vst.msk [vmem:[%s4 + $0x8] sm:$0x3f] %vm29, %v87
  // Predicated region
  $region18: #{seq2seq_transformer_forward.53} parent=0 // pred_check
    _
  $region19: #{seq2seq_transformer_forward.53} parent=0 // pred_check_branch
    %91 = sbr.rel (0) target = $region21
  $region20: #{seq2seq_transformer_forward.53} parent=0 // pred_region
    _
  $region21: #{seq2seq_transformer_forward.53} parent=0 // pred_fallthru
    _
  // Predicated region
  $region22: #{seq2seq_transformer_forward.53} parent=0 // pred_check
    _
  $region23: #{seq2seq_transformer_forward.53} parent=0 // pred_check_branch
    %93 = sbr.rel (0) target = $region25
  $region24: #{seq2seq_transformer_forward.53} parent=0 // pred_region
    _
  $region25: #{seq2seq_transformer_forward.53} parent=0 // pred_fallthru
    _

// kernel: seq2seq_transformer_forward.50
$region0: #{seq2seq_transformer_forward.50}
  #allocation0 [shape = 'u32[]', space=smem, size = 0x4, offset = 0x4, fixed_abs, tag = 'smem constant byte address 0x4 - core index']
  #allocation1 [shape = 'u32[72,128]{1,0:T(1,128)}', space=vmem, size = 0x9000, scoped, tag = 'internal scratch']
  #allocation2 [shape = 'f32[14,96]{1,0:T(8,128)}', space=vmem, size = 0x2000, scoped, tag = 'scratch operand']
  %s0 = inlined_call_operand.vmem [shape: f32[14,32], index: 0, kind: input, shape index: {}]
  %s1 = inlined_call_operand.vmem [shape: bf16[96,32], index: 1, kind: input, shape index: {}]
  %s2 = inlined_call_operand.vmem [shape: f32[1,96], index: 2, kind: input, shape index: {}]
  %s3 = inlined_call_operand.vmem [shape: f32[14,96], index: 3, kind: output, shape index: {}]
  %s4 = sld [smem:[#allocation0]]
  $region30: #{seq2seq_transformer_forward.50} parent=0
    _
  %s6 = ssub.s32 1, %s4
  %s7 = scalar_select 0, %s6, %s4
  // Predicated region
  $region2: #{seq2seq_transformer_forward.50} parent=0 // pred_check
    _
  $region3: #{seq2seq_transformer_forward.50} parent=0 // pred_check_branch
    %9 = sbr.rel (0) target = $region5
  $region4: #{seq2seq_transformer_forward.50} parent=0 // pred_region
    _
  $region5: #{seq2seq_transformer_forward.50} parent=0 // pred_fallthru
    _
  // Predicated region
  $region6: #{seq2seq_transformer_forward.50} parent=0 // pred_check
    _
  $region7: #{seq2seq_transformer_forward.50} parent=0 // pred_check_branch
    %11 = sbr.rel (0) target = $region9
  $region8: #{seq2seq_transformer_forward.50} parent=0 // pred_region
    _
  $region9: #{seq2seq_transformer_forward.50} parent=0 // pred_fallthru
    _
  // Predicated region
  $region10: #{seq2seq_transformer_forward.50} parent=0 // pred_check
    _
  $region11: #{seq2seq_transformer_forward.50} parent=0 // pred_check_branch
    %13 = sbr.rel (0) target = $region13
  $region12: #{seq2seq_transformer_forward.50} parent=0 // pred_region
    _
  $region13: #{seq2seq_transformer_forward.50} parent=0 // pred_fallthru
    _
  %p15 = scmp.eq.s32.totalorder 0, 0
  // Predicated region
  $region14: #{seq2seq_transformer_forward.50} parent=0 // pred_check
    %p16 = pneg %p15
  $region15: #{seq2seq_transformer_forward.50} parent=0 // pred_check_branch
    %18 = sbr.rel (%p16) target = $region17
  $region16: #{seq2seq_transformer_forward.50} parent=0 // pred_region
    %vm19 = vcmask 785408
    %20 = vst.msk [vmem:[#allocation2] sm:$0xff] %vm19, 0.0
    %vm21 = vcmask 783360
    %22 = vst.msk [vmem:[#allocation2 + $0x8] sm:$0x3f] %vm21, 0.0
  $region17: #{seq2seq_transformer_forward.50} parent=0 // pred_fallthru
    _
  %v23 = vld [vmem:[%s0] sm:$0xff]
  %v24 = vld [vmem:[%s0 + $0x8] sm:$0x3f]
  %v25 = vpack.c.bf16 %v24, %v23
  %v26 = vld [vmem:[%s1] sm:$0xf]
  %v27 = vld [vmem:[%s1 + $0x4] sm:$0xf]
  %v28 = vld [vmem:[%s1 + $0x8] sm:$0xf]
  %v29 = vld [vmem:[%s1 + $0xc] sm:$0xf]
  %v30 = vld [vmem:[%s1 + $0x10] sm:$0xf]
  %v31 = vld [vmem:[%s1 + $0x14] sm:$0xf]
  %v32 = vld [vmem:[%s1 + $0x18] sm:$0xf]
  %v33 = vld [vmem:[%s1 + $0x1c] sm:$0xf]
  %v34 = vld [vmem:[%s1 + $0x20] sm:$0xf]
  %v35 = vld [vmem:[%s1 + $0x24] sm:$0xf]
  %v36 = vld [vmem:[%s1 + $0x28] sm:$0xf]
  %v37 = vld [vmem:[%s1 + $0x2c] sm:$0xf]
  %v38 = vld [vmem:[#allocation2] sm:$0xff]
  %v39 = vld [vmem:[#allocation2 + $0x8] sm:$0x3f]
  %v52 = vunpack.c.l.b16 %v26
  %v53 = vunpack.c.l.b16 %v27
  %v54 = vunpack.c.l.b16 %v28
  %v55 = vunpack.c.l.b16 %v29
  %v56 = vunpack.c.l.b16 %v30
  %v57 = vunpack.c.l.b16 %v31
  %v58 = vunpack.c.l.b16 %v32
  %v59 = vunpack.c.l.b16 %v33
  %v60 = vunpack.c.l.b16 %v34
  %v61 = vunpack.c.l.b16 %v35
  %v62 = vunpack.c.l.b16 %v36
  %v63 = vunpack.c.l.b16 %v37
  %v64 = vpack.c.b16 %v53, %v52
  %v65 = vpack.c.b16 %v55, %v54
  %v66 = vpack.c.b16 %v57, %v56
  %v67 = vpack.c.b16 %v59, %v58
  %v68 = vpack.c.b16 %v61, %v60
  %v69 = vpack.c.b16 %v63, %v62
  %vm70 = vcmask 261120
  %v72 = vsel %vm70, %v25, 0
  %v75 = vsel %vm70, %v64, 0
  %v78 = vsel %vm70, %v65, 0
  %v81 = vsel %vm70, %v66, 0
  %v84 = vsel %vm70, %v67, 0
  %v87 = vsel %vm70, %v68, 0
  %v90 = vsel %vm70, %v69, 0
  %92 = vmatpush.bf16.xpose.msra.mxu0 0
  %93 = vmatpush.bf16.xpose.msra.mxu0 0
  %94 = vmatpush.bf16.xpose.msra.mxu0 %v90
  %95 = vmatpush.bf16.xpose.msra.mxu0 %v87
  %96 = vmatpush.bf16.xpose.msra.mxu0 %v84
  %97 = vmatpush.bf16.xpose.msra.mxu0 %v81
  %98 = vmatpush.bf16.xpose.msra.mxu0 %v78
  %99 = vmatpush.bf16.xpose.msra.mxu0 %v75
  %100 = vmatmul.bf16.gmra.mxu0 %v72
  %v101 = vpop.f32.mrf.mxu0
  %v102 = vadd.f32 0.0, %v101
  %v103 = vpop.f32.mrf.mxu0
  %v104 = vadd.f32 0.0, %v103
  %105 = vdwg.mxu0
  %v106 = vadd.f32 %v38, %v102
  %v107 = vadd.f32 %v39, %v104
  %vm108 = vcmask 785408
  %109 = vst.msk [vmem:[#allocation2] sm:$0xff] %vm108, %v106
  %vm110 = vcmask 783360
  %111 = vst.msk [vmem:[#allocation2 + $0x8] sm:$0x3f] %vm110, %v107
  // Predicated region
  $region18: #{seq2seq_transformer_forward.50} parent=0 // pred_check
    %p112 = pneg %p15
  $region19: #{seq2seq_transformer_forward.50} parent=0 // pred_check_branch
    %114 = sbr.rel (%p112) target = $region21
  $region20: #{seq2seq_transformer_forward.50} parent=0 // pred_region
    %v115 = vld [vmem:[#allocation2] sm:$0xff]
    %v116 = vld [vmem:[#allocation2 + $0x8] sm:$0x3f]
    %v117 = vld [vmem:[%s2] sm:$0x1]
    %v119 = vperm.slane %v117, 0
    %v121 = vadd.f32 %v115, %v119
    %v122 = vadd.f32 %v116, %v119
    %123 = vst.msk [vmem:[%s3] sm:$0xff] %vm108, %v121
    %124 = vst.msk [vmem:[%s3 + $0x8] sm:$0x3f] %vm110, %v122
  $region21: #{seq2seq_transformer_forward.50} parent=0 // pred_fallthru
    _
  // Predicated region
  $region22: #{seq2seq_transformer_forward.50} parent=0 // pred_check
    _
  $region23: #{seq2seq_transformer_forward.50} parent=0 // pred_check_branch
    %126 = sbr.rel (0) target = $region25
  $region24: #{seq2seq_transformer_forward.50} parent=0 // pred_region
    _
  $region25: #{seq2seq_transformer_forward.50} parent=0 // pred_fallthru
    _
  // Predicated region
  $region26: #{seq2seq_transformer_forward.50} parent=0 // pred_check
    _
  $region27: #{seq2seq_transformer_forward.50} parent=0 // pred_check_branch
    %128 = sbr.rel (0) target = $region29
  $region28: #{seq2seq_transformer_forward.50} parent=0 // pred_region
    _
  $region29: #{seq2seq_transformer_forward.50} parent=0 // pred_fallthru
    _

// kernel: seq2seq_transformer_forward.51
$region0: #{seq2seq_transformer_forward.51}
  #allocation0 [shape = 'u32[]', space=smem, size = 0x4, offset = 0x4, fixed_abs, tag = 'smem constant byte address 0x4 - core index']
  #allocation1 [shape = 'u32[72,128]{1,0:T(1,128)}', space=vmem, size = 0x9000, scoped, tag = 'internal scratch']
  %s0 = inlined_call_operand.vmem [shape: f32[2,7,96], index: 0, kind: input, shape index: {}, may-alias: {0,1}]
  %s1 = inlined_call_operand.vmem [shape: f32[2,7,96], index: 1, kind: input, shape index: {}, may-alias: {0,1}]
  %s2 = inlined_call_operand.vmem [shape: f32[7,7], index: 2, kind: input, shape index: {}]
  %s3 = inlined_call_operand.vmem [shape: f32[2,1,7], index: 3, kind: input, shape index: {}]
  %s4 = inlined_call_operand.vmem [shape: f32[2,7,32], index: 4, kind: output, shape index: {}]
  %s5 = sld [smem:[#allocation0]]
  $region49: #{seq2seq_transformer_forward.51} parent=0
    _
  %s7 = ssub.s32 1, %s5
  %s8 = scalar_select 0, %s7, %s5
  loop: start=0, step=1, limit=4
  $region2: #{seq2seq_transformer_forward.51} parent=0 // loop_pre_header
    _
  $region3: #{seq2seq_transformer_forward.51} parent=0 // loop_header
    %s10 = sphi 0, %s14
    %p11 = scmp.ge.s32.totalorder %s10, 4
    %s20 = sphi 0, %s22
    %s23 = sphi 0, %s20
    %s24 = sphi 0, %s23
    %s40 = sphi 0, %s24
    %s46 = sphi 0, %s48
    %s49 = sphi 0, %s46
    %s50 = sphi 0, %s49
    %s66 = sphi 0, %s50
    %s70 = sphi 0, %s70
    %s72 = sphi 0, %s70
    %s73 = sphi 0, %s72
    %s87 = sphi 0, %s73
    %s93 = sphi 0, %s95
    %s96 = sphi 0, %s93
    %s97 = sphi 0, %s96
    %s113 = sphi 0, %s97
    %s119 = sphi 0, %s121
    %s122 = sphi 0, %s119
    %s123 = sphi 0, %s122
    %s139 = sphi 0, %s123
  $region4: #{seq2seq_transformer_forward.51} parent=0 // loop_header_branch
    %13 = sbr.rel (%p11) target = $region8
  $region5: #{seq2seq_transformer_forward.51} parent=0 // loop_body
    %s15 = ssub.s32 %s10, 1
    %s16 = ssub.s32 %s10, 2
    %s17 = sadd.s32 %s10, 1
    %s18 = ssub.s32 %s10, %s17
    %p19 = scmp.eq.s32.totalorder %s18, 0
    %s21 = sadd.s32 %s20, 1
    %s22 = scalar_select %p19, %s20, %s21
    %p25 = pneg %p19
    %p26 = scmp.eq.s32.totalorder %s10, 1
    %p27 = por %p25, %p26
    %p28 = scmp.ne.s32.totalorder %s20, %s23
    %p29 = scmp.eq.s32.totalorder %s10, 0
    %p30 = por %p28, %p29
    %p31 = scmp.ne.s32.totalorder %s20, %s23
    %p32 = scmp.eq.s32.totalorder %s15, 1
    %p33 = por %p31, %p32
    %p34 = scmp.ne.s32.totalorder %s23, %s24
    %p35 = scmp.eq.s32.totalorder %s15, 0
    %p36 = por %p34, %p35
    %p37 = scmp.ne.s32.totalorder %s23, %s24
    %p38 = scmp.eq.s32.totalorder %s16, 1
    %p39 = por %p37, %p38
    %p41 = scmp.ne.s32.totalorder %s24, %s40
    %p42 = scmp.eq.s32.totalorder %s16, 0
    %p43 = por %p41, %p42
    %s44 = ssub.s32 %s10, %s17
    %p45 = scmp.eq.s32.totalorder %s44, 0
    %s47 = sadd.s32 %s46, 1
    %s48 = scalar_select %p45, %s46, %s47
    %p51 = pneg %p45
    %p52 = scmp.eq.s32.totalorder %s10, 1
    %p53 = por %p51, %p52
    %p54 = scmp.ne.s32.totalorder %s46, %s49
    %p55 = scmp.eq.s32.totalorder %s10, 0
    %p56 = por %p54, %p55
    %p57 = scmp.ne.s32.totalorder %s46, %s49
    %p58 = scmp.eq.s32.totalorder %s15, 1
    %p59 = por %p57, %p58
    %p60 = scmp.ne.s32.totalorder %s49, %s50
    %p61 = scmp.eq.s32.totalorder %s15, 0
    %p62 = por %p60, %p61
    %p63 = scmp.ne.s32.totalorder %s49, %s50
    %p64 = scmp.eq.s32.totalorder %s16, 1
    %p65 = por %p63, %p64
    %p67 = scmp.ne.s32.totalorder %s50, %s66
    %p68 = scmp.eq.s32.totalorder %s16, 0
    %p69 = por %p67, %p68
    %s71 = sadd.s32 %s70, 1
    %p74 = scmp.eq.s32.totalorder %s10, 1
    %p75 = scmp.ne.s32.totalorder %s70, %s72
    %p76 = scmp.eq.s32.totalorder %s10, 0
    %p77 = por %p75, %p76
    %p78 = scmp.ne.s32.totalorder %s70, %s72
    %p79 = scmp.eq.s32.totalorder %s15, 1
    %p80 = por %p78, %p79
    %p81 = scmp.ne.s32.totalorder %s72, %s73
    %p82 = scmp.eq.s32.totalorder %s15, 0
    %p83 = por %p81, %p82
    %p84 = scmp.ne.s32.totalorder %s72, %s73
    %p85 = scmp.eq.s32.totalorder %s16, 1
    %p86 = por %p84, %p85
    %p88 = scmp.ne.s32.totalorder %s73, %s87
    %p89 = scmp.eq.s32.totalorder %s16, 0
    %p90 = por %p88, %p89
    %s91 = ssub.s32 %s10, %s17
    %p92 = scmp.eq.s32.totalorder %s91, 0
    %s94 = sadd.s32 %s93, 1
    %s95 = scalar_select %p92, %s93, %s94
    %p98 = pneg %p92
    %p99 = scmp.eq.s32.totalorder %s10, 1
    %p100 = por %p98, %p99
    %p101 = scmp.ne.s32.totalorder %s93, %s96
    %p102 = scmp.eq.s32.totalorder %s10, 0
    %p103 = por %p101, %p102
    %p104 = scmp.ne.s32.totalorder %s93, %s96
    %p105 = scmp.eq.s32.totalorder %s15, 1
    %p106 = por %p104, %p105
    %p107 = scmp.ne.s32.totalorder %s96, %s97
    %p108 = scmp.eq.s32.totalorder %s15, 0
    %p109 = por %p107, %p108
    %p110 = scmp.ne.s32.totalorder %s96, %s97
    %p111 = scmp.eq.s32.totalorder %s16, 1
    %p112 = por %p110, %p111
    %p114 = scmp.ne.s32.totalorder %s97, %s113
    %p115 = scmp.eq.s32.totalorder %s16, 0
    %p116 = por %p114, %p115
    %s117 = ssub.s32 %s10, %s17
    %p118 = scmp.eq.s32.totalorder %s117, 0
    %s120 = sadd.s32 %s119, 1
    %s121 = scalar_select %p118, %s119, %s120
    %p124 = pneg %p118
    %p125 = scmp.eq.s32.totalorder %s10, 1
    %p126 = por %p124, %p125
    %p127 = scmp.ne.s32.totalorder %s119, %s122
    %p128 = scmp.eq.s32.totalorder %s10, 0
    %p129 = por %p127, %p128
    %p130 = scmp.ne.s32.totalorder %s119, %s122
    %p131 = scmp.eq.s32.totalorder %s15, 1
    %p132 = por %p130, %p131
    %p133 = scmp.ne.s32.totalorder %s122, %s123
    %p134 = scmp.eq.s32.totalorder %s15, 0
    %p135 = por %p133, %p134
    %p136 = scmp.ne.s32.totalorder %s122, %s123
    %p137 = scmp.eq.s32.totalorder %s16, 1
    %p138 = por %p136, %p137
    %p140 = scmp.ne.s32.totalorder %s123, %s139
    %p141 = scmp.eq.s32.totalorder %s16, 0
    %p142 = por %p140, %p141
    %p143 = scmp.le.s32.totalorder 1, %s10
    %p144 = scmp.lt.s32.totalorder %s10, 3
    %p145 = pnand %p143, %p144
    %p146 = pneg %p145
    // Predicated region
    $region9: #{seq2seq_transformer_forward.51} parent=5 // pred_check
      _
    $region10: #{seq2seq_transformer_forward.51} parent=5 // pred_check_branch
      %148 = sbr.rel (%p145) target = $region12
    $region11: #{seq2seq_transformer_forward.51} parent=5 // pred_region
      %s149 = ssub.s32 %s10, 1
      // Predicated region
      $region13: #{seq2seq_transformer_forward.51} parent=11 // pred_check
        %p150 = pneg %p83
      $region14: #{seq2seq_transformer_forward.51} parent=11 // pred_check_branch
        %152 = sbr.rel (%p150) target = $region16
      $region15: #{seq2seq_transformer_forward.51} parent=11 // pred_region
        _
      $region16: #{seq2seq_transformer_forward.51} parent=11 // pred_fallthru
        _
    $region12: #{seq2seq_transformer_forward.51} parent=5 // pred_fallthru
      _
    %p153 = scmp.lt.s32.totalorder %s10, 2
    // Predicated region
    $region17: #{seq2seq_transformer_forward.51} parent=5 // pred_check
      %p154 = pneg %p153
    $region18: #{seq2seq_transformer_forward.51} parent=5 // pred_check_branch
      %156 = sbr.rel (%p154) target = $region20
    $region19: #{seq2seq_transformer_forward.51} parent=5 // pred_region
      // Predicated region
      $region21: #{seq2seq_transformer_forward.51} parent=19 // pred_check
        %p157 = pneg %p30
      $region22: #{seq2seq_transformer_forward.51} parent=19 // pred_check_branch
        %159 = sbr.rel (%p157) target = $region24
      $region23: #{seq2seq_transformer_forward.51} parent=19 // pred_region
        %p160 = scmp.lt.s32.totalorder %s10, 1
        %s161 = scalar_select %p160, %s10, 1
        %s162 = smul.addr %s161, 8
        %s163 = scalar_lea.vmem %s0, %s162
      $region24: #{seq2seq_transformer_forward.51} parent=19 // pred_fallthru
        _
      // Predicated region
      $region25: #{seq2seq_transformer_forward.51} parent=19 // pred_check
        %p164 = pneg %p56
      $region26: #{seq2seq_transformer_forward.51} parent=19 // pred_check_branch
        %166 = sbr.rel (%p164) target = $region28
      $region27: #{seq2seq_transformer_forward.51} parent=19 // pred_region
        %p167 = scmp.lt.s32.totalorder %s10, 1
        %s168 = scalar_select %p167, %s10, 1
        %s169 = smul.addr %s168, 8
        %s170 = scalar_lea.vmem %s1, %s169
      $region28: #{seq2seq_transformer_forward.51} parent=19 // pred_fallthru
        _
      // Predicated region
      $region29: #{seq2seq_transformer_forward.51} parent=19 // pred_check
        %p171 = pneg %p103
      $region30: #{seq2seq_transformer_forward.51} parent=19 // pred_check_branch
        %173 = sbr.rel (%p171) target = $region32
      $region31: #{seq2seq_transformer_forward.51} parent=19 // pred_region
        %p174 = scmp.lt.s32.totalorder %s10, 1
        %s175 = scalar_select %p174, %s10, 1
        %s176 = scalar_lea.vmem %s3, %s175
      $region32: #{seq2seq_transformer_forward.51} parent=19 // pred_fallthru
        _
    $region20: #{seq2seq_transformer_forward.51} parent=5 // pred_fallthru
      _
    %p177 = scmp.le.s32.totalorder 1, %s10
    %p178 = scmp.lt.s32.totalorder %s10, 3
    %p179 = pnand %p177, %p178
    %p180 = pneg %p179
    // Predicated region
    $region33: #{seq2seq_transformer_forward.51} parent=5 // pred_check
      _
    $region34: #{seq2seq_transformer_forward.51} parent=5 // pred_check_branch
      %182 = sbr.rel (%p179) target = $region36
    $region35: #{seq2seq_transformer_forward.51} parent=5 // pred_region
      %s183 = ssub.s32 %s10, 1
      %p184 = scmp.lt.s32.totalorder %s15, 1
      %s185 = scalar_select %p184, %s15, 1
      %s186 = smul.addr %s185, 8
      %s187 = scalar_lea.vmem %s0, %s186
      %p188 = pneg %p36
      %p189 = pneg %p33
      %p190 = scmp.lt.s32.totalorder %s15, 1
      %s191 = scalar_select %p190, %s15, 1
      %s192 = smul.addr %s191, 8
      %s193 = scalar_lea.vmem %s1, %s192
      %p194 = pneg %p62
      %p195 = pneg %p59
      %p196 = pneg %p83
      %p197 = pneg %p80
      %p198 = scmp.lt.s32.totalorder %s15, 1
      %s199 = scalar_select %p198, %s15, 1
      %s200 = scalar_lea.vmem %s3, %s199
      %p201 = pneg %p109
      %p202 = pneg %p106
      %p203 = pneg %p135
      %p204 = pneg %p132
      %p205 = scmp.lt.s32.totalorder %s15, 1
      %s206 = scalar_select %p205, %s15, 1
      %s207 = smul.addr %s206, 8
      %s208 = scalar_lea.vmem %s4, %s207
      %p209 = scmp.lt.s32.totalorder %s15, 1
      %s210 = scalar_select %p209, %s15, 1
      %s211 = smul.addr %s210, 8
      %s212 = scalar_lea.vmem %s0, %s211
      %p213 = scmp.lt.s32.totalorder %s15, 1
      %s214 = scalar_select %p213, %s15, 1
      %s215 = smul.addr %s214, 8
      %s216 = scalar_lea.vmem %s1, %s215
      %p217 = scmp.lt.s32.totalorder %s15, 1
      %s218 = scalar_select %p217, %s15, 1
      %s219 = scalar_lea.vmem %s3, %s218
      %p220 = scmp.lt.s32.totalorder %s15, 1
      %s221 = scalar_select %p220, %s15, 1
      %s222 = smul.addr %s221, 8
      %s223 = scalar_lea.vmem %s4, %s222
      %v225 = vld [vmem:[%s2] sm:$0x7f]
      %v226 = vmax.f32 %v225, -1e+30
      %v227 = vld [vmem:[%s219] sm:$0x1]
      %v229 = vperm.slane %v227, 0
      %v231 = vadd.f32 %v226, %v229
      %v232 = vld [vmem:[%s212] sm:$0x7f]
      %v233 = vpack.c.bf16 %v232, %v232
      %v234 = vld [vmem:[%s216] sm:$0x7f]
      %v235 = vpack.c.bf16 %v234, %v234
      %237 = vrot.lane.b32.xlu0 %v235, 96
      %v238 = vpop.permute.xlu0 %237
      %vm239 = vcmask 64512
      %v241 = vsel %vm239, %v233, 0
      %v244 = vsel %vm239, %v238, 0
      %246 = vmatpush.bf16.xpose.msra.mxu0 0
      %247 = vmatpush.bf16.xpose.msra.mxu0 0
      %248 = vmatpush.bf16.xpose.msra.mxu0 0
      %249 = vmatpush.bf16.xpose.msra.mxu0 0
      %250 = vmatpush.bf16.xpose.msra.mxu0 0
      %251 = vmatpush.bf16.xpose.msra.mxu0 0
      %252 = vmatpush.bf16.xpose.msra.mxu0 0
      %253 = vmatpush.bf16.xpose.msra.mxu0 %v244
      %254 = vmatmul.bf16.gmra.mxu0 %v241
      %v255 = vpop.f32.mrf.mxu0
      %v256 = vadd.f32 0.0, %v255
      %v257 = vpop.f32.mrf.mxu0
      %258 = vdwg.mxu0
      %v259 = vmul.f32 %v256, 0.35355338
      %v260 = vadd.f32 %v259, %v231
      %vm261 = vcmask 55296
      %v262 = vsel %vm261, %v260, -inf
      %263 = vmax.xlane.f32.xlu0 %v262
      %v264 = vpop.xlane.xlu0 %263
      %v265 = vsub.f32 %v260, %v264
      %v266 = vmul.f32 %v265, 1.442695
      %v267 = vpow.pop %v266
      %v268 = vsel %vm261, %v267, 0.0
      %269 = vadd.xlane.f32.xlu0 %v268
      %v270 = vpop.xlane.xlu0 %269
      %v271 = vrcp.pop %v270
      %v272 = vmul.f32 %v267, %v271
      %v273 = vpack.c.bf16 %v272, %v272
      %274 = vrot.lane.b32.xlu0 %v235, 64
      %v275 = vpop.permute.xlu0 %274
      %vm276 = vcmask 56320
      %v278 = vsel %vm276, %v273, 0
      %vm280 = vcmask 1042432
      %vm281 = vcmask 1043456
      %v282 = vsel %vm280, 4294967295, 65535
      %v283 = vsel %vm281, %v282, 0
      %v285 = vand.u32 %v275, %v283
      %287 = vmatpush.bf16.msra.mxu0 0
      %288 = vmatpush.bf16.msra.mxu0 0
      %289 = vmatpush.bf16.msra.mxu0 0
      %290 = vmatpush.bf16.msra.mxu0 0
      %291 = vmatpush.bf16.msra.mxu0 0
      %292 = vmatpush.bf16.msra.mxu0 0
      %293 = vmatpush.bf16.msra.mxu0 0
      %294 = vmatpush.bf16.msra.mxu0 %v285
      %295 = vmatmul.bf16.gmra.mxu0 %v278
      %v296 = vpop.f32.mrf.mxu0
      %v297 = vadd.f32 0.0, %v296
      %v298 = vpop.f32.mrf.mxu0
      %299 = vdwg.mxu0
      %vm300 = vcmask 63488
      %301 = vst.msk [vmem:[%s223] sm:$0x7f] %vm300, %v297
      %v302 = vld [vmem:[%s212] sm:$0x7f]
      %v303 = vpack.c.bf16 %v302, %v302
      %v304 = vld [vmem:[%s216] sm:$0x7f]
      %v305 = vpack.c.bf16 %v304, %v304
      %307 = vrot.lane.b32.xlu0 %v303, 120
      %v308 = vpop.permute.xlu0 %307
      %310 = vrot.lane.b32.xlu0 %v305, 88
      %v311 = vpop.permute.xlu0 %310
      %v313 = vsel %vm239, %v308, 0
      %v316 = vsel %vm239, %v311, 0
      %318 = vmatpush.bf16.xpose.msra.mxu0 0
      %319 = vmatpush.bf16.xpose.msra.mxu0 0
      %320 = vmatpush.bf16.xpose.msra.mxu0 0
      %321 = vmatpush.bf16.xpose.msra.mxu0 0
      %322 = vmatpush.bf16.xpose.msra.mxu0 0
      %323 = vmatpush.bf16.xpose.msra.mxu0 0
      %324 = vmatpush.bf16.xpose.msra.mxu0 0
      %325 = vmatpush.bf16.xpose.msra.mxu0 %v316
      %326 = vmatmul.bf16.gmra.mxu0 %v313
      %v327 = vpop.f32.mrf.mxu0
      %v328 = vadd.f32 0.0, %v327
      %v329 = vpop.f32.mrf.mxu0
      %330 = vdwg.mxu0
      %v331 = vmul.f32 %v328, 0.35355338
      %v332 = vadd.f32 %v331, %v231
      %v333 = vsel %vm261, %v332, -inf
      %334 = vmax.xlane.f32.xlu0 %v333
      %v335 = vpop.xlane.xlu0 %334
      %v336 = vsub.f32 %v332, %v335
      %v337 = vmul.f32 %v336, 1.442695
      %v338 = vpow.pop %v337
      %v339 = vsel %vm261, %v338, 0.0
      %340 = vadd.xlane.f32.xlu0 %v339
      %v341 = vpop.xlane.xlu0 %340
      %v342 = vrcp.pop %v341
      %v343 = vmul.f32 %v338, %v342
      %v344 = vpack.c.bf16 %v343, %v343
      %345 = vrot.lane.b32.xlu0 %v305, 56
      %v346 = vpop.permute.xlu0 %345
      %v348 = vsel %vm276, %v344, 0
      %v351 = vand.u32 %v346, %v283
      %353 = vmatpush.bf16.msra.mxu0 0
      %354 = vmatpush.bf16.msra.mxu0 0
      %355 = vmatpush.bf16.msra.mxu0 0
      %356 = vmatpush.bf16.msra.mxu0 0
      %357 = vmatpush.bf16.msra.mxu0 0
      %358 = vmatpush.bf16.msra.mxu0 0
      %359 = vmatpush.bf16.msra.mxu0 0
      %360 = vmatpush.bf16.msra.mxu0 %v351
      %361 = vmatmul.bf16.gmra.mxu0 %v348
      %v362 = vpop.f32.mrf.mxu0
      %v363 = vadd.f32 0.0, %v362
      %v364 = vpop.f32.mrf.mxu0
      %365 = vdwg.mxu0
      %367 = vrot.lane.b32.xlu0 %v363, 8
      %v368 = vpop.permute.xlu0 %367
      %vm370 = vcmask 129088
      %371 = vst.msk [vmem:[%s223] sm:$0x7f] %vm370, %v368
      %v372 = vld [vmem:[%s212] sm:$0x7f]
      %v373 = vpack.c.bf16 %v372, %v372
      %v374 = vld [vmem:[%s216] sm:$0x7f]
      %v375 = vpack.c.bf16 %v374, %v374
      %377 = vrot.lane.b32.xlu0 %v373, 112
      %v378 = vpop.permute.xlu0 %377
      %380 = vrot.lane.b32.xlu0 %v375, 80
      %v381 = vpop.permute.xlu0 %380
      %v383 = vsel %vm239, %v378, 0
      %v386 = vsel %vm239, %v381, 0
      %388 = vmatpush.bf16.xpose.msra.mxu0 0
      %389 = vmatpush.bf16.xpose.msra.mxu0 0
      %390 = vmatpush.bf16.xpose.msra.mxu0 0
      %391 = vmatpush.bf16.xpose.msra.mxu0 0
      %392 = vmatpush.bf16.xpose.msra.mxu0 0
      %393 = vmatpush.bf16.xpose.msra.mxu0 0
      %394 = vmatpush.bf16.xpose.msra.mxu0 0
      %395 = vmatpush.bf16.xpose.msra.mxu0 %v386
      %396 = vmatmul.bf16.gmra.mxu0 %v383
      %v397 = vpop.f32.mrf.mxu0
      %v398 = vadd.f32 0.0, %v397
      %v399 = vpop.f32.mrf.mxu0
      %400 = vdwg.mxu0
      %v401 = vmul.f32 %v398, 0.35355338
      %v402 = vadd.f32 %v401, %v231
      %v403 = vsel %vm261, %v402, -inf
      %404 = vmax.xlane.f32.xlu0 %v403
      %v405 = vpop.xlane.xlu0 %404
      %v406 = vsub.f32 %v402, %v405
      %v407 = vmul.f32 %v406, 1.442695
      %v408 = vpow.pop %v407
      %v409 = vsel %vm261, %v408, 0.0
      %410 = vadd.xlane.f32.xlu0 %v409
      %v411 = vpop.xlane.xlu0 %410
      %v412 = vrcp.pop %v411
      %v413 = vmul.f32 %v408, %v412
      %v414 = vpack.c.bf16 %v413, %v413
      %415 = vrot.lane.b32.xlu0 %v375, 48
      %v416 = vpop.permute.xlu0 %415
      %v418 = vsel %vm276, %v414, 0
      %v421 = vand.u32 %v416, %v283
      %423 = vmatpush.bf16.msra.mxu0 0
      %424 = vmatpush.bf16.msra.mxu0 0
      %425 = vmatpush.bf16.msra.mxu0 0
      %426 = vmatpush.bf16.msra.mxu0 0
      %427 = vmatpush.bf16.msra.mxu0 0
      %428 = vmatpush.bf16.msra.mxu0 0
      %429 = vmatpush.bf16.msra.mxu0 0
      %430 = vmatpush.bf16.msra.mxu0 %v421
      %431 = vmatmul.bf16.gmra.mxu0 %v418
      %v432 = vpop.f32.mrf.mxu0
      %v433 = vadd.f32 0.0, %v432
      %v434 = vpop.f32.mrf.mxu0
      %435 = vdwg.mxu0
      %437 = vrot.lane.b32.xlu0 %v433, 16
      %v438 = vpop.permute.xlu0 %437
      %vm440 = vcmask 194688
      %441 = vst.msk [vmem:[%s223] sm:$0x7f] %vm440, %v438
      %v442 = vld [vmem:[%s212] sm:$0x7f]
      %v443 = vpack.c.bf16 %v442, %v442
      %v444 = vld [vmem:[%s216] sm:$0x7f]
      %v445 = vpack.c.bf16 %v444, %v444
      %447 = vrot.lane.b32.xlu0 %v443, 104
      %v448 = vpop.permute.xlu0 %447
      %450 = vrot.lane.b32.xlu0 %v445, 72
      %v451 = vpop.permute.xlu0 %450
      %v453 = vsel %vm239, %v448, 0
      %v456 = vsel %vm239, %v451, 0
      %458 = vmatpush.bf16.xpose.msra.mxu0 0
      %459 = vmatpush.bf16.xpose.msra.mxu0 0
      %460 = vmatpush.bf16.xpose.msra.mxu0 0
      %461 = vmatpush.bf16.xpose.msra.mxu0 0
      %462 = vmatpush.bf16.xpose.msra.mxu0 0
      %463 = vmatpush.bf16.xpose.msra.mxu0 0
      %464 = vmatpush.bf16.xpose.msra.mxu0 0
      %465 = vmatpush.bf16.xpose.msra.mxu0 %v456
      %466 = vmatmul.bf16.gmra.mxu0 %v453
      %v467 = vpop.f32.mrf.mxu0
      %v468 = vadd.f32 0.0, %v467
      %v469 = vpop.f32.mrf.mxu0
      %470 = vdwg.mxu0
      %v471 = vmul.f32 %v468, 0.35355338
      %v472 = vadd.f32 %v471, %v231
      %v473 = vsel %vm261, %v472, -inf
      %474 = vmax.xlane.f32.xlu0 %v473
      %v475 = vpop.xlane.xlu0 %474
      %v476 = vsub.f32 %v472, %v475
      %v477 = vmul.f32 %v476, 1.442695
      %v478 = vpow.pop %v477
      %v479 = vsel %vm261, %v478, 0.0
      %480 = vadd.xlane.f32.xlu0 %v479
      %v481 = vpop.xlane.xlu0 %480
      %v482 = vrcp.pop %v481
      %v483 = vmul.f32 %v478, %v482
      %v484 = vpack.c.bf16 %v483, %v483
      %485 = vrot.lane.b32.xlu0 %v445, 40
      %v486 = vpop.permute.xlu0 %485
      %v488 = vsel %vm276, %v484, 0
      %v491 = vand.u32 %v486, %v283
      %493 = vmatpush.bf16.msra.mxu0 0
      %494 = vmatpush.bf16.msra.mxu0 0
      %495 = vmatpush.bf16.msra.mxu0 0
      %496 = vmatpush.bf16.msra.mxu0 0
      %497 = vmatpush.bf16.msra.mxu0 0
      %498 = vmatpush.bf16.msra.mxu0 0
      %499 = vmatpush.bf16.msra.mxu0 0
      %500 = vmatpush.bf16.msra.mxu0 %v491
      %501 = vmatmul.bf16.gmra.mxu0 %v488
      %v502 = vpop.f32.mrf.mxu0
      %v503 = vadd.f32 0.0, %v502
      %v504 = vpop.f32.mrf.mxu0
      %505 = vdwg.mxu0
      %507 = vrot.lane.b32.xlu0 %v503, 24
      %v508 = vpop.permute.xlu0 %507
      %vm510 = vcmask 260288
      %511 = vst.msk [vmem:[%s223] sm:$0x7f] %vm510, %v508
      %p512 = scmp.lt.s32.totalorder %s15, 1
      %s513 = scalar_select %p512, %s15, 1
      %s514 = smul.addr %s513, 8
      %s515 = scalar_lea.vmem %s4, %s514
      // Predicated region
      $region37: #{seq2seq_transformer_forward.51} parent=35 // pred_check
        %p516 = pneg %p132
      $region38: #{seq2seq_transformer_forward.51} parent=35 // pred_check_branch
        %518 = sbr.rel (%p516) target = $region40
      $region39: #{seq2seq_transformer_forward.51} parent=35 // pred_region
        _
      $region40: #{seq2seq_transformer_forward.51} parent=35 // pred_fallthru
        _
    $region36: #{seq2seq_transformer_forward.51} parent=5 // pred_fallthru
      _
    %p519 = scmp.le.s32.totalorder 2, %s10
    // Predicated region
    $region41: #{seq2seq_transformer_forward.51} parent=5 // pred_check
      %p520 = pneg %p519
    $region42: #{seq2seq_transformer_forward.51} parent=5 // pred_check_branch
      %522 = sbr.rel (%p520) target = $region44
    $region43: #{seq2seq_transformer_forward.51} parent=5 // pred_region
      %s523 = ssub.s32 %s10, 2
      // Predicated region
      $region45: #{seq2seq_transformer_forward.51} parent=43 // pred_check
        %p524 = pneg %p138
      $region46: #{seq2seq_transformer_forward.51} parent=43 // pred_check_branch
        %526 = sbr.rel (%p524) target = $region48
      $region47: #{seq2seq_transformer_forward.51} parent=43 // pred_region
        %p527 = scmp.lt.s32.totalorder %s16, 1
        %s528 = scalar_select %p527, %s16, 1
        %s529 = smul.addr %s528, 8
        %s530 = scalar_lea.vmem %s4, %s529
      $region48: #{seq2seq_transformer_forward.51} parent=43 // pred_fallthru
        _
    $region44: #{seq2seq_transformer_forward.51} parent=5 // pred_fallthru
      _
  $region6: #{seq2seq_transformer_forward.51} parent=0 // loop_footer
    %s14 = sadd.s32 1, %s10
  $region7: #{seq2seq_transformer_forward.51} parent=0 // loop_footer_branch
    %9 = sbr.rel target = $region3
  $region8: #{seq2seq_transformer_forward.51} parent=0 // loop_exit
    _

// kernel: seq2seq_transformer_forward.40
$region0: #{seq2seq_transformer_forward.40}
  #allocation0 [shape = 'u32[]', space=smem, size = 0x4, offset = 0x4, fixed_abs, tag = 'smem constant byte address 0x4 - core index']
  #allocation1 [shape = 'u32[72,128]{1,0:T(1,128)}', space=vmem, size = 0x9000, scoped, tag = 'internal scratch']
  %s0 = inlined_call_operand.vmem [shape: f32[16,32], index: 0, kind: input, shape index: {}]
  %s1 = inlined_call_operand.vmem [shape: f32[16,32], index: 1, kind: input, shape index: {}]
  %s2 = inlined_call_operand.vmem [shape: f32[1,32], index: 2, kind: input, shape index: {}]
  %s3 = inlined_call_operand.vmem [shape: f32[1,32], index: 3, kind: input, shape index: {}]
  %s4 = inlined_call_operand.vmem [shape: f32[16,32], index: 4, kind: output, shape index: {}]
  %s5 = sld [smem:[#allocation0]]
  $region26: #{seq2seq_transformer_forward.40} parent=0
    _
  %s7 = ssub.s32 1, %s5
  %s8 = scalar_select 0, %s7, %s5
  // Predicated region
  $region2: #{seq2seq_transformer_forward.40} parent=0 // pred_check
    _
  $region3: #{seq2seq_transformer_forward.40} parent=0 // pred_check_branch
    %10 = sbr.rel (0) target = $region5
  $region4: #{seq2seq_transformer_forward.40} parent=0 // pred_region
    _
  $region5: #{seq2seq_transformer_forward.40} parent=0 // pred_fallthru
    _
  // Predicated region
  $region6: #{seq2seq_transformer_forward.40} parent=0 // pred_check
    _
  $region7: #{seq2seq_transformer_forward.40} parent=0 // pred_check_branch
    %12 = sbr.rel (0) target = $region9
  $region8: #{seq2seq_transformer_forward.40} parent=0 // pred_region
    _
  $region9: #{seq2seq_transformer_forward.40} parent=0 // pred_fallthru
    _
  // Predicated region
  $region10: #{seq2seq_transformer_forward.40} parent=0 // pred_check
    _
  $region11: #{seq2seq_transformer_forward.40} parent=0 // pred_check_branch
    %14 = sbr.rel (0) target = $region13
  $region12: #{seq2seq_transformer_forward.40} parent=0 // pred_region
    _
  $region13: #{seq2seq_transformer_forward.40} parent=0 // pred_fallthru
    _
  // Predicated region
  $region14: #{seq2seq_transformer_forward.40} parent=0 // pred_check
    _
  $region15: #{seq2seq_transformer_forward.40} parent=0 // pred_check_branch
    %16 = sbr.rel (0) target = $region17
  $region16: #{seq2seq_transformer_forward.40} parent=0 // pred_region
    _
  $region17: #{seq2seq_transformer_forward.40} parent=0 // pred_fallthru
    _
  %v17 = vld [vmem:[%s0] sm:$0xff]
  %v18 = vld [vmem:[%s0 + $0x8] sm:$0xff]
  %v19 = vld [vmem:[%s1] sm:$0xff]
  %v20 = vld [vmem:[%s1 + $0x8] sm:$0xff]
  %v21 = vadd.f32 %v17, %v19
  %v22 = vadd.f32 %v18, %v20
  %v23 = vld [vmem:[%s2] sm:$0x1]
  %v24 = vld [vmem:[%s3] sm:$0x1]
  %vm25 = vcmask 261120
  %v26 = vsel %vm25, %v21, 0.0
  %27 = vadd.xlane.f32.xlu0 %v26
  %v28 = vpop.xlane.xlu0 %27
  %v29 = vsel %vm25, %v22, 0.0
  %30 = vadd.xlane.f32.xlu0 %v29
  %v31 = vpop.xlane.xlu0 %30
  %v32 = vrcp.pop 32.0
  %v33 = vmul.f32 32.0, %v32
  %v34 = vsub.f32 1.0, %v33
  %v35 = vmul.f32 %v32, %v34
  %v36 = vadd.f32 %v32, %v35
  %vm37 = vweird.f32 %v32
  %v38 = vsel %vm37, %v32, %v36
  %v39 = vmul.f32 %v28, %v38
  %v40 = vmul.f32 %v31, %v38
  %v41 = vsub.f32 %v21, %v39
  %v42 = vsub.f32 %v22, %v40
  %v43 = vmul.f32 %v41, %v41
  %v44 = vmul.f32 %v42, %v42
  %v45 = vsel %vm25, %v43, 0.0
  %46 = vadd.xlane.f32.xlu0 %v45
  %v47 = vpop.xlane.xlu0 %46
  %v48 = vsel %vm25, %v44, 0.0
  %49 = vadd.xlane.f32.xlu0 %v48
  %v50 = vpop.xlane.xlu0 %49
  %v51 = vmul.f32 %v47, %v38
  %v52 = vmul.f32 %v50, %v38
  %v53 = vadd.f32 %v51, 1e-05
  %v54 = vadd.f32 %v52, 1e-05
  %v55 = vrsqrt.pop %v53
  %v56 = vmul.f32 %v55, %v53
  %v57 = vmul.f32 %v56, %v55
  %v58 = vmul.f32 0.5, %v57
  %v59 = vsub.f32 1.5, %v58
  %v60 = vmul.f32 %v55, %v59
  %vm61 = vweird.f32 %v53
  %vm62 = vweird.f32 %v55
  %vm63 = vmor %vm61, %vm62
  %v64 = vsel %vm63, %v55, %v60
  %v65 = vrsqrt.pop %v54
  %v66 = vmul.f32 %v65, %v54
  %v67 = vmul.f32 %v66, %v65
  %v68 = vmul.f32 0.5, %v67
  %v69 = vsub.f32 1.5, %v68
  %v70 = vmul.f32 %v65, %v69
  %vm71 = vweird.f32 %v54
  %vm72 = vweird.f32 %v65
  %vm73 = vmor %vm71, %vm72
  %v74 = vsel %vm73, %v65, %v70
  %v75 = vmul.f32 %v41, %v64
  %v76 = vmul.f32 %v42, %v74
  %v78 = vperm.slane %v23, 0
  %v80 = vmul.f32 %v75, %v78
  %v81 = vmul.f32 %v76, %v78
  %v83 = vperm.slane %v24, 0
  %v85 = vadd.f32 %v80, %v83
  %v86 = vadd.f32 %v81, %v83
  %87 = vst.msk [vmem:[%s4] sm:$0xff] %vm25, %v85
  %88 = vst.msk [vmem:[%s4 + $0x8] sm:$0xff] %vm25, %v86
  // Predicated region
  $region18: #{seq2seq_transformer_forward.40} parent=0 // pred_check
    _
  $region19: #{seq2seq_transformer_forward.40} parent=0 // pred_check_branch
    %90 = sbr.rel (0) target = $region21
  $region20: #{seq2seq_transformer_forward.40} parent=0 // pred_region
    _
  $region21: #{seq2seq_transformer_forward.40} parent=0 // pred_fallthru
    _
  // Predicated region
  $region22: #{seq2seq_transformer_forward.40} parent=0 // pred_check
    _
  $region23: #{seq2seq_transformer_forward.40} parent=0 // pred_check_branch
    %92 = sbr.rel (0) target = $region25
  $region24: #{seq2seq_transformer_forward.40} parent=0 // pred_region
    _
  $region25: #{seq2seq_transformer_forward.40} parent=0 // pred_fallthru
    _

// kernel: seq2seq_transformer_forward.39
$region0: #{seq2seq_transformer_forward.39}
  #allocation0 [shape = 'u32[]', space=smem, size = 0x4, offset = 0x4, fixed_abs, tag = 'smem constant byte address 0x4 - core index']
  #allocation1 [shape = 'u32[72,128]{1,0:T(1,128)}', space=vmem, size = 0x9000, scoped, tag = 'internal scratch']
  #allocation2 [shape = 'f32[16,32]{1,0:T(8,128)}', space=vmem, size = 0x2000, scoped, tag = 'scratch operand']
  %s0 = inlined_call_operand.vmem [shape: f32[16,32], index: 0, kind: input, shape index: {}]
  %s1 = inlined_call_operand.vmem [shape: bf16[32,32], index: 1, kind: input, shape index: {}]
  %s2 = inlined_call_operand.vmem [shape: f32[1,32], index: 2, kind: input, shape index: {}]
  %s3 = inlined_call_operand.vmem [shape: f32[16,32], index: 3, kind: output, shape index: {}]
  %s4 = sld [smem:[#allocation0]]
  $region30: #{seq2seq_transformer_forward.39} parent=0
    _
  %s6 = ssub.s32 1, %s4
  %s7 = scalar_select 0, %s6, %s4
  // Predicated region
  $region2: #{seq2seq_transformer_forward.39} parent=0 // pred_check
    _
  $region3: #{seq2seq_transformer_forward.39} parent=0 // pred_check_branch
    %9 = sbr.rel (0) target = $region5
  $region4: #{seq2seq_transformer_forward.39} parent=0 // pred_region
    _
  $region5: #{seq2seq_transformer_forward.39} parent=0 // pred_fallthru
    _
  // Predicated region
  $region6: #{seq2seq_transformer_forward.39} parent=0 // pred_check
    _
  $region7: #{seq2seq_transformer_forward.39} parent=0 // pred_check_branch
    %11 = sbr.rel (0) target = $region9
  $region8: #{seq2seq_transformer_forward.39} parent=0 // pred_region
    _
  $region9: #{seq2seq_transformer_forward.39} parent=0 // pred_fallthru
    _
  // Predicated region
  $region10: #{seq2seq_transformer_forward.39} parent=0 // pred_check
    _
  $region11: #{seq2seq_transformer_forward.39} parent=0 // pred_check_branch
    %13 = sbr.rel (0) target = $region13
  $region12: #{seq2seq_transformer_forward.39} parent=0 // pred_region
    _
  $region13: #{seq2seq_transformer_forward.39} parent=0 // pred_fallthru
    _
  %p15 = scmp.eq.s32.totalorder 0, 0
  // Predicated region
  $region14: #{seq2seq_transformer_forward.39} parent=0 // pred_check
    %p16 = pneg %p15
  $region15: #{seq2seq_transformer_forward.39} parent=0 // pred_check_branch
    %18 = sbr.rel (%p16) target = $region17
  $region16: #{seq2seq_transformer_forward.39} parent=0 // pred_region
    %vm19 = vcmask 261120
    %20 = vst.msk [vmem:[#allocation2] sm:$0xff] %vm19, 0.0
    %21 = vst.msk [vmem:[#allocation2 + $0x8] sm:$0xff] %vm19, 0.0
  $region17: #{seq2seq_transformer_forward.39} parent=0 // pred_fallthru
    _
  %v22 = vld [vmem:[%s0] sm:$0xff]
  %v23 = vld [vmem:[%s0 + $0x8] sm:$0xff]
  %v24 = vpack.c.bf16 %v23, %v22
  %v25 = vld [vmem:[%s1] sm:$0xf]
  %v26 = vld [vmem:[%s1 + $0x4] sm:$0xf]
  %v27 = vld [vmem:[%s1 + $0x8] sm:$0xf]
  %v28 = vld [vmem:[%s1 + $0xc] sm:$0xf]
  %v29 = vld [vmem:[#allocation2] sm:$0xff]
  %v30 = vld [vmem:[#allocation2 + $0x8] sm:$0xff]
  %v35 = vunpack.c.l.b16 %v25
  %v36 = vunpack.c.l.b16 %v26
  %v37 = vunpack.c.l.b16 %v27
  %v38 = vunpack.c.l.b16 %v28
  %v39 = vpack.c.b16 %v36, %v35
  %v40 = vpack.c.b16 %v38, %v37
  %vm41 = vcmask 261120
  %v43 = vsel %vm41, %v24, 0
  %v46 = vsel %vm41, %v39, 0
  %v49 = vsel %vm41, %v40, 0
  %51 = vmatpush.bf16.xpose.msra.mxu0 0
  %52 = vmatpush.bf16.xpose.msra.mxu0 0
  %53 = vmatpush.bf16.xpose.msra.mxu0 0
  %54 = vmatpush.bf16.xpose.msra.mxu0 0
  %55 = vmatpush.bf16.xpose.msra.mxu0 0
  %56 = vmatpush.bf16.xpose.msra.mxu0 0
  %57 = vmatpush.bf16.xpose.msra.mxu0 %v49
  %58 = vmatpush.bf16.xpose.msra.mxu0 %v46
  %59 = vmatmul.bf16.gmra.mxu0 %v43
  %v60 = vpop.f32.mrf.mxu0
  %v61 = vadd.f32 0.0, %v60
  %v62 = vpop.f32.mrf.mxu0
  %v63 = vadd.f32 0.0, %v62
  %64 = vdwg.mxu0
  %v65 = vadd.f32 %v29, %v61
  %v66 = vadd.f32 %v30, %v63
  %67 = vst.msk [vmem:[#allocation2] sm:$0xff] %vm41, %v65
  %68 = vst.msk [vmem:[#allocation2 + $0x8] sm:$0xff] %vm41, %v66
  // Predicated region
  $region18: #{seq2seq_transformer_forward.39} parent=0 // pred_check
    %p69 = pneg %p15
  $region19: #{seq2seq_transformer_forward.39} parent=0 // pred_check_branch
    %71 = sbr.rel (%p69) target = $region21
  $region20: #{seq2seq_transformer_forward.39} parent=0 // pred_region
    %v72 = vld [vmem:[#allocation2] sm:$0xff]
    %v73 = vld [vmem:[#allocation2 + $0x8] sm:$0xff]
    %v74 = vld [vmem:[%s2] sm:$0x1]
    %v76 = vperm.slane %v74, 0
    %v78 = vadd.f32 %v72, %v76
    %v79 = vadd.f32 %v73, %v76
    %80 = vst.msk [vmem:[%s3] sm:$0xff] %vm41, %v78
    %81 = vst.msk [vmem:[%s3 + $0x8] sm:$0xff] %vm41, %v79
  $region21: #{seq2seq_transformer_forward.39} parent=0 // pred_fallthru
    _
  // Predicated region
  $region22: #{seq2seq_transformer_forward.39} parent=0 // pred_check
    _
  $region23: #{seq2seq_transformer_forward.39} parent=0 // pred_check_branch
    %83 = sbr.rel (0) target = $region25
  $region24: #{seq2seq_transformer_forward.39} parent=0 // pred_region
    _
  $region25: #{seq2seq_transformer_forward.39} parent=0 // pred_fallthru
    _
  // Predicated region
  $region26: #{seq2seq_transformer_forward.39} parent=0 // pred_check
    _
  $region27: #{seq2seq_transformer_forward.39} parent=0 // pred_check_branch
    %85 = sbr.rel (0) target = $region29
  $region28: #{seq2seq_transformer_forward.39} parent=0 // pred_region
    _
  $region29: #{seq2seq_transformer_forward.39} parent=0 // pred_fallthru
    _

// kernel: seq2seq_transformer_forward.38
$region0: #{seq2seq_transformer_forward.38}
  #allocation0 [shape = 'u32[]', space=smem, size = 0x4, offset = 0x4, fixed_abs, tag = 'smem constant byte address 0x4 - core index']
  #allocation1 [shape = 'u32[72,128]{1,0:T(1,128)}', space=vmem, size = 0x9000, scoped, tag = 'internal scratch']
  %s0 = inlined_call_operand.vmem [shape: f32[2,8,96], index: 0, kind: input, shape index: {}, may-alias: {0,1}]
  %s1 = inlined_call_operand.vmem [shape: f32[2,8,96], index: 1, kind: input, shape index: {}, may-alias: {0,1}]
  %s2 = inlined_call_operand.vmem [shape: f32[8,8], index: 2, kind: input, shape index: {}]
  %s3 = inlined_call_operand.vmem [shape: f32[2,1,8], index: 3, kind: input, shape index: {}]
  %s4 = inlined_call_operand.vmem [shape: f32[2,8,32], index: 4, kind: output, shape index: {}]
  %s5 = sld [smem:[#allocation0]]
  $region49: #{seq2seq_transformer_forward.38} parent=0
    _
  %s7 = ssub.s32 1, %s5
  %s8 = scalar_select 0, %s7, %s5
  loop: start=0, step=1, limit=4
  $region2: #{seq2seq_transformer_forward.38} parent=0 // loop_pre_header
    _
  $region3: #{seq2seq_transformer_forward.38} parent=0 // loop_header
    %s10 = sphi 0, %s14
    %p11 = scmp.ge.s32.totalorder %s10, 4
    %s20 = sphi 0, %s22
    %s23 = sphi 0, %s20
    %s24 = sphi 0, %s23
    %s40 = sphi 0, %s24
    %s46 = sphi 0, %s48
    %s49 = sphi 0, %s46
    %s50 = sphi 0, %s49
    %s66 = sphi 0, %s50
    %s70 = sphi 0, %s70
    %s72 = sphi 0, %s70
    %s73 = sphi 0, %s72
    %s87 = sphi 0, %s73
    %s93 = sphi 0, %s95
    %s96 = sphi 0, %s93
    %s97 = sphi 0, %s96
    %s113 = sphi 0, %s97
    %s119 = sphi 0, %s121
    %s122 = sphi 0, %s119
    %s123 = sphi 0, %s122
    %s139 = sphi 0, %s123
  $region4: #{seq2seq_transformer_forward.38} parent=0 // loop_header_branch
    %13 = sbr.rel (%p11) target = $region8
  $region5: #{seq2seq_transformer_forward.38} parent=0 // loop_body
    %s15 = ssub.s32 %s10, 1
    %s16 = ssub.s32 %s10, 2
    %s17 = sadd.s32 %s10, 1
    %s18 = ssub.s32 %s10, %s17
    %p19 = scmp.eq.s32.totalorder %s18, 0
    %s21 = sadd.s32 %s20, 1
    %s22 = scalar_select %p19, %s20, %s21
    %p25 = pneg %p19
    %p26 = scmp.eq.s32.totalorder %s10, 1
    %p27 = por %p25, %p26
    %p28 = scmp.ne.s32.totalorder %s20, %s23
    %p29 = scmp.eq.s32.totalorder %s10, 0
    %p30 = por %p28, %p29
    %p31 = scmp.ne.s32.totalorder %s20, %s23
    %p32 = scmp.eq.s32.totalorder %s15, 1
    %p33 = por %p31, %p32
    %p34 = scmp.ne.s32.totalorder %s23, %s24
    %p35 = scmp.eq.s32.totalorder %s15, 0
    %p36 = por %p34, %p35
    %p37 = scmp.ne.s32.totalorder %s23, %s24
    %p38 = scmp.eq.s32.totalorder %s16, 1
    %p39 = por %p37, %p38
    %p41 = scmp.ne.s32.totalorder %s24, %s40
    %p42 = scmp.eq.s32.totalorder %s16, 0
    %p43 = por %p41, %p42
    %s44 = ssub.s32 %s10, %s17
    %p45 = scmp.eq.s32.totalorder %s44, 0
    %s47 = sadd.s32 %s46, 1
    %s48 = scalar_select %p45, %s46, %s47
    %p51 = pneg %p45
    %p52 = scmp.eq.s32.totalorder %s10, 1
    %p53 = por %p51, %p52
    %p54 = scmp.ne.s32.totalorder %s46, %s49
    %p55 = scmp.eq.s32.totalorder %s10, 0
    %p56 = por %p54, %p55
    %p57 = scmp.ne.s32.totalorder %s46, %s49
    %p58 = scmp.eq.s32.totalorder %s15, 1
    %p59 = por %p57, %p58
    %p60 = scmp.ne.s32.totalorder %s49, %s50
    %p61 = scmp.eq.s32.totalorder %s15, 0
    %p62 = por %p60, %p61
    %p63 = scmp.ne.s32.totalorder %s49, %s50
    %p64 = scmp.eq.s32.totalorder %s16, 1
    %p65 = por %p63, %p64
    %p67 = scmp.ne.s32.totalorder %s50, %s66
    %p68 = scmp.eq.s32.totalorder %s16, 0
    %p69 = por %p67, %p68
    %s71 = sadd.s32 %s70, 1
    %p74 = scmp.eq.s32.totalorder %s10, 1
    %p75 = scmp.ne.s32.totalorder %s70, %s72
    %p76 = scmp.eq.s32.totalorder %s10, 0
    %p77 = por %p75, %p76
    %p78 = scmp.ne.s32.totalorder %s70, %s72
    %p79 = scmp.eq.s32.totalorder %s15, 1
    %p80 = por %p78, %p79
    %p81 = scmp.ne.s32.totalorder %s72, %s73
    %p82 = scmp.eq.s32.totalorder %s15, 0
    %p83 = por %p81, %p82
    %p84 = scmp.ne.s32.totalorder %s72, %s73
    %p85 = scmp.eq.s32.totalorder %s16, 1
    %p86 = por %p84, %p85
    %p88 = scmp.ne.s32.totalorder %s73, %s87
    %p89 = scmp.eq.s32.totalorder %s16, 0
    %p90 = por %p88, %p89
    %s91 = ssub.s32 %s10, %s17
    %p92 = scmp.eq.s32.totalorder %s91, 0
    %s94 = sadd.s32 %s93, 1
    %s95 = scalar_select %p92, %s93, %s94
    %p98 = pneg %p92
    %p99 = scmp.eq.s32.totalorder %s10, 1
    %p100 = por %p98, %p99
    %p101 = scmp.ne.s32.totalorder %s93, %s96
    %p102 = scmp.eq.s32.totalorder %s10, 0
    %p103 = por %p101, %p102
    %p104 = scmp.ne.s32.totalorder %s93, %s96
    %p105 = scmp.eq.s32.totalorder %s15, 1
    %p106 = por %p104, %p105
    %p107 = scmp.ne.s32.totalorder %s96, %s97
    %p108 = scmp.eq.s32.totalorder %s15, 0
    %p109 = por %p107, %p108
    %p110 = scmp.ne.s32.totalorder %s96, %s97
    %p111 = scmp.eq.s32.totalorder %s16, 1
    %p112 = por %p110, %p111
    %p114 = scmp.ne.s32.totalorder %s97, %s113
    %p115 = scmp.eq.s32.totalorder %s16, 0
    %p116 = por %p114, %p115
    %s117 = ssub.s32 %s10, %s17
    %p118 = scmp.eq.s32.totalorder %s117, 0
    %s120 = sadd.s32 %s119, 1
    %s121 = scalar_select %p118, %s119, %s120
    %p124 = pneg %p118
    %p125 = scmp.eq.s32.totalorder %s10, 1
    %p126 = por %p124, %p125
    %p127 = scmp.ne.s32.totalorder %s119, %s122
    %p128 = scmp.eq.s32.totalorder %s10, 0
    %p129 = por %p127, %p128
    %p130 = scmp.ne.s32.totalorder %s119, %s122
    %p131 = scmp.eq.s32.totalorder %s15, 1
    %p132 = por %p130, %p131
    %p133 = scmp.ne.s32.totalorder %s122, %s123
    %p134 = scmp.eq.s32.totalorder %s15, 0
    %p135 = por %p133, %p134
    %p136 = scmp.ne.s32.totalorder %s122, %s123
    %p137 = scmp.eq.s32.totalorder %s16, 1
    %p138 = por %p136, %p137
    %p140 = scmp.ne.s32.totalorder %s123, %s139
    %p141 = scmp.eq.s32.totalorder %s16, 0
    %p142 = por %p140, %p141
    %p143 = scmp.le.s32.totalorder 1, %s10
    %p144 = scmp.lt.s32.totalorder %s10, 3
    %p145 = pnand %p143, %p144
    %p146 = pneg %p145
    // Predicated region
    $region9: #{seq2seq_transformer_forward.38} parent=5 // pred_check
      _
    $region10: #{seq2seq_transformer_forward.38} parent=5 // pred_check_branch
      %148 = sbr.rel (%p145) target = $region12
    $region11: #{seq2seq_transformer_forward.38} parent=5 // pred_region
      %s149 = ssub.s32 %s10, 1
      // Predicated region
      $region13: #{seq2seq_transformer_forward.38} parent=11 // pred_check
        %p150 = pneg %p83
      $region14: #{seq2seq_transformer_forward.38} parent=11 // pred_check_branch
        %152 = sbr.rel (%p150) target = $region16
      $region15: #{seq2seq_transformer_forward.38} parent=11 // pred_region
        _
      $region16: #{seq2seq_transformer_forward.38} parent=11 // pred_fallthru
        _
    $region12: #{seq2seq_transformer_forward.38} parent=5 // pred_fallthru
      _
    %p153 = scmp.lt.s32.totalorder %s10, 2
    // Predicated region
    $region17: #{seq2seq_transformer_forward.38} parent=5 // pred_check
      %p154 = pneg %p153
    $region18: #{seq2seq_transformer_forward.38} parent=5 // pred_check_branch
      %156 = sbr.rel (%p154) target = $region20
    $region19: #{seq2seq_transformer_forward.38} parent=5 // pred_region
      // Predicated region
      $region21: #{seq2seq_transformer_forward.38} parent=19 // pred_check
        %p157 = pneg %p30
      $region22: #{seq2seq_transformer_forward.38} parent=19 // pred_check_branch
        %159 = sbr.rel (%p157) target = $region24
      $region23: #{seq2seq_transformer_forward.38} parent=19 // pred_region
        %p160 = scmp.lt.s32.totalorder %s10, 1
        %s161 = scalar_select %p160, %s10, 1
        %s162 = smul.addr %s161, 8
        %s163 = scalar_lea.vmem %s0, %s162
      $region24: #{seq2seq_transformer_forward.38} parent=19 // pred_fallthru
        _
      // Predicated region
      $region25: #{seq2seq_transformer_forward.38} parent=19 // pred_check
        %p164 = pneg %p56
      $region26: #{seq2seq_transformer_forward.38} parent=19 // pred_check_branch
        %166 = sbr.rel (%p164) target = $region28
      $region27: #{seq2seq_transformer_forward.38} parent=19 // pred_region
        %p167 = scmp.lt.s32.totalorder %s10, 1
        %s168 = scalar_select %p167, %s10, 1
        %s169 = smul.addr %s168, 8
        %s170 = scalar_lea.vmem %s1, %s169
      $region28: #{seq2seq_transformer_forward.38} parent=19 // pred_fallthru
        _
      // Predicated region
      $region29: #{seq2seq_transformer_forward.38} parent=19 // pred_check
        %p171 = pneg %p103
      $region30: #{seq2seq_transformer_forward.38} parent=19 // pred_check_branch
        %173 = sbr.rel (%p171) target = $region32
      $region31: #{seq2seq_transformer_forward.38} parent=19 // pred_region
        %p174 = scmp.lt.s32.totalorder %s10, 1
        %s175 = scalar_select %p174, %s10, 1
        %s176 = scalar_lea.vmem %s3, %s175
      $region32: #{seq2seq_transformer_forward.38} parent=19 // pred_fallthru
        _
    $region20: #{seq2seq_transformer_forward.38} parent=5 // pred_fallthru
      _
    %p177 = scmp.le.s32.totalorder 1, %s10
    %p178 = scmp.lt.s32.totalorder %s10, 3
    %p179 = pnand %p177, %p178
    %p180 = pneg %p179
    // Predicated region
    $region33: #{seq2seq_transformer_forward.38} parent=5 // pred_check
      _
    $region34: #{seq2seq_transformer_forward.38} parent=5 // pred_check_branch
      %182 = sbr.rel (%p179) target = $region36
    $region35: #{seq2seq_transformer_forward.38} parent=5 // pred_region
      %s183 = ssub.s32 %s10, 1
      %p184 = scmp.lt.s32.totalorder %s15, 1
      %s185 = scalar_select %p184, %s15, 1
      %s186 = smul.addr %s185, 8
      %s187 = scalar_lea.vmem %s0, %s186
      %p188 = pneg %p36
      %p189 = pneg %p33
      %p190 = scmp.lt.s32.totalorder %s15, 1
      %s191 = scalar_select %p190, %s15, 1
      %s192 = smul.addr %s191, 8
      %s193 = scalar_lea.vmem %s1, %s192
      %p194 = pneg %p62
      %p195 = pneg %p59
      %p196 = pneg %p83
      %p197 = pneg %p80
      %p198 = scmp.lt.s32.totalorder %s15, 1
      %s199 = scalar_select %p198, %s15, 1
      %s200 = scalar_lea.vmem %s3, %s199
      %p201 = pneg %p109
      %p202 = pneg %p106
      %p203 = pneg %p135
      %p204 = pneg %p132
      %p205 = scmp.lt.s32.totalorder %s15, 1
      %s206 = scalar_select %p205, %s15, 1
      %s207 = smul.addr %s206, 8
      %s208 = scalar_lea.vmem %s4, %s207
      %p209 = scmp.lt.s32.totalorder %s15, 1
      %s210 = scalar_select %p209, %s15, 1
      %s211 = smul.addr %s210, 8
      %s212 = scalar_lea.vmem %s0, %s211
      %p213 = scmp.lt.s32.totalorder %s15, 1
      %s214 = scalar_select %p213, %s15, 1
      %s215 = smul.addr %s214, 8
      %s216 = scalar_lea.vmem %s1, %s215
      %p217 = scmp.lt.s32.totalorder %s15, 1
      %s218 = scalar_select %p217, %s15, 1
      %s219 = scalar_lea.vmem %s3, %s218
      %p220 = scmp.lt.s32.totalorder %s15, 1
      %s221 = scalar_select %p220, %s15, 1
      %s222 = smul.addr %s221, 8
      %s223 = scalar_lea.vmem %s4, %s222
      %v225 = vld [vmem:[%s2] sm:$0xff]
      %v226 = vmax.f32 %v225, -1e+30
      %v227 = vld [vmem:[%s219] sm:$0x1]
      %v229 = vperm.slane %v227, 0
      %v231 = vadd.f32 %v226, %v229
      %v232 = vld [vmem:[%s212] sm:$0xff]
      %v233 = vpack.c.bf16 %v232, %v232
      %v234 = vld [vmem:[%s216] sm:$0xff]
      %v235 = vpack.c.bf16 %v234, %v234
      %237 = vrot.lane.b32.xlu0 %v235, 96
      %v238 = vpop.permute.xlu0 %237
      %vm239 = vcmask 64512
      %v241 = vsel %vm239, %v233, 0
      %v244 = vsel %vm239, %v238, 0
      %246 = vmatpush.bf16.xpose.msra.mxu0 0
      %247 = vmatpush.bf16.xpose.msra.mxu0 0
      %248 = vmatpush.bf16.xpose.msra.mxu0 0
      %249 = vmatpush.bf16.xpose.msra.mxu0 0
      %250 = vmatpush.bf16.xpose.msra.mxu0 0
      %251 = vmatpush.bf16.xpose.msra.mxu0 0
      %252 = vmatpush.bf16.xpose.msra.mxu0 0
      %253 = vmatpush.bf16.xpose.msra.mxu0 %v244
      %254 = vmatmul.bf16.gmra.mxu0 %v241
      %v255 = vpop.f32.mrf.mxu0
      %v256 = vadd.f32 0.0, %v255
      %v257 = vpop.f32.mrf.mxu0
      %258 = vdwg.mxu0
      %v259 = vmul.f32 %v256, 0.35355338
      %v260 = vadd.f32 %v259, %v231
      %v261 = vsel %vm239, %v260, -inf
      %262 = vmax.xlane.f32.xlu0 %v261
      %v263 = vpop.xlane.xlu0 %262
      %v264 = vsub.f32 %v260, %v263
      %v265 = vmul.f32 %v264, 1.442695
      %v266 = vpow.pop %v265
      %v267 = vsel %vm239, %v266, 0.0
      %268 = vadd.xlane.f32.xlu0 %v267
      %v269 = vpop.xlane.xlu0 %268
      %v270 = vrcp.pop %v269
      %v271 = vmul.f32 %v266, %v270
      %v272 = vpack.c.bf16 %v271, %v271
      %273 = vrot.lane.b32.xlu0 %v235, 64
      %v274 = vpop.permute.xlu0 %273
      %v276 = vsel %vm239, %v272, 0
      %vm278 = vcmask 1043456
      %v280 = vsel %vm278, %v274, 0
      %282 = vmatpush.bf16.msra.mxu0 0
      %283 = vmatpush.bf16.msra.mxu0 0
      %284 = vmatpush.bf16.msra.mxu0 0
      %285 = vmatpush.bf16.msra.mxu0 0
      %286 = vmatpush.bf16.msra.mxu0 0
      %287 = vmatpush.bf16.msra.mxu0 0
      %288 = vmatpush.bf16.msra.mxu0 0
      %289 = vmatpush.bf16.msra.mxu0 %v280
      %290 = vmatmul.bf16.gmra.mxu0 %v276
      %v291 = vpop.f32.mrf.mxu0
      %v292 = vadd.f32 0.0, %v291
      %v293 = vpop.f32.mrf.mxu0
      %294 = vdwg.mxu0
      %295 = vst.msk [vmem:[%s223] sm:$0xff] %vm239, %v292
      %v296 = vld [vmem:[%s212] sm:$0xff]
      %v297 = vpack.c.bf16 %v296, %v296
      %v298 = vld [vmem:[%s216] sm:$0xff]
      %v299 = vpack.c.bf16 %v298, %v298
      %301 = vrot.lane.b32.xlu0 %v297, 120
      %v302 = vpop.permute.xlu0 %301
      %304 = vrot.lane.b32.xlu0 %v299, 88
      %v305 = vpop.permute.xlu0 %304
      %v307 = vsel %vm239, %v302, 0
      %v310 = vsel %vm239, %v305, 0
      %312 = vmatpush.bf16.xpose.msra.mxu0 0
      %313 = vmatpush.bf16.xpose.msra.mxu0 0
      %314 = vmatpush.bf16.xpose.msra.mxu0 0
      %315 = vmatpush.bf16.xpose.msra.mxu0 0
      %316 = vmatpush.bf16.xpose.msra.mxu0 0
      %317 = vmatpush.bf16.xpose.msra.mxu0 0
      %318 = vmatpush.bf16.xpose.msra.mxu0 0
      %319 = vmatpush.bf16.xpose.msra.mxu0 %v310
      %320 = vmatmul.bf16.gmra.mxu0 %v307
      %v321 = vpop.f32.mrf.mxu0
      %v322 = vadd.f32 0.0, %v321
      %v323 = vpop.f32.mrf.mxu0
      %324 = vdwg.mxu0
      %v325 = vmul.f32 %v322, 0.35355338
      %v326 = vadd.f32 %v325, %v231
      %v327 = vsel %vm239, %v326, -inf
      %328 = vmax.xlane.f32.xlu0 %v327
      %v329 = vpop.xlane.xlu0 %328
      %v330 = vsub.f32 %v326, %v329
      %v331 = vmul.f32 %v330, 1.442695
      %v332 = vpow.pop %v331
      %v333 = vsel %vm239, %v332, 0.0
      %334 = vadd.xlane.f32.xlu0 %v333
      %v335 = vpop.xlane.xlu0 %334
      %v336 = vrcp.pop %v335
      %v337 = vmul.f32 %v332, %v336
      %v338 = vpack.c.bf16 %v337, %v337
      %339 = vrot.lane.b32.xlu0 %v299, 56
      %v340 = vpop.permute.xlu0 %339
      %v342 = vsel %vm239, %v338, 0
      %v345 = vsel %vm278, %v340, 0
      %347 = vmatpush.bf16.msra.mxu0 0
      %348 = vmatpush.bf16.msra.mxu0 0
      %349 = vmatpush.bf16.msra.mxu0 0
      %350 = vmatpush.bf16.msra.mxu0 0
      %351 = vmatpush.bf16.msra.mxu0 0
      %352 = vmatpush.bf16.msra.mxu0 0
      %353 = vmatpush.bf16.msra.mxu0 0
      %354 = vmatpush.bf16.msra.mxu0 %v345
      %355 = vmatmul.bf16.gmra.mxu0 %v342
      %v356 = vpop.f32.mrf.mxu0
      %v357 = vadd.f32 0.0, %v356
      %v358 = vpop.f32.mrf.mxu0
      %359 = vdwg.mxu0
      %361 = vrot.lane.b32.xlu0 %v357, 8
      %v362 = vpop.permute.xlu0 %361
      %vm364 = vcmask 130112
      %365 = vst.msk [vmem:[%s223] sm:$0xff] %vm364, %v362
      %v366 = vld [vmem:[%s212] sm:$0xff]
      %v367 = vpack.c.bf16 %v366, %v366
      %v368 = vld [vmem:[%s216] sm:$0xff]
      %v369 = vpack.c.bf16 %v368, %v368
      %371 = vrot.lane.b32.xlu0 %v367, 112
      %v372 = vpop.permute.xlu0 %371
      %374 = vrot.lane.b32.xlu0 %v369, 80
      %v375 = vpop.permute.xlu0 %374
      %v377 = vsel %vm239, %v372, 0
      %v380 = vsel %vm239, %v375, 0
      %382 = vmatpush.bf16.xpose.msra.mxu0 0
      %383 = vmatpush.bf16.xpose.msra.mxu0 0
      %384 = vmatpush.bf16.xpose.msra.mxu0 0
      %385 = vmatpush.bf16.xpose.msra.mxu0 0
      %386 = vmatpush.bf16.xpose.msra.mxu0 0
      %387 = vmatpush.bf16.xpose.msra.mxu0 0
      %388 = vmatpush.bf16.xpose.msra.mxu0 0
      %389 = vmatpush.bf16.xpose.msra.mxu0 %v380
      %390 = vmatmul.bf16.gmra.mxu0 %v377
      %v391 = vpop.f32.mrf.mxu0
      %v392 = vadd.f32 0.0, %v391
      %v393 = vpop.f32.mrf.mxu0
      %394 = vdwg.mxu0
      %v395 = vmul.f32 %v392, 0.35355338
      %v396 = vadd.f32 %v395, %v231
      %v397 = vsel %vm239, %v396, -inf
      %398 = vmax.xlane.f32.xlu0 %v397
      %v399 = vpop.xlane.xlu0 %398
      %v400 = vsub.f32 %v396, %v399
      %v401 = vmul.f32 %v400, 1.442695
      %v402 = vpow.pop %v401
      %v403 = vsel %vm239, %v402, 0.0
      %404 = vadd.xlane.f32.xlu0 %v403
      %v405 = vpop.xlane.xlu0 %404
      %v406 = vrcp.pop %v405
      %v407 = vmul.f32 %v402, %v406
      %v408 = vpack.c.bf16 %v407, %v407
      %409 = vrot.lane.b32.xlu0 %v369, 48
      %v410 = vpop.permute.xlu0 %409
      %v412 = vsel %vm239, %v408, 0
      %v415 = vsel %vm278, %v410, 0
      %417 = vmatpush.bf16.msra.mxu0 0
      %418 = vmatpush.bf16.msra.mxu0 0
      %419 = vmatpush.bf16.msra.mxu0 0
      %420 = vmatpush.bf16.msra.mxu0 0
      %421 = vmatpush.bf16.msra.mxu0 0
      %422 = vmatpush.bf16.msra.mxu0 0
      %423 = vmatpush.bf16.msra.mxu0 0
      %424 = vmatpush.bf16.msra.mxu0 %v415
      %425 = vmatmul.bf16.gmra.mxu0 %v412
      %v426 = vpop.f32.mrf.mxu0
      %v427 = vadd.f32 0.0, %v426
      %v428 = vpop.f32.mrf.mxu0
      %429 = vdwg.mxu0
      %431 = vrot.lane.b32.xlu0 %v427, 16
      %v432 = vpop.permute.xlu0 %431
      %vm434 = vcmask 195712
      %435 = vst.msk [vmem:[%s223] sm:$0xff] %vm434, %v432
      %v436 = vld [vmem:[%s212] sm:$0xff]
      %v437 = vpack.c.bf16 %v436, %v436
      %v438 = vld [vmem:[%s216] sm:$0xff]
      %v439 = vpack.c.bf16 %v438, %v438
      %441 = vrot.lane.b32.xlu0 %v437, 104
      %v442 = vpop.permute.xlu0 %441
      %444 = vrot.lane.b32.xlu0 %v439, 72
      %v445 = vpop.permute.xlu0 %444
      %v447 = vsel %vm239, %v442, 0
      %v450 = vsel %vm239, %v445, 0
      %452 = vmatpush.bf16.xpose.msra.mxu0 0
      %453 = vmatpush.bf16.xpose.msra.mxu0 0
      %454 = vmatpush.bf16.xpose.msra.mxu0 0
      %455 = vmatpush.bf16.xpose.msra.mxu0 0
      %456 = vmatpush.bf16.xpose.msra.mxu0 0
      %457 = vmatpush.bf16.xpose.msra.mxu0 0
      %458 = vmatpush.bf16.xpose.msra.mxu0 0
      %459 = vmatpush.bf16.xpose.msra.mxu0 %v450
      %460 = vmatmul.bf16.gmra.mxu0 %v447
      %v461 = vpop.f32.mrf.mxu0
      %v462 = vadd.f32 0.0, %v461
      %v463 = vpop.f32.mrf.mxu0
      %464 = vdwg.mxu0
      %v465 = vmul.f32 %v462, 0.35355338
      %v466 = vadd.f32 %v465, %v231
      %v467 = vsel %vm239, %v466, -inf
      %468 = vmax.xlane.f32.xlu0 %v467
      %v469 = vpop.xlane.xlu0 %468
      %v470 = vsub.f32 %v466, %v469
      %v471 = vmul.f32 %v470, 1.442695
      %v472 = vpow.pop %v471
      %v473 = vsel %vm239, %v472, 0.0
      %474 = vadd.xlane.f32.xlu0 %v473
      %v475 = vpop.xlane.xlu0 %474
      %v476 = vrcp.pop %v475
      %v477 = vmul.f32 %v472, %v476
      %v478 = vpack.c.bf16 %v477, %v477
      %479 = vrot.lane.b32.xlu0 %v439, 40
      %v480 = vpop.permute.xlu0 %479
      %v482 = vsel %vm239, %v478, 0
      %v485 = vsel %vm278, %v480, 0
      %487 = vmatpush.bf16.msra.mxu0 0
      %488 = vmatpush.bf16.msra.mxu0 0
      %489 = vmatpush.bf16.msra.mxu0 0
      %490 = vmatpush.bf16.msra.mxu0 0
      %491 = vmatpush.bf16.msra.mxu0 0
      %492 = vmatpush.bf16.msra.mxu0 0
      %493 = vmatpush.bf16.msra.mxu0 0
      %494 = vmatpush.bf16.msra.mxu0 %v485
      %495 = vmatmul.bf16.gmra.mxu0 %v482
      %v496 = vpop.f32.mrf.mxu0
      %v497 = vadd.f32 0.0, %v496
      %v498 = vpop.f32.mrf.mxu0
      %499 = vdwg.mxu0
      %501 = vrot.lane.b32.xlu0 %v497, 24
      %v502 = vpop.permute.xlu0 %501
      %vm504 = vcmask 261312
      %505 = vst.msk [vmem:[%s223] sm:$0xff] %vm504, %v502
      %p506 = scmp.lt.s32.totalorder %s15, 1
      %s507 = scalar_select %p506, %s15, 1
      %s508 = smul.addr %s507, 8
      %s509 = scalar_lea.vmem %s4, %s508
      // Predicated region
      $region37: #{seq2seq_transformer_forward.38} parent=35 // pred_check
        %p510 = pneg %p132
      $region38: #{seq2seq_transformer_forward.38} parent=35 // pred_check_branch
        %512 = sbr.rel (%p510) target = $region40
      $region39: #{seq2seq_transformer_forward.38} parent=35 // pred_region
        _
      $region40: #{seq2seq_transformer_forward.38} parent=35 // pred_fallthru
        _
    $region36: #{seq2seq_transformer_forward.38} parent=5 // pred_fallthru
      _
    %p513 = scmp.le.s32.totalorder 2, %s10
    // Predicated region
    $region41: #{seq2seq_transformer_forward.38} parent=5 // pred_check
      %p514 = pneg %p513
    $region42: #{seq2seq_transformer_forward.38} parent=5 // pred_check_branch
      %516 = sbr.rel (%p514) target = $region44
    $region43: #{seq2seq_transformer_forward.38} parent=5 // pred_region
      %s517 = ssub.s32 %s10, 2
      // Predicated region
      $region45: #{seq2seq_transformer_forward.38} parent=43 // pred_check
        %p518 = pneg %p138
      $region46: #{seq2seq_transformer_forward.38} parent=43 // pred_check_branch
        %520 = sbr.rel (%p518) target = $region48
      $region47: #{seq2seq_transformer_forward.38} parent=43 // pred_region
        %p521 = scmp.lt.s32.totalorder %s16, 1
        %s522 = scalar_select %p521, %s16, 1
        %s523 = smul.addr %s522, 8
        %s524 = scalar_lea.vmem %s4, %s523
      $region48: #{seq2seq_transformer_forward.38} parent=43 // pred_fallthru
        _
    $region44: #{seq2seq_transformer_forward.38} parent=5 // pred_fallthru
      _
  $region6: #{seq2seq_transformer_forward.38} parent=0 // loop_footer
    %s14 = sadd.s32 1, %s10
  $region7: #{seq2seq_transformer_forward.38} parent=0 // loop_footer_branch
    %9 = sbr.rel target = $region3
  $region8: #{seq2seq_transformer_forward.38} parent=0 // loop_exit
    _

// kernel: seq2seq_transformer_forward.37
$region0: #{seq2seq_transformer_forward.37}
  #allocation0 [shape = 'u32[]', space=smem, size = 0x4, offset = 0x4, fixed_abs, tag = 'smem constant byte address 0x4 - core index']
  #allocation1 [shape = 'u32[72,128]{1,0:T(1,128)}', space=vmem, size = 0x9000, scoped, tag = 'internal scratch']
  #allocation2 [shape = 'f32[16,96]{1,0:T(8,128)}', space=vmem, size = 0x2000, scoped, tag = 'scratch operand']
  %s0 = inlined_call_operand.vmem [shape: f32[16,32], index: 0, kind: input, shape index: {}]
  %s1 = inlined_call_operand.vmem [shape: bf16[96,32], index: 1, kind: input, shape index: {}]
  %s2 = inlined_call_operand.vmem [shape: f32[1,96], index: 2, kind: input, shape index: {}]
  %s3 = inlined_call_operand.vmem [shape: f32[16,96], index: 3, kind: output, shape index: {}]
  %s4 = sld [smem:[#allocation0]]
  $region30: #{seq2seq_transformer_forward.37} parent=0
    _
  %s6 = ssub.s32 1, %s4
  %s7 = scalar_select 0, %s6, %s4
  // Predicated region
  $region2: #{seq2seq_transformer_forward.37} parent=0 // pred_check
    _
  $region3: #{seq2seq_transformer_forward.37} parent=0 // pred_check_branch
    %9 = sbr.rel (0) target = $region5
  $region4: #{seq2seq_transformer_forward.37} parent=0 // pred_region
    _
  $region5: #{seq2seq_transformer_forward.37} parent=0 // pred_fallthru
    _
  // Predicated region
  $region6: #{seq2seq_transformer_forward.37} parent=0 // pred_check
    _
  $region7: #{seq2seq_transformer_forward.37} parent=0 // pred_check_branch
    %11 = sbr.rel (0) target = $region9
  $region8: #{seq2seq_transformer_forward.37} parent=0 // pred_region
    _
  $region9: #{seq2seq_transformer_forward.37} parent=0 // pred_fallthru
    _
  // Predicated region
  $region10: #{seq2seq_transformer_forward.37} parent=0 // pred_check
    _
  $region11: #{seq2seq_transformer_forward.37} parent=0 // pred_check_branch
    %13 = sbr.rel (0) target = $region13
  $region12: #{seq2seq_transformer_forward.37} parent=0 // pred_region
    _
  $region13: #{seq2seq_transformer_forward.37} parent=0 // pred_fallthru
    _
  %p15 = scmp.eq.s32.totalorder 0, 0
  // Predicated region
  $region14: #{seq2seq_transformer_forward.37} parent=0 // pred_check
    %p16 = pneg %p15
  $region15: #{seq2seq_transformer_forward.37} parent=0 // pred_check_branch
    %18 = sbr.rel (%p16) target = $region17
  $region16: #{seq2seq_transformer_forward.37} parent=0 // pred_region
    %vm19 = vcmask 785408
    %20 = vst.msk [vmem:[#allocation2] sm:$0xff] %vm19, 0.0
    %21 = vst.msk [vmem:[#allocation2 + $0x8] sm:$0xff] %vm19, 0.0
  $region17: #{seq2seq_transformer_forward.37} parent=0 // pred_fallthru
    _
  %v22 = vld [vmem:[%s0] sm:$0xff]
  %v23 = vld [vmem:[%s0 + $0x8] sm:$0xff]
  %v24 = vpack.c.bf16 %v23, %v22
  %v25 = vld [vmem:[%s1] sm:$0xf]
  %v26 = vld [vmem:[%s1 + $0x4] sm:$0xf]
  %v27 = vld [vmem:[%s1 + $0x8] sm:$0xf]
  %v28 = vld [vmem:[%s1 + $0xc] sm:$0xf]
  %v29 = vld [vmem:[%s1 + $0x10] sm:$0xf]
  %v30 = vld [vmem:[%s1 + $0x14] sm:$0xf]
  %v31 = vld [vmem:[%s1 + $0x18] sm:$0xf]
  %v32 = vld [vmem:[%s1 + $0x1c] sm:$0xf]
  %v33 = vld [vmem:[%s1 + $0x20] sm:$0xf]
  %v34 = vld [vmem:[%s1 + $0x24] sm:$0xf]
  %v35 = vld [vmem:[%s1 + $0x28] sm:$0xf]
  %v36 = vld [vmem:[%s1 + $0x2c] sm:$0xf]
  %v37 = vld [vmem:[#allocation2] sm:$0xff]
  %v38 = vld [vmem:[#allocation2 + $0x8] sm:$0xff]
  %v51 = vunpack.c.l.b16 %v25
  %v52 = vunpack.c.l.b16 %v26
  %v53 = vunpack.c.l.b16 %v27
  %v54 = vunpack.c.l.b16 %v28
  %v55 = vunpack.c.l.b16 %v29
  %v56 = vunpack.c.l.b16 %v30
  %v57 = vunpack.c.l.b16 %v31
  %v58 = vunpack.c.l.b16 %v32
  %v59 = vunpack.c.l.b16 %v33
  %v60 = vunpack.c.l.b16 %v34
  %v61 = vunpack.c.l.b16 %v35
  %v62 = vunpack.c.l.b16 %v36
  %v63 = vpack.c.b16 %v52, %v51
  %v64 = vpack.c.b16 %v54, %v53
  %v65 = vpack.c.b16 %v56, %v55
  %v66 = vpack.c.b16 %v58, %v57
  %v67 = vpack.c.b16 %v60, %v59
  %v68 = vpack.c.b16 %v62, %v61
  %vm69 = vcmask 261120
  %v71 = vsel %vm69, %v24, 0
  %v74 = vsel %vm69, %v63, 0
  %v77 = vsel %vm69, %v64, 0
  %v80 = vsel %vm69, %v65, 0
  %v83 = vsel %vm69, %v66, 0
  %v86 = vsel %vm69, %v67, 0
  %v89 = vsel %vm69, %v68, 0
  %91 = vmatpush.bf16.xpose.msra.mxu0 0
  %92 = vmatpush.bf16.xpose.msra.mxu0 0
  %93 = vmatpush.bf16.xpose.msra.mxu0 %v89
  %94 = vmatpush.bf16.xpose.msra.mxu0 %v86
  %95 = vmatpush.bf16.xpose.msra.mxu0 %v83
  %96 = vmatpush.bf16.xpose.msra.mxu0 %v80
  %97 = vmatpush.bf16.xpose.msra.mxu0 %v77
  %98 = vmatpush.bf16.xpose.msra.mxu0 %v74
  %99 = vmatmul.bf16.gmra.mxu0 %v71
  %v100 = vpop.f32.mrf.mxu0
  %v101 = vadd.f32 0.0, %v100
  %v102 = vpop.f32.mrf.mxu0
  %v103 = vadd.f32 0.0, %v102
  %104 = vdwg.mxu0
  %v105 = vadd.f32 %v37, %v101
  %v106 = vadd.f32 %v38, %v103
  %vm107 = vcmask 785408
  %108 = vst.msk [vmem:[#allocation2] sm:$0xff] %vm107, %v105
  %109 = vst.msk [vmem:[#allocation2 + $0x8] sm:$0xff] %vm107, %v106
  // Predicated region
  $region18: #{seq2seq_transformer_forward.37} parent=0 // pred_check
    %p110 = pneg %p15
  $region19: #{seq2seq_transformer_forward.37} parent=0 // pred_check_branch
    %112 = sbr.rel (%p110) target = $region21
  $region20: #{seq2seq_transformer_forward.37} parent=0 // pred_region
    %v113 = vld [vmem:[#allocation2] sm:$0xff]
    %v114 = vld [vmem:[#allocation2 + $0x8] sm:$0xff]
    %v115 = vld [vmem:[%s2] sm:$0x1]
    %v117 = vperm.slane %v115, 0
    %v119 = vadd.f32 %v113, %v117
    %v120 = vadd.f32 %v114, %v117
    %121 = vst.msk [vmem:[%s3] sm:$0xff] %vm107, %v119
    %122 = vst.msk [vmem:[%s3 + $0x8] sm:$0xff] %vm107, %v120
  $region21: #{seq2seq_transformer_forward.37} parent=0 // pred_fallthru
    _
  // Predicated region
  $region22: #{seq2seq_transformer_forward.37} parent=0 // pred_check
    _
  $region23: #{seq2seq_transformer_forward.37} parent=0 // pred_check_branch
    %124 = sbr.rel (0) target = $region25
  $region24: #{seq2seq_transformer_forward.37} parent=0 // pred_region
    _
  $region25: #{seq2seq_transformer_forward.37} parent=0 // pred_fallthru
    _
  // Predicated region
  $region26: #{seq2seq_transformer_forward.37} parent=0 // pred_check
    _
  $region27: #{seq2seq_transformer_forward.37} parent=0 // pred_check_branch
    %126 = sbr.rel (0) target = $region29
  $region28: #{seq2seq_transformer_forward.37} parent=0 // pred_region
    _
  $region29: #{seq2seq_transformer_forward.37} parent=0 // pred_fallthru
    _

// kernel: seq2seq_transformer_forward.49
$region0: #{seq2seq_transformer_forward.49}
  #allocation0 [shape = 'u32[]', space=smem, size = 0x4, offset = 0x4, fixed_abs, tag = 'smem constant byte address 0x4 - core index']
  #allocation1 [shape = 'u32[72,128]{1,0:T(1,128)}', space=vmem, size = 0x9000, scoped, tag = 'internal scratch']
  %s0 = inlined_call_operand.vmem [shape: f32[16,32], index: 0, kind: input, shape index: {}]
  %s1 = inlined_call_operand.vmem [shape: f32[1,32], index: 1, kind: input, shape index: {}]
  %s2 = inlined_call_operand.vmem [shape: f32[1,32], index: 2, kind: input, shape index: {}]
  %s3 = inlined_call_operand.vmem [shape: f32[16,32], index: 3, kind: output, shape index: {}]
  %s4 = sld [smem:[#allocation0]]
  $region22: #{seq2seq_transformer_forward.49} parent=0
    _
  %s6 = ssub.s32 1, %s4
  %s7 = scalar_select 0, %s6, %s4
  // Predicated region
  $region2: #{seq2seq_transformer_forward.49} parent=0 // pred_check
    _
  $region3: #{seq2seq_transformer_forward.49} parent=0 // pred_check_branch
    %9 = sbr.rel (0) target = $region5
  $region4: #{seq2seq_transformer_forward.49} parent=0 // pred_region
    _
  $region5: #{seq2seq_transformer_forward.49} parent=0 // pred_fallthru
    _
  // Predicated region
  $region6: #{seq2seq_transformer_forward.49} parent=0 // pred_check
    _
  $region7: #{seq2seq_transformer_forward.49} parent=0 // pred_check_branch
    %11 = sbr.rel (0) target = $region9
  $region8: #{seq2seq_transformer_forward.49} parent=0 // pred_region
    _
  $region9: #{seq2seq_transformer_forward.49} parent=0 // pred_fallthru
    _
  // Predicated region
  $region10: #{seq2seq_transformer_forward.49} parent=0 // pred_check
    _
  $region11: #{seq2seq_transformer_forward.49} parent=0 // pred_check_branch
    %13 = sbr.rel (0) target = $region13
  $region12: #{seq2seq_transformer_forward.49} parent=0 // pred_region
    _
  $region13: #{seq2seq_transformer_forward.49} parent=0 // pred_fallthru
    _
  %v14 = vld [vmem:[%s0] sm:$0xff]
  %v15 = vld [vmem:[%s0 + $0x8] sm:$0xff]
  %v16 = vld [vmem:[%s1] sm:$0x1]
  %v17 = vld [vmem:[%s2] sm:$0x1]
  %vm18 = vcmask 261120
  %v19 = vsel %vm18, %v14, 0.0
  %20 = vadd.xlane.f32.xlu0 %v19
  %v21 = vpop.xlane.xlu0 %20
  %v22 = vsel %vm18, %v15, 0.0
  %23 = vadd.xlane.f32.xlu0 %v22
  %v24 = vpop.xlane.xlu0 %23
  %v25 = vrcp.pop 32.0
  %v26 = vmul.f32 32.0, %v25
  %v27 = vsub.f32 1.0, %v26
  %v28 = vmul.f32 %v25, %v27
  %v29 = vadd.f32 %v25, %v28
  %vm30 = vweird.f32 %v25
  %v31 = vsel %vm30, %v25, %v29
  %v32 = vmul.f32 %v21, %v31
  %v33 = vmul.f32 %v24, %v31
  %v34 = vsub.f32 %v14, %v32
  %v35 = vsub.f32 %v15, %v33
  %v36 = vmul.f32 %v34, %v34
  %v37 = vmul.f32 %v35, %v35
  %v38 = vsel %vm18, %v36, 0.0
  %39 = vadd.xlane.f32.xlu0 %v38
  %v40 = vpop.xlane.xlu0 %39
  %v41 = vsel %vm18, %v37, 0.0
  %42 = vadd.xlane.f32.xlu0 %v41
  %v43 = vpop.xlane.xlu0 %42
  %v44 = vmul.f32 %v40, %v31
  %v45 = vmul.f32 %v43, %v31
  %v46 = vadd.f32 %v44, 1e-05
  %v47 = vadd.f32 %v45, 1e-05
  %v48 = vrsqrt.pop %v46
  %v49 = vmul.f32 %v48, %v46
  %v50 = vmul.f32 %v49, %v48
  %v51 = vmul.f32 0.5, %v50
  %v52 = vsub.f32 1.5, %v51
  %v53 = vmul.f32 %v48, %v52
  %vm54 = vweird.f32 %v46
  %vm55 = vweird.f32 %v48
  %vm56 = vmor %vm54, %vm55
  %v57 = vsel %vm56, %v48, %v53
  %v58 = vrsqrt.pop %v47
  %v59 = vmul.f32 %v58, %v47
  %v60 = vmul.f32 %v59, %v58
  %v61 = vmul.f32 0.5, %v60
  %v62 = vsub.f32 1.5, %v61
  %v63 = vmul.f32 %v58, %v62
  %vm64 = vweird.f32 %v47
  %vm65 = vweird.f32 %v58
  %vm66 = vmor %vm64, %vm65
  %v67 = vsel %vm66, %v58, %v63
  %v68 = vmul.f32 %v34, %v57
  %v69 = vmul.f32 %v35, %v67
  %v71 = vperm.slane %v16, 0
  %v73 = vmul.f32 %v68, %v71
  %v74 = vmul.f32 %v69, %v71
  %v76 = vperm.slane %v17, 0
  %v78 = vadd.f32 %v73, %v76
  %v79 = vadd.f32 %v74, %v76
  %80 = vst.msk [vmem:[%s3] sm:$0xff] %vm18, %v78
  %81 = vst.msk [vmem:[%s3 + $0x8] sm:$0xff] %vm18, %v79
  // Predicated region
  $region14: #{seq2seq_transformer_forward.49} parent=0 // pred_check
    _
  $region15: #{seq2seq_transformer_forward.49} parent=0 // pred_check_branch
    %83 = sbr.rel (0) target = $region17
  $region16: #{seq2seq_transformer_forward.49} parent=0 // pred_region
    _
  $region17: #{seq2seq_transformer_forward.49} parent=0 // pred_fallthru
    _
  // Predicated region
  $region18: #{seq2seq_transformer_forward.49} parent=0 // pred_check
    _
  $region19: #{seq2seq_transformer_forward.49} parent=0 // pred_check_branch
    %85 = sbr.rel (0) target = $region21
  $region20: #{seq2seq_transformer_forward.49} parent=0 // pred_region
    _
  $region21: #{seq2seq_transformer_forward.49} parent=0 // pred_fallthru
    _

// kernel: seq2seq_transformer_forward.41
$region0: #{seq2seq_transformer_forward.41}
  #allocation0 [shape = 'u32[]', space=smem, size = 0x4, offset = 0x4, fixed_abs, tag = 'smem constant byte address 0x4 - core index']
  #allocation1 [shape = 'u32[72,128]{1,0:T(1,128)}', space=vmem, size = 0x9000, scoped, tag = 'internal scratch']
  #allocation2 [shape = 'f32[16,32]{1,0:T(8,128)}', space=vmem, size = 0x2000, scoped, tag = 'scratch operand']
  %s0 = inlined_call_operand.vmem [shape: f32[16,32], index: 0, kind: input, shape index: {}]
  %s1 = inlined_call_operand.vmem [shape: bf16[64,32], index: 1, kind: input, shape index: {}]
  %s2 = inlined_call_operand.vmem [shape: f32[1,64], index: 2, kind: input, shape index: {}]
  %s3 = inlined_call_operand.vmem [shape: bf16[32,64], index: 3, kind: input, shape index: {}]
  %s4 = inlined_call_operand.vmem [shape: f32[1,32], index: 4, kind: input, shape index: {}]
  %s5 = inlined_call_operand.vmem [shape: f32[16,32], index: 5, kind: output, shape index: {}]
  %s6 = sld [smem:[#allocation0]]
  $region38: #{seq2seq_transformer_forward.41} parent=0
    _
  %s8 = ssub.s32 1, %s6
  %s9 = scalar_select 0, %s8, %s6
  // Predicated region
  $region2: #{seq2seq_transformer_forward.41} parent=0 // pred_check
    _
  $region3: #{seq2seq_transformer_forward.41} parent=0 // pred_check_branch
    %11 = sbr.rel (0) target = $region5
  $region4: #{seq2seq_transformer_forward.41} parent=0 // pred_region
    _
  $region5: #{seq2seq_transformer_forward.41} parent=0 // pred_fallthru
    _
  // Predicated region
  $region6: #{seq2seq_transformer_forward.41} parent=0 // pred_check
    _
  $region7: #{seq2seq_transformer_forward.41} parent=0 // pred_check_branch
    %13 = sbr.rel (0) target = $region9
  $region8: #{seq2seq_transformer_forward.41} parent=0 // pred_region
    _
  $region9: #{seq2seq_transformer_forward.41} parent=0 // pred_fallthru
    _
  // Predicated region
  $region10: #{seq2seq_transformer_forward.41} parent=0 // pred_check
    _
  $region11: #{seq2seq_transformer_forward.41} parent=0 // pred_check_branch
    %15 = sbr.rel (0) target = $region13
  $region12: #{seq2seq_transformer_forward.41} parent=0 // pred_region
    _
  $region13: #{seq2seq_transformer_forward.41} parent=0 // pred_fallthru
    _
  // Predicated region
  $region14: #{seq2seq_transformer_forward.41} parent=0 // pred_check
    _
  $region15: #{seq2seq_transformer_forward.41} parent=0 // pred_check_branch
    %17 = sbr.rel (0) target = $region17
  $region16: #{seq2seq_transformer_forward.41} parent=0 // pred_region
    _
  $region17: #{seq2seq_transformer_forward.41} parent=0 // pred_fallthru
    _
  // Predicated region
  $region18: #{seq2seq_transformer_forward.41} parent=0 // pred_check
    _
  $region19: #{seq2seq_transformer_forward.41} parent=0 // pred_check_branch
    %19 = sbr.rel (0) target = $region21
  $region20: #{seq2seq_transformer_forward.41} parent=0 // pred_region
    _
  $region21: #{seq2seq_transformer_forward.41} parent=0 // pred_fallthru
    _
  %p21 = scmp.eq.s32.totalorder 0, 0
  // Predicated region
  $region22: #{seq2seq_transformer_forward.41} parent=0 // pred_check
    %p22 = pneg %p21
  $region23: #{seq2seq_transformer_forward.41} parent=0 // pred_check_branch
    %24 = sbr.rel (%p22) target = $region25
  $region24: #{seq2seq_transformer_forward.41} parent=0 // pred_region
    %vm25 = vcmask 261120
    %26 = vst.msk [vmem:[#allocation2] sm:$0xff] %vm25, 0.0
    %27 = vst.msk [vmem:[#allocation2 + $0x8] sm:$0xff] %vm25, 0.0
  $region25: #{seq2seq_transformer_forward.41} parent=0 // pred_fallthru
    _
  %v28 = vld [vmem:[%s0] sm:$0xff]
  %v29 = vld [vmem:[%s0 + $0x8] sm:$0xff]
  %v30 = vpack.c.bf16 %v29, %v28
  %v31 = vld [vmem:[%s1] sm:$0xf]
  %v32 = vld [vmem:[%s1 + $0x4] sm:$0xf]
  %v33 = vld [vmem:[%s1 + $0x8] sm:$0xf]
  %v34 = vld [vmem:[%s1 + $0xc] sm:$0xf]
  %v35 = vld [vmem:[%s1 + $0x10] sm:$0xf]
  %v36 = vld [vmem:[%s1 + $0x14] sm:$0xf]
  %v37 = vld [vmem:[%s1 + $0x18] sm:$0xf]
  %v38 = vld [vmem:[%s1 + $0x1c] sm:$0xf]
  %v39 = vld [vmem:[%s2] sm:$0x1]
  %v41 = vperm.slane %v39, 0
  %v51 = vunpack.c.l.b16 %v31
  %v52 = vunpack.c.l.b16 %v32
  %v53 = vunpack.c.l.b16 %v33
  %v54 = vunpack.c.l.b16 %v34
  %v55 = vunpack.c.l.b16 %v35
  %v56 = vunpack.c.l.b16 %v36
  %v57 = vunpack.c.l.b16 %v37
  %v58 = vunpack.c.l.b16 %v38
  %v59 = vpack.c.b16 %v52, %v51
  %v60 = vpack.c.b16 %v54, %v53
  %v61 = vpack.c.b16 %v56, %v55
  %v62 = vpack.c.b16 %v58, %v57
  %vm63 = vcmask 261120
  %v65 = vsel %vm63, %v30, 0
  %v68 = vsel %vm63, %v59, 0
  %v71 = vsel %vm63, %v60, 0
  %v74 = vsel %vm63, %v61, 0
  %v77 = vsel %vm63, %v62, 0
  %79 = vmatpush.bf16.xpose.msra.mxu0 0
  %80 = vmatpush.bf16.xpose.msra.mxu0 0
  %81 = vmatpush.bf16.xpose.msra.mxu0 0
  %82 = vmatpush.bf16.xpose.msra.mxu0 0
  %83 = vmatpush.bf16.xpose.msra.mxu0 %v77
  %84 = vmatpush.bf16.xpose.msra.mxu0 %v74
  %85 = vmatpush.bf16.xpose.msra.mxu0 %v71
  %86 = vmatpush.bf16.xpose.msra.mxu0 %v68
  %87 = vmatmul.bf16.gmra.mxu0 %v65
  %v88 = vpop.f32.mrf.mxu0
  %v89 = vadd.f32 %v41, %v88
  %v90 = vpop.f32.mrf.mxu0
  %v91 = vadd.f32 %v41, %v90
  %92 = vdwg.mxu0
  %v93 = vmax.f32 %v89, 0.0
  %v94 = vmax.f32 %v91, 0.0
  %v95 = vld [vmem:[%s3] sm:$0xf]
  %v96 = vld [vmem:[%s3 + $0x4] sm:$0xf]
  %v97 = vld [vmem:[%s3 + $0x8] sm:$0xf]
  %v98 = vld [vmem:[%s3 + $0xc] sm:$0xf]
  %v99 = vld [vmem:[#allocation2] sm:$0xff]
  %v100 = vld [vmem:[#allocation2 + $0x8] sm:$0xff]
  %v101 = vpack.c.bf16 %v94, %v93
  %v106 = vunpack.c.l.b16 %v95
  %v107 = vunpack.c.l.b16 %v96
  %v108 = vunpack.c.l.b16 %v97
  %v109 = vunpack.c.l.b16 %v98
  %v110 = vpack.c.b16 %v107, %v106
  %v111 = vpack.c.b16 %v109, %v108
  %vm112 = vcmask 523264
  %v114 = vsel %vm112, %v101, 0
  %v117 = vsel %vm112, %v110, 0
  %v120 = vsel %vm112, %v111, 0
  %122 = vmatpush.bf16.xpose.msra.mxu0 0
  %123 = vmatpush.bf16.xpose.msra.mxu0 0
  %124 = vmatpush.bf16.xpose.msra.mxu0 0
  %125 = vmatpush.bf16.xpose.msra.mxu0 0
  %126 = vmatpush.bf16.xpose.msra.mxu0 0
  %127 = vmatpush.bf16.xpose.msra.mxu0 0
  %128 = vmatpush.bf16.xpose.msra.mxu0 %v120
  %129 = vmatpush.bf16.xpose.msra.mxu0 %v117
  %130 = vmatmul.bf16.gmra.mxu0 %v114
  %v131 = vpop.f32.mrf.mxu0
  %v132 = vadd.f32 0.0, %v131
  %v133 = vpop.f32.mrf.mxu0
  %v134 = vadd.f32 0.0, %v133
  %135 = vdwg.mxu0
  %v136 = vadd.f32 %v99, %v132
  %v137 = vadd.f32 %v100, %v134
  %138 = vst.msk [vmem:[#allocation2] sm:$0xff] %vm63, %v136
  %139 = vst.msk [vmem:[#allocation2 + $0x8] sm:$0xff] %vm63, %v137
  // Predicated region
  $region26: #{seq2seq_transformer_forward.41} parent=0 // pred_check
    %p140 = pneg %p21
  $region27: #{seq2seq_transformer_forward.41} parent=0 // pred_check_branch
    %142 = sbr.rel (%p140) target = $region29
  $region28: #{seq2seq_transformer_forward.41} parent=0 // pred_region
    %v143 = vld [vmem:[#allocation2] sm:$0xff]
    %v144 = vld [vmem:[#allocation2 + $0x8] sm:$0xff]
    %v145 = vld [vmem:[%s4] sm:$0x1]
    %v147 = vperm.slane %v145, 0
    %v149 = vadd.f32 %v143, %v147
    %v150 = vadd.f32 %v144, %v147
    %151 = vst.msk [vmem:[%s5] sm:$0xff] %vm63, %v149
    %152 = vst.msk [vmem:[%s5 + $0x8] sm:$0xff] %vm63, %v150
  $region29: #{seq2seq_transformer_forward.41} parent=0 // pred_fallthru
    _
  // Predicated region
  $region30: #{seq2seq_transformer_forward.41} parent=0 // pred_check
    _
  $region31: #{seq2seq_transformer_forward.41} parent=0 // pred_check_branch
    %154 = sbr.rel (0) target = $region33
  $region32: #{seq2seq_transformer_forward.41} parent=0 // pred_region
    _
  $region33: #{seq2seq_transformer_forward.41} parent=0 // pred_fallthru
    _
  // Predicated region
  $region34: #{seq2seq_transformer_forward.41} parent=0 // pred_check
    _
  $region35: #{seq2seq_transformer_forward.41} parent=0 // pred_check_branch
    %156 = sbr.rel (0) target = $region37
  $region36: #{seq2seq_transformer_forward.41} parent=0 // pred_region
    _
  $region37: #{seq2seq_transformer_forward.41} parent=0 // pred_fallthru
    _

// kernel: seq2seq_transformer_forward.55
$region0: #{seq2seq_transformer_forward.55}
  #allocation0 [shape = 'u32[]', space=smem, size = 0x4, offset = 0x4, fixed_abs, tag = 'smem constant byte address 0x4 - core index']
  #allocation1 [shape = 'u32[72,128]{1,0:T(1,128)}', space=vmem, size = 0x9000, scoped, tag = 'internal scratch']
  #allocation2 [shape = 'f32[16,64]{1,0:T(8,128)}', space=vmem, size = 0x2000, scoped, tag = 'scratch operand']
  %s0 = inlined_call_operand.vmem [shape: f32[16,32], index: 0, kind: input, shape index: {}]
  %s1 = inlined_call_operand.vmem [shape: bf16[64,32], index: 1, kind: input, shape index: {}]
  %s2 = inlined_call_operand.vmem [shape: f32[1,64], index: 2, kind: input, shape index: {}]
  %s3 = inlined_call_operand.vmem [shape: f32[16,64], index: 3, kind: output, shape index: {}]
  %s4 = sld [smem:[#allocation0]]
  $region30: #{seq2seq_transformer_forward.55} parent=0
    _
  %s6 = ssub.s32 1, %s4
  %s7 = scalar_select 0, %s6, %s4
  // Predicated region
  $region2: #{seq2seq_transformer_forward.55} parent=0 // pred_check
    _
  $region3: #{seq2seq_transformer_forward.55} parent=0 // pred_check_branch
    %9 = sbr.rel (0) target = $region5
  $region4: #{seq2seq_transformer_forward.55} parent=0 // pred_region
    _
  $region5: #{seq2seq_transformer_forward.55} parent=0 // pred_fallthru
    _
  // Predicated region
  $region6: #{seq2seq_transformer_forward.55} parent=0 // pred_check
    _
  $region7: #{seq2seq_transformer_forward.55} parent=0 // pred_check_branch
    %11 = sbr.rel (0) target = $region9
  $region8: #{seq2seq_transformer_forward.55} parent=0 // pred_region
    _
  $region9: #{seq2seq_transformer_forward.55} parent=0 // pred_fallthru
    _
  // Predicated region
  $region10: #{seq2seq_transformer_forward.55} parent=0 // pred_check
    _
  $region11: #{seq2seq_transformer_forward.55} parent=0 // pred_check_branch
    %13 = sbr.rel (0) target = $region13
  $region12: #{seq2seq_transformer_forward.55} parent=0 // pred_region
    _
  $region13: #{seq2seq_transformer_forward.55} parent=0 // pred_fallthru
    _
  %p15 = scmp.eq.s32.totalorder 0, 0
  // Predicated region
  $region14: #{seq2seq_transformer_forward.55} parent=0 // pred_check
    %p16 = pneg %p15
  $region15: #{seq2seq_transformer_forward.55} parent=0 // pred_check_branch
    %18 = sbr.rel (%p16) target = $region17
  $region16: #{seq2seq_transformer_forward.55} parent=0 // pred_region
    %vm19 = vcmask 523264
    %20 = vst.msk [vmem:[#allocation2] sm:$0xff] %vm19, 0.0
    %21 = vst.msk [vmem:[#allocation2 + $0x8] sm:$0xff] %vm19, 0.0
  $region17: #{seq2seq_transformer_forward.55} parent=0 // pred_fallthru
    _
  %v22 = vld [vmem:[%s0] sm:$0xff]
  %v23 = vld [vmem:[%s0 + $0x8] sm:$0xff]
  %v24 = vpack.c.bf16 %v23, %v22
  %v25 = vld [vmem:[%s1] sm:$0xf]
  %v26 = vld [vmem:[%s1 + $0x4] sm:$0xf]
  %v27 = vld [vmem:[%s1 + $0x8] sm:$0xf]
  %v28 = vld [vmem:[%s1 + $0xc] sm:$0xf]
  %v29 = vld [vmem:[%s1 + $0x10] sm:$0xf]
  %v30 = vld [vmem:[%s1 + $0x14] sm:$0xf]
  %v31 = vld [vmem:[%s1 + $0x18] sm:$0xf]
  %v32 = vld [vmem:[%s1 + $0x1c] sm:$0xf]
  %v33 = vld [vmem:[#allocation2] sm:$0xff]
  %v34 = vld [vmem:[#allocation2 + $0x8] sm:$0xff]
  %v43 = vunpack.c.l.b16 %v25
  %v44 = vunpack.c.l.b16 %v26
  %v45 = vunpack.c.l.b16 %v27
  %v46 = vunpack.c.l.b16 %v28
  %v47 = vunpack.c.l.b16 %v29
  %v48 = vunpack.c.l.b16 %v30
  %v49 = vunpack.c.l.b16 %v31
  %v50 = vunpack.c.l.b16 %v32
  %v51 = vpack.c.b16 %v44, %v43
  %v52 = vpack.c.b16 %v46, %v45
  %v53 = vpack.c.b16 %v48, %v47
  %v54 = vpack.c.b16 %v50, %v49
  %vm55 = vcmask 261120
  %v57 = vsel %vm55, %v24, 0
  %v60 = vsel %vm55, %v51, 0
  %v63 = vsel %vm55, %v52, 0
  %v66 = vsel %vm55, %v53, 0
  %v69 = vsel %vm55, %v54, 0
  %71 = vmatpush.bf16.xpose.msra.mxu0 0
  %72 = vmatpush.bf16.xpose.msra.mxu0 0
  %73 = vmatpush.bf16.xpose.msra.mxu0 0
  %74 = vmatpush.bf16.xpose.msra.mxu0 0
  %75 = vmatpush.bf16.xpose.msra.mxu0 %v69
  %76 = vmatpush.bf16.xpose.msra.mxu0 %v66
  %77 = vmatpush.bf16.xpose.msra.mxu0 %v63
  %78 = vmatpush.bf16.xpose.msra.mxu0 %v60
  %79 = vmatmul.bf16.gmra.mxu0 %v57
  %v80 = vpop.f32.mrf.mxu0
  %v81 = vadd.f32 0.0, %v80
  %v82 = vpop.f32.mrf.mxu0
  %v83 = vadd.f32 0.0, %v82
  %84 = vdwg.mxu0
  %v85 = vadd.f32 %v33, %v81
  %v86 = vadd.f32 %v34, %v83
  %vm87 = vcmask 523264
  %88 = vst.msk [vmem:[#allocation2] sm:$0xff] %vm87, %v85
  %89 = vst.msk [vmem:[#allocation2 + $0x8] sm:$0xff] %vm87, %v86
  // Predicated region
  $region18: #{seq2seq_transformer_forward.55} parent=0 // pred_check
    %p90 = pneg %p15
  $region19: #{seq2seq_transformer_forward.55} parent=0 // pred_check_branch
    %92 = sbr.rel (%p90) target = $region21
  $region20: #{seq2seq_transformer_forward.55} parent=0 // pred_region
    %v93 = vld [vmem:[#allocation2] sm:$0xff]
    %v94 = vld [vmem:[#allocation2 + $0x8] sm:$0xff]
    %v95 = vld [vmem:[%s2] sm:$0x1]
    %v97 = vperm.slane %v95, 0
    %v99 = vadd.f32 %v93, %v97
    %v100 = vadd.f32 %v94, %v97
    %101 = vst.msk [vmem:[%s3] sm:$0xff] %vm87, %v99
    %102 = vst.msk [vmem:[%s3 + $0x8] sm:$0xff] %vm87, %v100
  $region21: #{seq2seq_transformer_forward.55} parent=0 // pred_fallthru
    _
  // Predicated region
  $region22: #{seq2seq_transformer_forward.55} parent=0 // pred_check
    _
  $region23: #{seq2seq_transformer_forward.55} parent=0 // pred_check_branch
    %104 = sbr.rel (0) target = $region25
  $region24: #{seq2seq_transformer_forward.55} parent=0 // pred_region
    _
  $region25: #{seq2seq_transformer_forward.55} parent=0 // pred_fallthru
    _
  // Predicated region
  $region26: #{seq2seq_transformer_forward.55} parent=0 // pred_check
    _
  $region27: #{seq2seq_transformer_forward.55} parent=0 // pred_check_branch
    %106 = sbr.rel (0) target = $region29
  $region28: #{seq2seq_transformer_forward.55} parent=0 // pred_region
    _
  $region29: #{seq2seq_transformer_forward.55} parent=0 // pred_fallthru
    _

// kernel: seq2seq_transformer_forward.56
$region0: #{seq2seq_transformer_forward.56}
  #allocation0 [shape = 'u32[]', space=smem, size = 0x4, offset = 0x4, fixed_abs, tag = 'smem constant byte address 0x4 - core index']
  #allocation1 [shape = 'u32[72,128]{1,0:T(1,128)}', space=vmem, size = 0x9000, scoped, tag = 'internal scratch']
  %s0 = inlined_call_operand.vmem [shape: f32[2,7,32], index: 0, kind: input, shape index: {}]
  %s1 = inlined_call_operand.vmem [shape: f32[2,8,64], index: 1, kind: input, shape index: {}]
  %s2 = inlined_call_operand.vmem [shape: f32[7,8], index: 2, kind: input, shape index: {}]
  %s3 = inlined_call_operand.vmem [shape: f32[2,1,8], index: 3, kind: input, shape index: {}]
  %s4 = inlined_call_operand.vmem [shape: f32[2,7,32], index: 4, kind: output, shape index: {}]
  %s5 = sld [smem:[#allocation0]]
  $region49: #{seq2seq_transformer_forward.56} parent=0
    _
  %s7 = ssub.s32 1, %s5
  %s8 = scalar_select 0, %s7, %s5
  loop: start=0, step=1, limit=4
  $region2: #{seq2seq_transformer_forward.56} parent=0 // loop_pre_header
    _
  $region3: #{seq2seq_transformer_forward.56} parent=0 // loop_header
    %s10 = sphi 0, %s14
    %p11 = scmp.ge.s32.totalorder %s10, 4
    %s20 = sphi 0, %s22
    %s23 = sphi 0, %s20
    %s24 = sphi 0, %s23
    %s40 = sphi 0, %s24
    %s46 = sphi 0, %s48
    %s49 = sphi 0, %s46
    %s50 = sphi 0, %s49
    %s66 = sphi 0, %s50
    %s70 = sphi 0, %s70
    %s72 = sphi 0, %s70
    %s73 = sphi 0, %s72
    %s87 = sphi 0, %s73
    %s93 = sphi 0, %s95
    %s96 = sphi 0, %s93
    %s97 = sphi 0, %s96
    %s113 = sphi 0, %s97
    %s119 = sphi 0, %s121
    %s122 = sphi 0, %s119
    %s123 = sphi 0, %s122
    %s139 = sphi 0, %s123
  $region4: #{seq2seq_transformer_forward.56} parent=0 // loop_header_branch
    %13 = sbr.rel (%p11) target = $region8
  $region5: #{seq2seq_transformer_forward.56} parent=0 // loop_body
    %s15 = ssub.s32 %s10, 1
    %s16 = ssub.s32 %s10, 2
    %s17 = sadd.s32 %s10, 1
    %s18 = ssub.s32 %s10, %s17
    %p19 = scmp.eq.s32.totalorder %s18, 0
    %s21 = sadd.s32 %s20, 1
    %s22 = scalar_select %p19, %s20, %s21
    %p25 = pneg %p19
    %p26 = scmp.eq.s32.totalorder %s10, 1
    %p27 = por %p25, %p26
    %p28 = scmp.ne.s32.totalorder %s20, %s23
    %p29 = scmp.eq.s32.totalorder %s10, 0
    %p30 = por %p28, %p29
    %p31 = scmp.ne.s32.totalorder %s20, %s23
    %p32 = scmp.eq.s32.totalorder %s15, 1
    %p33 = por %p31, %p32
    %p34 = scmp.ne.s32.totalorder %s23, %s24
    %p35 = scmp.eq.s32.totalorder %s15, 0
    %p36 = por %p34, %p35
    %p37 = scmp.ne.s32.totalorder %s23, %s24
    %p38 = scmp.eq.s32.totalorder %s16, 1
    %p39 = por %p37, %p38
    %p41 = scmp.ne.s32.totalorder %s24, %s40
    %p42 = scmp.eq.s32.totalorder %s16, 0
    %p43 = por %p41, %p42
    %s44 = ssub.s32 %s10, %s17
    %p45 = scmp.eq.s32.totalorder %s44, 0
    %s47 = sadd.s32 %s46, 1
    %s48 = scalar_select %p45, %s46, %s47
    %p51 = pneg %p45
    %p52 = scmp.eq.s32.totalorder %s10, 1
    %p53 = por %p51, %p52
    %p54 = scmp.ne.s32.totalorder %s46, %s49
    %p55 = scmp.eq.s32.totalorder %s10, 0
    %p56 = por %p54, %p55
    %p57 = scmp.ne.s32.totalorder %s46, %s49
    %p58 = scmp.eq.s32.totalorder %s15, 1
    %p59 = por %p57, %p58
    %p60 = scmp.ne.s32.totalorder %s49, %s50
    %p61 = scmp.eq.s32.totalorder %s15, 0
    %p62 = por %p60, %p61
    %p63 = scmp.ne.s32.totalorder %s49, %s50
    %p64 = scmp.eq.s32.totalorder %s16, 1
    %p65 = por %p63, %p64
    %p67 = scmp.ne.s32.totalorder %s50, %s66
    %p68 = scmp.eq.s32.totalorder %s16, 0
    %p69 = por %p67, %p68
    %s71 = sadd.s32 %s70, 1
    %p74 = scmp.eq.s32.totalorder %s10, 1
    %p75 = scmp.ne.s32.totalorder %s70, %s72
    %p76 = scmp.eq.s32.totalorder %s10, 0
    %p77 = por %p75, %p76
    %p78 = scmp.ne.s32.totalorder %s70, %s72
    %p79 = scmp.eq.s32.totalorder %s15, 1
    %p80 = por %p78, %p79
    %p81 = scmp.ne.s32.totalorder %s72, %s73
    %p82 = scmp.eq.s32.totalorder %s15, 0
    %p83 = por %p81, %p82
    %p84 = scmp.ne.s32.totalorder %s72, %s73
    %p85 = scmp.eq.s32.totalorder %s16, 1
    %p86 = por %p84, %p85
    %p88 = scmp.ne.s32.totalorder %s73, %s87
    %p89 = scmp.eq.s32.totalorder %s16, 0
    %p90 = por %p88, %p89
    %s91 = ssub.s32 %s10, %s17
    %p92 = scmp.eq.s32.totalorder %s91, 0
    %s94 = sadd.s32 %s93, 1
    %s95 = scalar_select %p92, %s93, %s94
    %p98 = pneg %p92
    %p99 = scmp.eq.s32.totalorder %s10, 1
    %p100 = por %p98, %p99
    %p101 = scmp.ne.s32.totalorder %s93, %s96
    %p102 = scmp.eq.s32.totalorder %s10, 0
    %p103 = por %p101, %p102
    %p104 = scmp.ne.s32.totalorder %s93, %s96
    %p105 = scmp.eq.s32.totalorder %s15, 1
    %p106 = por %p104, %p105
    %p107 = scmp.ne.s32.totalorder %s96, %s97
    %p108 = scmp.eq.s32.totalorder %s15, 0
    %p109 = por %p107, %p108
    %p110 = scmp.ne.s32.totalorder %s96, %s97
    %p111 = scmp.eq.s32.totalorder %s16, 1
    %p112 = por %p110, %p111
    %p114 = scmp.ne.s32.totalorder %s97, %s113
    %p115 = scmp.eq.s32.totalorder %s16, 0
    %p116 = por %p114, %p115
    %s117 = ssub.s32 %s10, %s17
    %p118 = scmp.eq.s32.totalorder %s117, 0
    %s120 = sadd.s32 %s119, 1
    %s121 = scalar_select %p118, %s119, %s120
    %p124 = pneg %p118
    %p125 = scmp.eq.s32.totalorder %s10, 1
    %p126 = por %p124, %p125
    %p127 = scmp.ne.s32.totalorder %s119, %s122
    %p128 = scmp.eq.s32.totalorder %s10, 0
    %p129 = por %p127, %p128
    %p130 = scmp.ne.s32.totalorder %s119, %s122
    %p131 = scmp.eq.s32.totalorder %s15, 1
    %p132 = por %p130, %p131
    %p133 = scmp.ne.s32.totalorder %s122, %s123
    %p134 = scmp.eq.s32.totalorder %s15, 0
    %p135 = por %p133, %p134
    %p136 = scmp.ne.s32.totalorder %s122, %s123
    %p137 = scmp.eq.s32.totalorder %s16, 1
    %p138 = por %p136, %p137
    %p140 = scmp.ne.s32.totalorder %s123, %s139
    %p141 = scmp.eq.s32.totalorder %s16, 0
    %p142 = por %p140, %p141
    %p143 = scmp.le.s32.totalorder 1, %s10
    %p144 = scmp.lt.s32.totalorder %s10, 3
    %p145 = pnand %p143, %p144
    %p146 = pneg %p145
    // Predicated region
    $region9: #{seq2seq_transformer_forward.56} parent=5 // pred_check
      _
    $region10: #{seq2seq_transformer_forward.56} parent=5 // pred_check_branch
      %148 = sbr.rel (%p145) target = $region12
    $region11: #{seq2seq_transformer_forward.56} parent=5 // pred_region
      %s149 = ssub.s32 %s10, 1
      // Predicated region
      $region13: #{seq2seq_transformer_forward.56} parent=11 // pred_check
        %p150 = pneg %p83
      $region14: #{seq2seq_transformer_forward.56} parent=11 // pred_check_branch
        %152 = sbr.rel (%p150) target = $region16
      $region15: #{seq2seq_transformer_forward.56} parent=11 // pred_region
        _
      $region16: #{seq2seq_transformer_forward.56} parent=11 // pred_fallthru
        _
    $region12: #{seq2seq_transformer_forward.56} parent=5 // pred_fallthru
      _
    %p153 = scmp.lt.s32.totalorder %s10, 2
    // Predicated region
    $region17: #{seq2seq_transformer_forward.56} parent=5 // pred_check
      %p154 = pneg %p153
    $region18: #{seq2seq_transformer_forward.56} parent=5 // pred_check_branch
      %156 = sbr.rel (%p154) target = $region20
    $region19: #{seq2seq_transformer_forward.56} parent=5 // pred_region
      // Predicated region
      $region21: #{seq2seq_transformer_forward.56} parent=19 // pred_check
        %p157 = pneg %p30
      $region22: #{seq2seq_transformer_forward.56} parent=19 // pred_check_branch
        %159 = sbr.rel (%p157) target = $region24
      $region23: #{seq2seq_transformer_forward.56} parent=19 // pred_region
        %p160 = scmp.lt.s32.totalorder %s10, 1
        %s161 = scalar_select %p160, %s10, 1
        %s162 = smul.addr %s161, 8
        %s163 = scalar_lea.vmem %s0, %s162
      $region24: #{seq2seq_transformer_forward.56} parent=19 // pred_fallthru
        _
      // Predicated region
      $region25: #{seq2seq_transformer_forward.56} parent=19 // pred_check
        %p164 = pneg %p56
      $region26: #{seq2seq_transformer_forward.56} parent=19 // pred_check_branch
        %166 = sbr.rel (%p164) target = $region28
      $region27: #{seq2seq_transformer_forward.56} parent=19 // pred_region
        %p167 = scmp.lt.s32.totalorder %s10, 1
        %s168 = scalar_select %p167, %s10, 1
        %s169 = smul.addr %s168, 8
        %s170 = scalar_lea.vmem %s1, %s169
      $region28: #{seq2seq_transformer_forward.56} parent=19 // pred_fallthru
        _
      // Predicated region
      $region29: #{seq2seq_transformer_forward.56} parent=19 // pred_check
        %p171 = pneg %p103
      $region30: #{seq2seq_transformer_forward.56} parent=19 // pred_check_branch
        %173 = sbr.rel (%p171) target = $region32
      $region31: #{seq2seq_transformer_forward.56} parent=19 // pred_region
        %p174 = scmp.lt.s32.totalorder %s10, 1
        %s175 = scalar_select %p174, %s10, 1
        %s176 = scalar_lea.vmem %s3, %s175
      $region32: #{seq2seq_transformer_forward.56} parent=19 // pred_fallthru
        _
    $region20: #{seq2seq_transformer_forward.56} parent=5 // pred_fallthru
      _
    %p177 = scmp.le.s32.totalorder 1, %s10
    %p178 = scmp.lt.s32.totalorder %s10, 3
    %p179 = pnand %p177, %p178
    %p180 = pneg %p179
    // Predicated region
    $region33: #{seq2seq_transformer_forward.56} parent=5 // pred_check
      _
    $region34: #{seq2seq_transformer_forward.56} parent=5 // pred_check_branch
      %182 = sbr.rel (%p179) target = $region36
    $region35: #{seq2seq_transformer_forward.56} parent=5 // pred_region
      %s183 = ssub.s32 %s10, 1
      %p184 = scmp.lt.s32.totalorder %s15, 1
      %s185 = scalar_select %p184, %s15, 1
      %s186 = smul.addr %s185, 8
      %s187 = scalar_lea.vmem %s0, %s186
      %p188 = pneg %p36
      %p189 = pneg %p33
      %p190 = scmp.lt.s32.totalorder %s15, 1
      %s191 = scalar_select %p190, %s15, 1
      %s192 = smul.addr %s191, 8
      %s193 = scalar_lea.vmem %s1, %s192
      %p194 = pneg %p62
      %p195 = pneg %p59
      %p196 = pneg %p83
      %p197 = pneg %p80
      %p198 = scmp.lt.s32.totalorder %s15, 1
      %s199 = scalar_select %p198, %s15, 1
      %s200 = scalar_lea.vmem %s3, %s199
      %p201 = pneg %p109
      %p202 = pneg %p106
      %p203 = pneg %p135
      %p204 = pneg %p132
      %p205 = scmp.lt.s32.totalorder %s15, 1
      %s206 = scalar_select %p205, %s15, 1
      %s207 = smul.addr %s206, 8
      %s208 = scalar_lea.vmem %s4, %s207
      %p209 = scmp.lt.s32.totalorder %s15, 1
      %s210 = scalar_select %p209, %s15, 1
      %s211 = smul.addr %s210, 8
      %s212 = scalar_lea.vmem %s0, %s211
      %p213 = scmp.lt.s32.totalorder %s15, 1
      %s214 = scalar_select %p213, %s15, 1
      %s215 = smul.addr %s214, 8
      %s216 = scalar_lea.vmem %s1, %s215
      %p217 = scmp.lt.s32.totalorder %s15, 1
      %s218 = scalar_select %p217, %s15, 1
      %s219 = scalar_lea.vmem %s3, %s218
      %p220 = scmp.lt.s32.totalorder %s15, 1
      %s221 = scalar_select %p220, %s15, 1
      %s222 = smul.addr %s221, 8
      %s223 = scalar_lea.vmem %s4, %s222
      %v225 = vld [vmem:[%s2] sm:$0x7f]
      %v226 = vmax.f32 %v225, -1e+30
      %v227 = vld [vmem:[%s219] sm:$0x1]
      %v229 = vperm.slane %v227, 0
      %v231 = vadd.f32 %v226, %v229
      %v232 = vld [vmem:[%s212] sm:$0x7f]
      %v233 = vpack.c.bf16 %v232, %v232
      %v234 = vld [vmem:[%s216] sm:$0xff]
      %v235 = vpack.c.bf16 %v234, %v234
      %vm236 = vcmask 64512
      %v238 = vsel %vm236, %v233, 0
      %v241 = vsel %vm236, %v235, 0
      %243 = vmatpush.bf16.xpose.msra.mxu0 0
      %244 = vmatpush.bf16.xpose.msra.mxu0 0
      %245 = vmatpush.bf16.xpose.msra.mxu0 0
      %246 = vmatpush.bf16.xpose.msra.mxu0 0
      %247 = vmatpush.bf16.xpose.msra.mxu0 0
      %248 = vmatpush.bf16.xpose.msra.mxu0 0
      %249 = vmatpush.bf16.xpose.msra.mxu0 0
      %250 = vmatpush.bf16.xpose.msra.mxu0 %v241
      %251 = vmatmul.bf16.gmra.mxu0 %v238
      %v252 = vpop.f32.mrf.mxu0
      %v253 = vadd.f32 0.0, %v252
      %v254 = vpop.f32.mrf.mxu0
      %255 = vdwg.mxu0
      %v256 = vmul.f32 %v253, 0.35355338
      %v257 = vadd.f32 %v256, %v231
      %vm258 = vcmask 63488
      %v259 = vsel %vm258, %v257, -inf
      %260 = vmax.xlane.f32.xlu0 %v259
      %v261 = vpop.xlane.xlu0 %260
      %v262 = vsub.f32 %v257, %v261
      %v263 = vmul.f32 %v262, 1.442695
      %v264 = vpow.pop %v263
      %v265 = vsel %vm258, %v264, 0.0
      %266 = vadd.xlane.f32.xlu0 %v265
      %v267 = vpop.xlane.xlu0 %266
      %v268 = vrcp.pop %v267
      %v269 = vmul.f32 %v264, %v268
      %v270 = vpack.c.bf16 %v269, %v269
      %272 = vrot.lane.b32.xlu0 %v235, 96
      %v273 = vpop.permute.xlu0 %272
      %v275 = vsel %vm236, %v270, 0
      %vm277 = vcmask 1043456
      %v279 = vsel %vm277, %v273, 0
      %281 = vmatpush.bf16.msra.mxu0 0
      %282 = vmatpush.bf16.msra.mxu0 0
      %283 = vmatpush.bf16.msra.mxu0 0
      %284 = vmatpush.bf16.msra.mxu0 0
      %285 = vmatpush.bf16.msra.mxu0 0
      %286 = vmatpush.bf16.msra.mxu0 0
      %287 = vmatpush.bf16.msra.mxu0 0
      %288 = vmatpush.bf16.msra.mxu0 %v279
      %289 = vmatmul.bf16.gmra.mxu0 %v275
      %v290 = vpop.f32.mrf.mxu0
      %v291 = vadd.f32 0.0, %v290
      %v292 = vpop.f32.mrf.mxu0
      %293 = vdwg.mxu0
      %294 = vst.msk [vmem:[%s223] sm:$0x7f] %vm258, %v291
      %v295 = vld [vmem:[%s212] sm:$0x7f]
      %v296 = vpack.c.bf16 %v295, %v295
      %v297 = vld [vmem:[%s216] sm:$0xff]
      %v298 = vpack.c.bf16 %v297, %v297
      %300 = vrot.lane.b32.xlu0 %v296, 120
      %v301 = vpop.permute.xlu0 %300
      %303 = vrot.lane.b32.xlu0 %v298, 120
      %v304 = vpop.permute.xlu0 %303
      %v306 = vsel %vm236, %v301, 0
      %v309 = vsel %vm236, %v304, 0
      %311 = vmatpush.bf16.xpose.msra.mxu0 0
      %312 = vmatpush.bf16.xpose.msra.mxu0 0
      %313 = vmatpush.bf16.xpose.msra.mxu0 0
      %314 = vmatpush.bf16.xpose.msra.mxu0 0
      %315 = vmatpush.bf16.xpose.msra.mxu0 0
      %316 = vmatpush.bf16.xpose.msra.mxu0 0
      %317 = vmatpush.bf16.xpose.msra.mxu0 0
      %318 = vmatpush.bf16.xpose.msra.mxu0 %v309
      %319 = vmatmul.bf16.gmra.mxu0 %v306
      %v320 = vpop.f32.mrf.mxu0
      %v321 = vadd.f32 0.0, %v320
      %v322 = vpop.f32.mrf.mxu0
      %323 = vdwg.mxu0
      %v324 = vmul.f32 %v321, 0.35355338
      %v325 = vadd.f32 %v324, %v231
      %v326 = vsel %vm258, %v325, -inf
      %327 = vmax.xlane.f32.xlu0 %v326
      %v328 = vpop.xlane.xlu0 %327
      %v329 = vsub.f32 %v325, %v328
      %v330 = vmul.f32 %v329, 1.442695
      %v331 = vpow.pop %v330
      %v332 = vsel %vm258, %v331, 0.0
      %333 = vadd.xlane.f32.xlu0 %v332
      %v334 = vpop.xlane.xlu0 %333
      %v335 = vrcp.pop %v334
      %v336 = vmul.f32 %v331, %v335
      %v337 = vpack.c.bf16 %v336, %v336
      %338 = vrot.lane.b32.xlu0 %v298, 88
      %v339 = vpop.permute.xlu0 %338
      %v341 = vsel %vm236, %v337, 0
      %v344 = vsel %vm277, %v339, 0
      %346 = vmatpush.bf16.msra.mxu0 0
      %347 = vmatpush.bf16.msra.mxu0 0
      %348 = vmatpush.bf16.msra.mxu0 0
      %349 = vmatpush.bf16.msra.mxu0 0
      %350 = vmatpush.bf16.msra.mxu0 0
      %351 = vmatpush.bf16.msra.mxu0 0
      %352 = vmatpush.bf16.msra.mxu0 0
      %353 = vmatpush.bf16.msra.mxu0 %v344
      %354 = vmatmul.bf16.gmra.mxu0 %v341
      %v355 = vpop.f32.mrf.mxu0
      %v356 = vadd.f32 0.0, %v355
      %v357 = vpop.f32.mrf.mxu0
      %358 = vdwg.mxu0
      %360 = vrot.lane.b32.xlu0 %v356, 8
      %v361 = vpop.permute.xlu0 %360
      %vm363 = vcmask 129088
      %364 = vst.msk [vmem:[%s223] sm:$0x7f] %vm363, %v361
      %v365 = vld [vmem:[%s212] sm:$0x7f]
      %v366 = vpack.c.bf16 %v365, %v365
      %v367 = vld [vmem:[%s216] sm:$0xff]
      %v368 = vpack.c.bf16 %v367, %v367
      %370 = vrot.lane.b32.xlu0 %v366, 112
      %v371 = vpop.permute.xlu0 %370
      %373 = vrot.lane.b32.xlu0 %v368, 112
      %v374 = vpop.permute.xlu0 %373
      %v376 = vsel %vm236, %v371, 0
      %v379 = vsel %vm236, %v374, 0
      %381 = vmatpush.bf16.xpose.msra.mxu0 0
      %382 = vmatpush.bf16.xpose.msra.mxu0 0
      %383 = vmatpush.bf16.xpose.msra.mxu0 0
      %384 = vmatpush.bf16.xpose.msra.mxu0 0
      %385 = vmatpush.bf16.xpose.msra.mxu0 0
      %386 = vmatpush.bf16.xpose.msra.mxu0 0
      %387 = vmatpush.bf16.xpose.msra.mxu0 0
      %388 = vmatpush.bf16.xpose.msra.mxu0 %v379
      %389 = vmatmul.bf16.gmra.mxu0 %v376
      %v390 = vpop.f32.mrf.mxu0
      %v391 = vadd.f32 0.0, %v390
      %v392 = vpop.f32.mrf.mxu0
      %393 = vdwg.mxu0
      %v394 = vmul.f32 %v391, 0.35355338
      %v395 = vadd.f32 %v394, %v231
      %v396 = vsel %vm258, %v395, -inf
      %397 = vmax.xlane.f32.xlu0 %v396
      %v398 = vpop.xlane.xlu0 %397
      %v399 = vsub.f32 %v395, %v398
      %v400 = vmul.f32 %v399, 1.442695
      %v401 = vpow.pop %v400
      %v402 = vsel %vm258, %v401, 0.0
      %403 = vadd.xlane.f32.xlu0 %v402
      %v404 = vpop.xlane.xlu0 %403
      %v405 = vrcp.pop %v404
      %v406 = vmul.f32 %v401, %v405
      %v407 = vpack.c.bf16 %v406, %v406
      %408 = vrot.lane.b32.xlu0 %v368, 80
      %v409 = vpop.permute.xlu0 %408
      %v411 = vsel %vm236, %v407, 0
      %v414 = vsel %vm277, %v409, 0
      %416 = vmatpush.bf16.msra.mxu0 0
      %417 = vmatpush.bf16.msra.mxu0 0
      %418 = vmatpush.bf16.msra.mxu0 0
      %419 = vmatpush.bf16.msra.mxu0 0
      %420 = vmatpush.bf16.msra.mxu0 0
      %421 = vmatpush.bf16.msra.mxu0 0
      %422 = vmatpush.bf16.msra.mxu0 0
      %423 = vmatpush.bf16.msra.mxu0 %v414
      %424 = vmatmul.bf16.gmra.mxu0 %v411
      %v425 = vpop.f32.mrf.mxu0
      %v426 = vadd.f32 0.0, %v425
      %v427 = vpop.f32.mrf.mxu0
      %428 = vdwg.mxu0
      %430 = vrot.lane.b32.xlu0 %v426, 16
      %v431 = vpop.permute.xlu0 %430
      %vm433 = vcmask 194688
      %434 = vst.msk [vmem:[%s223] sm:$0x7f] %vm433, %v431
      %v435 = vld [vmem:[%s212] sm:$0x7f]
      %v436 = vpack.c.bf16 %v435, %v435
      %v437 = vld [vmem:[%s216] sm:$0xff]
      %v438 = vpack.c.bf16 %v437, %v437
      %440 = vrot.lane.b32.xlu0 %v436, 104
      %v441 = vpop.permute.xlu0 %440
      %443 = vrot.lane.b32.xlu0 %v438, 104
      %v444 = vpop.permute.xlu0 %443
      %v446 = vsel %vm236, %v441, 0
      %v449 = vsel %vm236, %v444, 0
      %451 = vmatpush.bf16.xpose.msra.mxu0 0
      %452 = vmatpush.bf16.xpose.msra.mxu0 0
      %453 = vmatpush.bf16.xpose.msra.mxu0 0
      %454 = vmatpush.bf16.xpose.msra.mxu0 0
      %455 = vmatpush.bf16.xpose.msra.mxu0 0
      %456 = vmatpush.bf16.xpose.msra.mxu0 0
      %457 = vmatpush.bf16.xpose.msra.mxu0 0
      %458 = vmatpush.bf16.xpose.msra.mxu0 %v449
      %459 = vmatmul.bf16.gmra.mxu0 %v446
      %v460 = vpop.f32.mrf.mxu0
      %v461 = vadd.f32 0.0, %v460
      %v462 = vpop.f32.mrf.mxu0
      %463 = vdwg.mxu0
      %v464 = vmul.f32 %v461, 0.35355338
      %v465 = vadd.f32 %v464, %v231
      %v466 = vsel %vm258, %v465, -inf
      %467 = vmax.xlane.f32.xlu0 %v466
      %v468 = vpop.xlane.xlu0 %467
      %v469 = vsub.f32 %v465, %v468
      %v470 = vmul.f32 %v469, 1.442695
      %v471 = vpow.pop %v470
      %v472 = vsel %vm258, %v471, 0.0
      %473 = vadd.xlane.f32.xlu0 %v472
      %v474 = vpop.xlane.xlu0 %473
      %v475 = vrcp.pop %v474
      %v476 = vmul.f32 %v471, %v475
      %v477 = vpack.c.bf16 %v476, %v476
      %478 = vrot.lane.b32.xlu0 %v438, 72
      %v479 = vpop.permute.xlu0 %478
      %v481 = vsel %vm236, %v477, 0
      %v484 = vsel %vm277, %v479, 0
      %486 = vmatpush.bf16.msra.mxu0 0
      %487 = vmatpush.bf16.msra.mxu0 0
      %488 = vmatpush.bf16.msra.mxu0 0
      %489 = vmatpush.bf16.msra.mxu0 0
      %490 = vmatpush.bf16.msra.mxu0 0
      %491 = vmatpush.bf16.msra.mxu0 0
      %492 = vmatpush.bf16.msra.mxu0 0
      %493 = vmatpush.bf16.msra.mxu0 %v484
      %494 = vmatmul.bf16.gmra.mxu0 %v481
      %v495 = vpop.f32.mrf.mxu0
      %v496 = vadd.f32 0.0, %v495
      %v497 = vpop.f32.mrf.mxu0
      %498 = vdwg.mxu0
      %500 = vrot.lane.b32.xlu0 %v496, 24
      %v501 = vpop.permute.xlu0 %500
      %vm503 = vcmask 260288
      %504 = vst.msk [vmem:[%s223] sm:$0x7f] %vm503, %v501
      %p505 = scmp.lt.s32.totalorder %s15, 1
      %s506 = scalar_select %p505, %s15, 1
      %s507 = smul.addr %s506, 8
      %s508 = scalar_lea.vmem %s4, %s507
      // Predicated region
      $region37: #{seq2seq_transformer_forward.56} parent=35 // pred_check
        %p509 = pneg %p132
      $region38: #{seq2seq_transformer_forward.56} parent=35 // pred_check_branch
        %511 = sbr.rel (%p509) target = $region40
      $region39: #{seq2seq_transformer_forward.56} parent=35 // pred_region
        _
      $region40: #{seq2seq_transformer_forward.56} parent=35 // pred_fallthru
        _
    $region36: #{seq2seq_transformer_forward.56} parent=5 // pred_fallthru
      _
    %p512 = scmp.le.s32.totalorder 2, %s10
    // Predicated region
    $region41: #{seq2seq_transformer_forward.56} parent=5 // pred_check
      %p513 = pneg %p512
    $region42: #{seq2seq_transformer_forward.56} parent=5 // pred_check_branch
      %515 = sbr.rel (%p513) target = $region44
    $region43: #{seq2seq_transformer_forward.56} parent=5 // pred_region
      %s516 = ssub.s32 %s10, 2
      // Predicated region
      $region45: #{seq2seq_transformer_forward.56} parent=43 // pred_check
        %p517 = pneg %p138
      $region46: #{seq2seq_transformer_forward.56} parent=43 // pred_check_branch
        %519 = sbr.rel (%p517) target = $region48
      $region47: #{seq2seq_transformer_forward.56} parent=43 // pred_region
        %p520 = scmp.lt.s32.totalorder %s16, 1
        %s521 = scalar_select %p520, %s16, 1
        %s522 = smul.addr %s521, 8
        %s523 = scalar_lea.vmem %s4, %s522
      $region48: #{seq2seq_transformer_forward.56} parent=43 // pred_fallthru
        _
    $region44: #{seq2seq_transformer_forward.56} parent=5 // pred_fallthru
      _
  $region6: #{seq2seq_transformer_forward.56} parent=0 // loop_footer
    %s14 = sadd.s32 1, %s10
  $region7: #{seq2seq_transformer_forward.56} parent=0 // loop_footer_branch
    %9 = sbr.rel target = $region3
  $region8: #{seq2seq_transformer_forward.56} parent=0 // loop_exit
    _

// kernel: seq2seq_transformer_forward.72
$region0: #{seq2seq_transformer_forward.72}
  #allocation0 [shape = 'u32[]', space=smem, size = 0x4, offset = 0x4, fixed_abs, tag = 'smem constant byte address 0x4 - core index']
  #allocation1 [shape = 'u32[72,128]{1,0:T(1,128)}', space=vmem, size = 0x9000, scoped, tag = 'internal scratch']
  %s0 = inlined_call_operand.vmem [shape: f32[14,32], index: 0, kind: input, shape index: {}]
  %s1 = inlined_call_operand.vmem [shape: f32[1,32], index: 1, kind: input, shape index: {}]
  %s2 = inlined_call_operand.vmem [shape: f32[1,32], index: 2, kind: input, shape index: {}]
  %s3 = inlined_call_operand.vmem [shape: f32[14,32], index: 3, kind: output, shape index: {}]
  %s4 = sld [smem:[#allocation0]]
  $region22: #{seq2seq_transformer_forward.72} parent=0
    _
  %s6 = ssub.s32 1, %s4
  %s7 = scalar_select 0, %s6, %s4
  // Predicated region
  $region2: #{seq2seq_transformer_forward.72} parent=0 // pred_check
    _
  $region3: #{seq2seq_transformer_forward.72} parent=0 // pred_check_branch
    %9 = sbr.rel (0) target = $region5
  $region4: #{seq2seq_transformer_forward.72} parent=0 // pred_region
    _
  $region5: #{seq2seq_transformer_forward.72} parent=0 // pred_fallthru
    _
  // Predicated region
  $region6: #{seq2seq_transformer_forward.72} parent=0 // pred_check
    _
  $region7: #{seq2seq_transformer_forward.72} parent=0 // pred_check_branch
    %11 = sbr.rel (0) target = $region9
  $region8: #{seq2seq_transformer_forward.72} parent=0 // pred_region
    _
  $region9: #{seq2seq_transformer_forward.72} parent=0 // pred_fallthru
    _
  // Predicated region
  $region10: #{seq2seq_transformer_forward.72} parent=0 // pred_check
    _
  $region11: #{seq2seq_transformer_forward.72} parent=0 // pred_check_branch
    %13 = sbr.rel (0) target = $region13
  $region12: #{seq2seq_transformer_forward.72} parent=0 // pred_region
    _
  $region13: #{seq2seq_transformer_forward.72} parent=0 // pred_fallthru
    _
  %v14 = vld [vmem:[%s0] sm:$0xff]
  %v15 = vld [vmem:[%s0 + $0x8] sm:$0x3f]
  %v16 = vld [vmem:[%s1] sm:$0x1]
  %v17 = vld [vmem:[%s2] sm:$0x1]
  %vm18 = vcmask 261120
  %v19 = vsel %vm18, %v14, 0.0
  %20 = vadd.xlane.f32.xlu0 %v19
  %v21 = vpop.xlane.xlu0 %20
  %vm22 = vcmask 259072
  %v23 = vsel %vm22, %v15, 0.0
  %24 = vadd.xlane.f32.xlu0 %v23
  %v25 = vpop.xlane.xlu0 %24
  %v26 = vrcp.pop 32.0
  %v27 = vmul.f32 32.0, %v26
  %v28 = vsub.f32 1.0, %v27
  %v29 = vmul.f32 %v26, %v28
  %v30 = vadd.f32 %v26, %v29
  %vm31 = vweird.f32 %v26
  %v32 = vsel %vm31, %v26, %v30
  %v33 = vmul.f32 %v21, %v32
  %v34 = vmul.f32 %v25, %v32
  %v35 = vsub.f32 %v14, %v33
  %v36 = vsub.f32 %v15, %v34
  %v37 = vmul.f32 %v35, %v35
  %v38 = vmul.f32 %v36, %v36
  %v39 = vsel %vm18, %v37, 0.0
  %40 = vadd.xlane.f32.xlu0 %v39
  %v41 = vpop.xlane.xlu0 %40
  %v42 = vsel %vm22, %v38, 0.0
  %43 = vadd.xlane.f32.xlu0 %v42
  %v44 = vpop.xlane.xlu0 %43
  %v45 = vmul.f32 %v41, %v32
  %v46 = vmul.f32 %v44, %v32
  %v47 = vadd.f32 %v45, 1e-05
  %v48 = vadd.f32 %v46, 1e-05
  %v49 = vrsqrt.pop %v47
  %v50 = vmul.f32 %v49, %v47
  %v51 = vmul.f32 %v50, %v49
  %v52 = vmul.f32 0.5, %v51
  %v53 = vsub.f32 1.5, %v52
  %v54 = vmul.f32 %v49, %v53
  %vm55 = vweird.f32 %v47
  %vm56 = vweird.f32 %v49
  %vm57 = vmor %vm55, %vm56
  %v58 = vsel %vm57, %v49, %v54
  %v59 = vrsqrt.pop %v48
  %v60 = vmul.f32 %v59, %v48
  %v61 = vmul.f32 %v60, %v59
  %v62 = vmul.f32 0.5, %v61
  %v63 = vsub.f32 1.5, %v62
  %v64 = vmul.f32 %v59, %v63
  %vm65 = vweird.f32 %v48
  %vm66 = vweird.f32 %v59
  %vm67 = vmor %vm65, %vm66
  %v68 = vsel %vm67, %v59, %v64
  %v69 = vmul.f32 %v35, %v58
  %v70 = vmul.f32 %v36, %v68
  %v72 = vperm.slane %v16, 0
  %v74 = vmul.f32 %v69, %v72
  %v75 = vmul.f32 %v70, %v72
  %v77 = vperm.slane %v17, 0
  %v79 = vadd.f32 %v74, %v77
  %v80 = vadd.f32 %v75, %v77
  %81 = vst.msk [vmem:[%s3] sm:$0xff] %vm18, %v79
  %82 = vst.msk [vmem:[%s3 + $0x8] sm:$0x3f] %vm22, %v80
  // Predicated region
  $region14: #{seq2seq_transformer_forward.72} parent=0 // pred_check
    _
  $region15: #{seq2seq_transformer_forward.72} parent=0 // pred_check_branch
    %84 = sbr.rel (0) target = $region17
  $region16: #{seq2seq_transformer_forward.72} parent=0 // pred_region
    _
  $region17: #{seq2seq_transformer_forward.72} parent=0 // pred_fallthru
    _
  // Predicated region
  $region18: #{seq2seq_transformer_forward.72} parent=0 // pred_check
    _
  $region19: #{seq2seq_transformer_forward.72} parent=0 // pred_check_branch
    %86 = sbr.rel (0) target = $region21
  $region20: #{seq2seq_transformer_forward.72} parent=0 // pred_region
    _
  $region21: #{seq2seq_transformer_forward.72} parent=0 // pred_fallthru
    _

// kernel: seq2seq_transformer_forward.59
$region0: #{seq2seq_transformer_forward.59}
  #allocation0 [shape = 'u32[]', space=smem, size = 0x4, offset = 0x4, fixed_abs, tag = 'smem constant byte address 0x4 - core index']
  #allocation1 [shape = 'u32[72,128]{1,0:T(1,128)}', space=vmem, size = 0x9000, scoped, tag = 'internal scratch']
  #allocation2 [shape = 'f32[14,32]{1,0:T(8,128)}', space=vmem, size = 0x2000, scoped, tag = 'scratch operand']
  %s0 = inlined_call_operand.vmem [shape: f32[14,32], index: 0, kind: input, shape index: {}]
  %s1 = inlined_call_operand.vmem [shape: bf16[64,32], index: 1, kind: input, shape index: {}]
  %s2 = inlined_call_operand.vmem [shape: f32[1,64], index: 2, kind: input, shape index: {}]
  %s3 = inlined_call_operand.vmem [shape: bf16[32,64], index: 3, kind: input, shape index: {}]
  %s4 = inlined_call_operand.vmem [shape: f32[1,32], index: 4, kind: input, shape index: {}]
  %s5 = inlined_call_operand.vmem [shape: f32[14,32], index: 5, kind: output, shape index: {}]
  %s6 = sld [smem:[#allocation0]]
  $region38: #{seq2seq_transformer_forward.59} parent=0
    _
  %s8 = ssub.s32 1, %s6
  %s9 = scalar_select 0, %s8, %s6
  // Predicated region
  $region2: #{seq2seq_transformer_forward.59} parent=0 // pred_check
    _
  $region3: #{seq2seq_transformer_forward.59} parent=0 // pred_check_branch
    %11 = sbr.rel (0) target = $region5
  $region4: #{seq2seq_transformer_forward.59} parent=0 // pred_region
    _
  $region5: #{seq2seq_transformer_forward.59} parent=0 // pred_fallthru
    _
  // Predicated region
  $region6: #{seq2seq_transformer_forward.59} parent=0 // pred_check
    _
  $region7: #{seq2seq_transformer_forward.59} parent=0 // pred_check_branch
    %13 = sbr.rel (0) target = $region9
  $region8: #{seq2seq_transformer_forward.59} parent=0 // pred_region
    _
  $region9: #{seq2seq_transformer_forward.59} parent=0 // pred_fallthru
    _
  // Predicated region
  $region10: #{seq2seq_transformer_forward.59} parent=0 // pred_check
    _
  $region11: #{seq2seq_transformer_forward.59} parent=0 // pred_check_branch
    %15 = sbr.rel (0) target = $region13
  $region12: #{seq2seq_transformer_forward.59} parent=0 // pred_region
    _
  $region13: #{seq2seq_transformer_forward.59} parent=0 // pred_fallthru
    _
  // Predicated region
  $region14: #{seq2seq_transformer_forward.59} parent=0 // pred_check
    _
  $region15: #{seq2seq_transformer_forward.59} parent=0 // pred_check_branch
    %17 = sbr.rel (0) target = $region17
  $region16: #{seq2seq_transformer_forward.59} parent=0 // pred_region
    _
  $region17: #{seq2seq_transformer_forward.59} parent=0 // pred_fallthru
    _
  // Predicated region
  $region18: #{seq2seq_transformer_forward.59} parent=0 // pred_check
    _
  $region19: #{seq2seq_transformer_forward.59} parent=0 // pred_check_branch
    %19 = sbr.rel (0) target = $region21
  $region20: #{seq2seq_transformer_forward.59} parent=0 // pred_region
    _
  $region21: #{seq2seq_transformer_forward.59} parent=0 // pred_fallthru
    _
  %p21 = scmp.eq.s32.totalorder 0, 0
  // Predicated region
  $region22: #{seq2seq_transformer_forward.59} parent=0 // pred_check
    %p22 = pneg %p21
  $region23: #{seq2seq_transformer_forward.59} parent=0 // pred_check_branch
    %24 = sbr.rel (%p22) target = $region25
  $region24: #{seq2seq_transformer_forward.59} parent=0 // pred_region
    %vm25 = vcmask 261120
    %26 = vst.msk [vmem:[#allocation2] sm:$0xff] %vm25, 0.0
    %vm27 = vcmask 259072
    %28 = vst.msk [vmem:[#allocation2 + $0x8] sm:$0x3f] %vm27, 0.0
  $region25: #{seq2seq_transformer_forward.59} parent=0 // pred_fallthru
    _
  %v29 = vld [vmem:[%s0] sm:$0xff]
  %v30 = vld [vmem:[%s0 + $0x8] sm:$0x3f]
  %v31 = vpack.c.bf16 %v30, %v29
  %v32 = vld [vmem:[%s1] sm:$0xf]
  %v33 = vld [vmem:[%s1 + $0x4] sm:$0xf]
  %v34 = vld [vmem:[%s1 + $0x8] sm:$0xf]
  %v35 = vld [vmem:[%s1 + $0xc] sm:$0xf]
  %v36 = vld [vmem:[%s1 + $0x10] sm:$0xf]
  %v37 = vld [vmem:[%s1 + $0x14] sm:$0xf]
  %v38 = vld [vmem:[%s1 + $0x18] sm:$0xf]
  %v39 = vld [vmem:[%s1 + $0x1c] sm:$0xf]
  %v40 = vld [vmem:[%s2] sm:$0x1]
  %v42 = vperm.slane %v40, 0
  %v52 = vunpack.c.l.b16 %v32
  %v53 = vunpack.c.l.b16 %v33
  %v54 = vunpack.c.l.b16 %v34
  %v55 = vunpack.c.l.b16 %v35
  %v56 = vunpack.c.l.b16 %v36
  %v57 = vunpack.c.l.b16 %v37
  %v58 = vunpack.c.l.b16 %v38
  %v59 = vunpack.c.l.b16 %v39
  %v60 = vpack.c.b16 %v53, %v52
  %v61 = vpack.c.b16 %v55, %v54
  %v62 = vpack.c.b16 %v57, %v56
  %v63 = vpack.c.b16 %v59, %v58
  %vm64 = vcmask 261120
  %v66 = vsel %vm64, %v31, 0
  %v69 = vsel %vm64, %v60, 0
  %v72 = vsel %vm64, %v61, 0
  %v75 = vsel %vm64, %v62, 0
  %v78 = vsel %vm64, %v63, 0
  %80 = vmatpush.bf16.xpose.msra.mxu0 0
  %81 = vmatpush.bf16.xpose.msra.mxu0 0
  %82 = vmatpush.bf16.xpose.msra.mxu0 0
  %83 = vmatpush.bf16.xpose.msra.mxu0 0
  %84 = vmatpush.bf16.xpose.msra.mxu0 %v78
  %85 = vmatpush.bf16.xpose.msra.mxu0 %v75
  %86 = vmatpush.bf16.xpose.msra.mxu0 %v72
  %87 = vmatpush.bf16.xpose.msra.mxu0 %v69
  %88 = vmatmul.bf16.gmra.mxu0 %v66
  %v89 = vpop.f32.mrf.mxu0
  %v90 = vadd.f32 %v42, %v89
  %v91 = vpop.f32.mrf.mxu0
  %v92 = vadd.f32 %v42, %v91
  %93 = vdwg.mxu0
  %v94 = vmax.f32 %v90, 0.0
  %v95 = vmax.f32 %v92, 0.0
  %v96 = vld [vmem:[%s3] sm:$0xf]
  %v97 = vld [vmem:[%s3 + $0x4] sm:$0xf]
  %v98 = vld [vmem:[%s3 + $0x8] sm:$0xf]
  %v99 = vld [vmem:[%s3 + $0xc] sm:$0xf]
  %v100 = vld [vmem:[#allocation2] sm:$0xff]
  %v101 = vld [vmem:[#allocation2 + $0x8] sm:$0x3f]
  %v102 = vpack.c.bf16 %v95, %v94
  %v107 = vunpack.c.l.b16 %v96
  %v108 = vunpack.c.l.b16 %v97
  %v109 = vunpack.c.l.b16 %v98
  %v110 = vunpack.c.l.b16 %v99
  %v111 = vpack.c.b16 %v108, %v107
  %v112 = vpack.c.b16 %v110, %v109
  %vm113 = vcmask 523264
  %v115 = vsel %vm113, %v102, 0
  %v118 = vsel %vm113, %v111, 0
  %v121 = vsel %vm113, %v112, 0
  %123 = vmatpush.bf16.xpose.msra.mxu0 0
  %124 = vmatpush.bf16.xpose.msra.mxu0 0
  %125 = vmatpush.bf16.xpose.msra.mxu0 0
  %126 = vmatpush.bf16.xpose.msra.mxu0 0
  %127 = vmatpush.bf16.xpose.msra.mxu0 0
  %128 = vmatpush.bf16.xpose.msra.mxu0 0
  %129 = vmatpush.bf16.xpose.msra.mxu0 %v121
  %130 = vmatpush.bf16.xpose.msra.mxu0 %v118
  %131 = vmatmul.bf16.gmra.mxu0 %v115
  %v132 = vpop.f32.mrf.mxu0
  %v133 = vadd.f32 0.0, %v132
  %v134 = vpop.f32.mrf.mxu0
  %v135 = vadd.f32 0.0, %v134
  %136 = vdwg.mxu0
  %v137 = vadd.f32 %v100, %v133
  %v138 = vadd.f32 %v101, %v135
  %139 = vst.msk [vmem:[#allocation2] sm:$0xff] %vm64, %v137
  %vm140 = vcmask 259072
  %141 = vst.msk [vmem:[#allocation2 + $0x8] sm:$0x3f] %vm140, %v138
  // Predicated region
  $region26: #{seq2seq_transformer_forward.59} parent=0 // pred_check
    %p142 = pneg %p21
  $region27: #{seq2seq_transformer_forward.59} parent=0 // pred_check_branch
    %144 = sbr.rel (%p142) target = $region29
  $region28: #{seq2seq_transformer_forward.59} parent=0 // pred_region
    %v145 = vld [vmem:[#allocation2] sm:$0xff]
    %v146 = vld [vmem:[#allocation2 + $0x8] sm:$0x3f]
    %v147 = vld [vmem:[%s4] sm:$0x1]
    %v149 = vperm.slane %v147, 0
    %v151 = vadd.f32 %v145, %v149
    %v152 = vadd.f32 %v146, %v149
    %153 = vst.msk [vmem:[%s5] sm:$0xff] %vm64, %v151
    %154 = vst.msk [vmem:[%s5 + $0x8] sm:$0x3f] %vm140, %v152
  $region29: #{seq2seq_transformer_forward.59} parent=0 // pred_fallthru
    _
  // Predicated region
  $region30: #{seq2seq_transformer_forward.59} parent=0 // pred_check
    _
  $region31: #{seq2seq_transformer_forward.59} parent=0 // pred_check_branch
    %156 = sbr.rel (0) target = $region33
  $region32: #{seq2seq_transformer_forward.59} parent=0 // pred_region
    _
  $region33: #{seq2seq_transformer_forward.59} parent=0 // pred_fallthru
    _
  // Predicated region
  $region34: #{seq2seq_transformer_forward.59} parent=0 // pred_check
    _
  $region35: #{seq2seq_transformer_forward.59} parent=0 // pred_check_branch
    %158 = sbr.rel (0) target = $region37
  $region36: #{seq2seq_transformer_forward.59} parent=0 // pred_region
    _
  $region37: #{seq2seq_transformer_forward.59} parent=0 // pred_fallthru
    _

// kernel: seq2seq_transformer_forward.73
$region0: #{seq2seq_transformer_forward.73}
  #allocation0 [shape = 'u32[]', space=smem, size = 0x4, offset = 0x4, fixed_abs, tag = 'smem constant byte address 0x4 - core index']
  #allocation1 [shape = 'u32[72,128]{1,0:T(1,128)}', space=vmem, size = 0x9000, scoped, tag = 'internal scratch']
  #allocation2 [shape = 'f32[14,60]{1,0:T(8,128)}', space=vmem, size = 0x2000, scoped, tag = 'scratch operand']
  %s0 = inlined_call_operand.vmem [shape: f32[14,32], index: 0, kind: input, shape index: {}]
  %s1 = inlined_call_operand.vmem [shape: bf16[60,32], index: 1, kind: input, shape index: {}]
  %s2 = inlined_call_operand.vmem [shape: f32[1,60], index: 2, kind: input, shape index: {}]
  %s3 = inlined_call_operand.vmem [shape: f32[14,60], index: 3, kind: output, shape index: {}]
  %s4 = sld [smem:[#allocation0]]
  $region30: #{seq2seq_transformer_forward.73} parent=0
    _
  %s6 = ssub.s32 1, %s4
  %s7 = scalar_select 0, %s6, %s4
  // Predicated region
  $region2: #{seq2seq_transformer_forward.73} parent=0 // pred_check
    _
  $region3: #{seq2seq_transformer_forward.73} parent=0 // pred_check_branch
    %9 = sbr.rel (0) target = $region5
  $region4: #{seq2seq_transformer_forward.73} parent=0 // pred_region
    _
  $region5: #{seq2seq_transformer_forward.73} parent=0 // pred_fallthru
    _
  // Predicated region
  $region6: #{seq2seq_transformer_forward.73} parent=0 // pred_check
    _
  $region7: #{seq2seq_transformer_forward.73} parent=0 // pred_check_branch
    %11 = sbr.rel (0) target = $region9
  $region8: #{seq2seq_transformer_forward.73} parent=0 // pred_region
    _
  $region9: #{seq2seq_transformer_forward.73} parent=0 // pred_fallthru
    _
  // Predicated region
  $region10: #{seq2seq_transformer_forward.73} parent=0 // pred_check
    _
  $region11: #{seq2seq_transformer_forward.73} parent=0 // pred_check_branch
    %13 = sbr.rel (0) target = $region13
  $region12: #{seq2seq_transformer_forward.73} parent=0 // pred_region
    _
  $region13: #{seq2seq_transformer_forward.73} parent=0 // pred_fallthru
    _
  %p15 = scmp.eq.s32.totalorder 0, 0
  // Predicated region
  $region14: #{seq2seq_transformer_forward.73} parent=0 // pred_check
    %p16 = pneg %p15
  $region15: #{seq2seq_transformer_forward.73} parent=0 // pred_check_branch
    %18 = sbr.rel (%p16) target = $region17
  $region16: #{seq2seq_transformer_forward.73} parent=0 // pred_region
    %vm19 = vcmask 490496
    %20 = vst.msk [vmem:[#allocation2] sm:$0xff] %vm19, 0.0
    %vm21 = vcmask 488448
    %22 = vst.msk [vmem:[#allocation2 + $0x8] sm:$0x3f] %vm21, 0.0
  $region17: #{seq2seq_transformer_forward.73} parent=0 // pred_fallthru
    _
  %v23 = vld [vmem:[%s0] sm:$0xff]
  %v24 = vld [vmem:[%s0 + $0x8] sm:$0x3f]
  %v25 = vpack.c.bf16 %v24, %v23
  %v26 = vld [vmem:[%s1] sm:$0xf]
  %v27 = vld [vmem:[%s1 + $0x4] sm:$0xf]
  %v28 = vld [vmem:[%s1 + $0x8] sm:$0xf]
  %v29 = vld [vmem:[%s1 + $0xc] sm:$0xf]
  %v30 = vld [vmem:[%s1 + $0x10] sm:$0xf]
  %v31 = vld [vmem:[%s1 + $0x14] sm:$0xf]
  %v32 = vld [vmem:[%s1 + $0x18] sm:$0xf]
  %v33 = vld [vmem:[%s1 + $0x1c] sm:$0x3]
  %v34 = vld [vmem:[#allocation2] sm:$0xff]
  %v35 = vld [vmem:[#allocation2 + $0x8] sm:$0x3f]
  %v44 = vunpack.c.l.b16 %v26
  %v45 = vunpack.c.l.b16 %v27
  %v46 = vunpack.c.l.b16 %v28
  %v47 = vunpack.c.l.b16 %v29
  %v48 = vunpack.c.l.b16 %v30
  %v49 = vunpack.c.l.b16 %v31
  %v50 = vunpack.c.l.b16 %v32
  %v51 = vunpack.c.l.b16 %v33
  %v52 = vpack.c.b16 %v45, %v44
  %v53 = vpack.c.b16 %v47, %v46
  %v54 = vpack.c.b16 %v49, %v48
  %v55 = vpack.c.b16 %v51, %v50
  %vm56 = vcmask 261120
  %v58 = vsel %vm56, %v25, 0
  %v61 = vsel %vm56, %v52, 0
  %v64 = vsel %vm56, %v53, 0
  %v67 = vsel %vm56, %v54, 0
  %v70 = vsel %vm56, %v55, 0
  %72 = vmatpush.bf16.xpose.msra.mxu0 0
  %73 = vmatpush.bf16.xpose.msra.mxu0 0
  %74 = vmatpush.bf16.xpose.msra.mxu0 0
  %75 = vmatpush.bf16.xpose.msra.mxu0 0
  %76 = vmatpush.bf16.xpose.msra.mxu0 %v70
  %77 = vmatpush.bf16.xpose.msra.mxu0 %v67
  %78 = vmatpush.bf16.xpose.msra.mxu0 %v64
  %79 = vmatpush.bf16.xpose.msra.mxu0 %v61
  %80 = vmatmul.bf16.gmra.mxu0 %v58
  %v81 = vpop.f32.mrf.mxu0
  %v82 = vadd.f32 0.0, %v81
  %v83 = vpop.f32.mrf.mxu0
  %v84 = vadd.f32 0.0, %v83
  %85 = vdwg.mxu0
  %v86 = vadd.f32 %v34, %v82
  %v87 = vadd.f32 %v35, %v84
  %vm88 = vcmask 490496
  %89 = vst.msk [vmem:[#allocation2] sm:$0xff] %vm88, %v86
  %vm90 = vcmask 488448
  %91 = vst.msk [vmem:[#allocation2 + $0x8] sm:$0x3f] %vm90, %v87
  // Predicated region
  $region18: #{seq2seq_transformer_forward.73} parent=0 // pred_check
    %p92 = pneg %p15
  $region19: #{seq2seq_transformer_forward.73} parent=0 // pred_check_branch
    %94 = sbr.rel (%p92) target = $region21
  $region20: #{seq2seq_transformer_forward.73} parent=0 // pred_region
    %v95 = vld [vmem:[#allocation2] sm:$0xff]
    %v96 = vld [vmem:[#allocation2 + $0x8] sm:$0x3f]
    %v97 = vld [vmem:[%s2] sm:$0x1]
    %v99 = vperm.slane %v97, 0
    %v101 = vadd.f32 %v95, %v99
    %v102 = vadd.f32 %v96, %v99
    %103 = vst.msk [vmem:[%s3] sm:$0xff] %vm88, %v101
    %104 = vst.msk [vmem:[%s3 + $0x8] sm:$0x3f] %vm90, %v102
  $region21: #{seq2seq_transformer_forward.73} parent=0 // pred_fallthru
    _
  // Predicated region
  $region22: #{seq2seq_transformer_forward.73} parent=0 // pred_check
    _
  $region23: #{seq2seq_transformer_forward.73} parent=0 // pred_check_branch
    %106 = sbr.rel (0) target = $region25
  $region24: #{seq2seq_transformer_forward.73} parent=0 // pred_region
    _
  $region25: #{seq2seq_transformer_forward.73} parent=0 // pred_fallthru
    _
  // Predicated region
  $region26: #{seq2seq_transformer_forward.73} parent=0 // pred_check
    _
  $region27: #{seq2seq_transformer_forward.73} parent=0 // pred_check_branch
    %108 = sbr.rel (0) target = $region29
  $region28: #{seq2seq_transformer_forward.73} parent=0 // pred_region
    _
  $region29: #{seq2seq_transformer_forward.73} parent=0 // pred_fallthru
    _

</llo_original>
